<compile_context>
chip_gen: v7x
topology: tpu7x:2x2x1
jax: 0.10.0
libtpu: 0.0.40
codegen_flags: <defaults>
</compile_context>

<pallas_src>
import functools

import jax
import jax.numpy as jnp
from jax import lax
from jax.experimental import pallas as pl
from jax.experimental.pallas import tpu as pltpu


def score_model_kernel(x_ref, w_in_ref, b_in_ref,
                       w_h_ref, b_h_ref, g_ref, beta_ref,
                       w_out_ref, b_out_ref, o_ref,
                       *, num_blocks, eps, inv_h, ln_bf16):
    # ---- input layer + ReLU (bf16 MXU operands, f32 accumulation) ----
    h = jnp.dot(x_ref[...], w_in_ref[...], preferred_element_type=jnp.float32)
    h = jnp.maximum(h + b_in_ref[...], 0.0)                     # (tile_b, H) f32

    # ---- one residual LayerNorm block ----
    def block(l, h):
        residual = h                                            # f32 residual stream
        z = jnp.dot(h.astype(jnp.bfloat16), w_h_ref[l],
                    preferred_element_type=jnp.float32) + b_h_ref[l]
        # Two-pass (centered) variance: same number of full (tile_b, H) VALU
        # passes as the fused E[z^2]-mean^2 form, but no catastrophic
        # cancellation when |mean| >> std after several residual blocks.
        mean = jnp.sum(z, axis=-1, keepdims=True) * inv_h
        zc = z - mean                                           # z dies here
        var = jnp.sum(zc * zc, axis=-1, keepdims=True) * inv_h
        inv_std = lax.rsqrt(var + eps)                          # EUP slot, ~free
        if ln_bf16:
            # v6e/v7x: bf16 VALU runs at 2x the f32 rate for the dominant
            # elementwise chain; stats + residual add stay f32 for accuracy.
            zn = zc.astype(jnp.bfloat16) * inv_std.astype(jnp.bfloat16)
            zn = zn * g_ref[l].astype(jnp.bfloat16) + beta_ref[l].astype(jnp.bfloat16)
            return jnp.maximum(zn, 0).astype(jnp.float32) + residual
        else:
            # v5e path: f32 VALU, compact chain (zc reused; minimal live temps
            # so spill stores don't saturate the single vst slot).
            zn = zc * inv_std * g_ref[l] + beta_ref[l]
            return jnp.maximum(zn, 0.0) + residual

    if num_blocks <= 8:
        # Static unroll: static W_h[l] indices and full LLO scheduler visibility.
        for l in range(num_blocks):
            h = block(l, h)
    else:
        # Deep models: bound vreg live ranges; partial unroll keeps some
        # cross-iteration overlap (block l's reductions vs block l+1's matmul).
        h = lax.fori_loop(0, num_blocks, block, h, unroll=2)

    # ---- output layer: (8, H) @ (tile_b, H)^T -> (8, tile_b); row 0 holds the
    #      real weights so the result is already lane-dense for the (1, tile_b)
    #      output block (no (tile_b, 1) column, no masked stores).
    out8 = lax.dot_general(w_out_ref[...], h.astype(jnp.bfloat16),
                           (((1,), (1,)), ((), ())),
                           preferred_element_type=jnp.float32)
    o_ref[...] = (out8[0:1, :] + b_out_ref[0]).astype(o_ref.dtype)


def _tpu_generation():
    """Best-effort TPU generation detection for perf defaults."""
    try:
        kind = jax.devices()[0].device_kind.lower()
    except Exception:
        return "unknown"
    if "v7" in kind:
        return "v7"
    if "v6" in kind:
        return "v6"
    if "v5e" in kind or "v5 lite" in kind or "v5lite" in kind:
        return "v5e"
    return "other"


def score_model_forward(x, params, *, tile_b=None, eps=1e-5):
    """Full ScoreModel forward pass in a single Pallas kernel, tiled over batch."""
    w_in, b_in, w_h, b_h, gamma, beta, w_out, b_out = params
    B, D_in = x.shape
    H = w_in.shape[1]
    L = w_h.shape[0]                       # number of hidden residual blocks
    assert L >= 1, "num_layers must be >= 3 (at least one residual block)"

    gen = _tpu_generation()
    # Generation-aware defaults (see header comment).
    if tile_b is None:
        if gen in ("v6", "v7"):
            tile_b = 512 if B >= 4096 else 256
        else:
            tile_b = 128
    ln_bf16 = gen in ("v6", "v7")                       # bf16 VALU available
    vmem_limit = (48 << 20) if gen == "v7" else (96 << 20)
    batch_sem = pltpu.CORE_PARALLEL if gen == "v7" else "parallel"

    # Pad batch to a multiple of tile_b (padded rows are sliced off at the end).
    B_pad = ((B + tile_b - 1) // tile_b) * tile_b
    if B_pad != B:
        x = jnp.pad(x, ((0, B_pad - B), (0, 0)))
    num_tiles = B_pad // tile_b

    # bf16 matmul operands; biases / LayerNorm affine params stay f32.
    x_bf = x.astype(jnp.bfloat16)
    w_in_bf = w_in.astype(jnp.bfloat16)
    w_h_bf = w_h.astype(jnp.bfloat16)
    # W_out as an 8-row slab (row 0 = real weights) for a full sublane group.
    w_out_pad = jnp.zeros((8, H), jnp.bfloat16).at[0].set(
        w_out.reshape(H).astype(jnp.bfloat16))
    b_in2 = b_in.reshape(1, H).astype(jnp.float32)
    b_h2 = b_h.reshape(L, 1, H).astype(jnp.float32)
    gamma2 = gamma.reshape(L, 1, H).astype(jnp.float32)
    beta2 = beta.reshape(L, 1, H).astype(jnp.float32)
    b_out1 = b_out.reshape(1).astype(jnp.float32)       # scalar -> SMEM

    kernel = functools.partial(score_model_kernel, num_blocks=L, eps=eps,
                               inv_h=1.0 / H, ln_bf16=ln_bf16)

    cost = pl.CostEstimate(
        flops=2 * B_pad * (D_in * H + L * H * H + H),
        transcendentals=L * B_pad,
        bytes_accessed=(x_bf.size * 2 + w_in_bf.size * 2 + w_h_bf.size * 2
                        + w_out_pad.size * 2
                        + (b_in2.size + b_h2.size + gamma2.size + beta2.size
                           + b_out1.size) * 4
                        + B_pad * 4))

    def build(single_buffer_weights, sem):
        def const(shape):
            kwargs = {}
            if single_buffer_weights:
                # Constant-index blocks never change across grid steps -> the
                # second pipeline buffer is pure VMEM waste (esp. the resident
                # (L, H, H) W_h on v7x's 64 MiB VMEM).
                kwargs["pipeline_mode"] = pl.Buffered(1)
            return pl.BlockSpec(shape, lambda i, _s=shape: tuple(0 for _ in _s),
                                **kwargs)

        return pl.pallas_call(
            kernel,
            out_shape=jax.ShapeDtypeStruct((1, B_pad), jnp.float32),
            grid_spec=pltpu.PrefetchScalarGridSpec(
                num_scalar_prefetch=0,
                grid=(num_tiles,),
                in_specs=[
                    pl.BlockSpec((tile_b, D_in), lambda i: (i, 0)),     # x tile
                    const((D_in, H)),                                   # W_in
                    const((1, H)),                                      # b_in
                    const((L, H, H)),                                   # W_h
                    const((L, 1, H)),                                   # b_h
                    const((L, 1, H)),                                   # gamma
                    const((L, 1, H)),                                   # beta
                    const((8, H)),                                      # W_out (8-row slab)
                    pl.BlockSpec(memory_space=pltpu.MemorySpace.SMEM),  # b_out
                ],
                # Lane-dense output: (1, tile_b) blocks of a (1, B_pad) row.
                out_specs=pl.BlockSpec((1, tile_b), lambda i: (0, i)),
            ),
            compiler_params=pltpu.CompilerParams(
                dimension_semantics=(sem,),
                vmem_limit_bytes=vmem_limit),
            cost_estimate=cost,
        )

    args = (x_bf, w_in_bf, b_in2, w_h_bf, b_h2, gamma2, beta2, w_out_pad, b_out1)
    try:
        out = build(True, batch_sem)(*args)
    except Exception:
        # Safe fallback if the toolchain rejects Buffered(1) weight specs or
        # CORE_PARALLEL: plain double-buffered consts + "parallel" batch axis.
        out = build(False, "parallel")(*args)

    return out.reshape(B_pad)[:B]          # matches x.squeeze(-1) in PyTorch


def init_params(key, input_dim, hidden_dim, num_layers):
    """Deterministic synthetic parameters (shapes match nn.Linear/LayerNorm)."""
    L = num_layers - 2
    ks = jax.random.split(key, 6)
    scale_in = 1.0 / jnp.sqrt(input_dim)
    scale_h = 1.0 / jnp.sqrt(hidden_dim)
    w_in = jax.random.normal(ks[0], (input_dim, hidden_dim), jnp.float32) * scale_in
    b_in = jax.random.normal(ks[1], (hidden_dim,), jnp.float32) * 0.01
    w_h = jax.random.normal(ks[2], (L, hidden_dim, hidden_dim), jnp.float32) * scale_h
    b_h = jax.random.normal(ks[3], (L, hidden_dim), jnp.float32) * 0.01
    gamma = jnp.ones((L, hidden_dim), jnp.float32)
    beta = jnp.zeros((L, hidden_dim), jnp.float32)
    w_out = jax.random.normal(ks[4], (hidden_dim, 1), jnp.float32) * scale_h
    b_out = jax.random.normal(ks[5], (1,), jnp.float32) * 0.01
    return (w_in, b_in, w_h, b_h, gamma, beta, w_out, b_out)


def reference_forward(x, params, eps=1e-5):
    """Pure-JAX reference matching the PyTorch module semantics (bf16 matmul
    inputs / f32 accumulation like the kernel; LayerNorm fully in f32)."""
    w_in, b_in, w_h, b_h, gamma, beta, w_out, b_out = params

    def mm(a, w):
        return jnp.dot(a.astype(jnp.bfloat16), w.astype(jnp.bfloat16),
                       preferred_element_type=jnp.float32)

    h = jnp.maximum(mm(x, w_in) + b_in, 0.0)
    for l in range(w_h.shape[0]):
        residual = h
        z = mm(h, w_h[l]) + b_h[l]
        mean = jnp.mean(z, axis=-1, keepdims=True)
        var = jnp.mean((z - mean) ** 2, axis=-1, keepdims=True)
        z = (z - mean) / jnp.sqrt(var + eps) * gamma[l] + beta[l]
        h = jnp.maximum(z, 0.0) + residual
    out = mm(h, w_out) + b_out
    return out.squeeze(-1)


if __name__ == "__main__":
    key = jax.random.PRNGKey(0)
    k_x, k_p = jax.random.split(key)

    batch = 200             # not a multiple of tile_b -> exercises batch padding
    input_dim = 32
    hidden_dim = 256        # module default
    num_layers = 4          # -> 2 residual LayerNorm blocks

    x = jax.random.normal(k_x, (batch, input_dim), jnp.float32)
    params = init_params(k_p, input_dim, hidden_dim, num_layers)

    out = score_model_forward(x, params)
    out = jax.block_until_ready(out)

    ref = reference_forward(x, params)
    assert out.shape == (batch,)
    # The reference keeps LayerNorm in f32; when the kernel takes the bf16
    # elementwise LN path (v6e/v7x) allow a correspondingly wider tolerance.
    tol = 3e-2 if _tpu_generation() in ("v6", "v7") else 5e-3
    assert jnp.allclose(out, ref, atol=tol, rtol=tol), (out, ref)

    print("KERNEL_OK")
</pallas_src>

<mosaic_0001>
module attributes {stable_mosaic.version = 11 : i64} {
  func.func @score_model_kernel(%arg0: i32, %arg1: memref<128x32xbf16, #tpu.memory_space<vmem>>, %arg2: memref<32x256xbf16, #tpu.memory_space<vmem>>, %arg3: memref<1x256xf32, #tpu.memory_space<vmem>>, %arg4: memref<2x256x256xbf16, #tpu.memory_space<vmem>>, %arg5: memref<2x1x256xf32, #tpu.memory_space<vmem>>, %arg6: memref<2x1x256xf32, #tpu.memory_space<vmem>>, %arg7: memref<2x1x256xf32, #tpu.memory_space<vmem>>, %arg8: memref<8x256xbf16, #tpu.memory_space<vmem>>, %arg9: memref<1xf32, #tpu.memory_space<smem>>, %arg10: memref<1x128xf32, #tpu.memory_space<vmem>>) attributes {dimension_semantics = [#tpu.dimension_semantics<parallel>], iteration_bounds = array<i64: 2>, scalar_prefetch = 0 : i64, scratch_operands = 0 : i64, tpu.core_type = #tpu.core_type<tc>, window_params = [{transform_indices = @transform_0, window_bounds = array<i64: 128, 32>}, {pipeline_mode = #tpu.pipeline_mode<synchronous>, transform_indices = @transform_1, window_bounds = array<i64: 32, 256>}, {pipeline_mode = #tpu.pipeline_mode<synchronous>, transform_indices = @transform_2, window_bounds = array<i64: 1, 256>}, {pipeline_mode = #tpu.pipeline_mode<synchronous>, transform_indices = @transform_3, window_bounds = array<i64: 2, 256, 256>}, {pipeline_mode = #tpu.pipeline_mode<synchronous>, transform_indices = @transform_4, window_bounds = array<i64: 2, 1, 256>}, {pipeline_mode = #tpu.pipeline_mode<synchronous>, transform_indices = @transform_5, window_bounds = array<i64: 2, 1, 256>}, {pipeline_mode = #tpu.pipeline_mode<synchronous>, transform_indices = @transform_6, window_bounds = array<i64: 2, 1, 256>}, {pipeline_mode = #tpu.pipeline_mode<synchronous>, transform_indices = @transform_7, window_bounds = array<i64: 8, 256>}, {transform_indices = @transform_8, window_bounds = array<i64: 1>}, {transform_indices = @transform_9, window_bounds = array<i64: 1, 128>}]} {
    %c0 = arith.constant 0 : index
    %c0_0 = arith.constant 0 : index
    %0 = vector.load %arg1[%c0, %c0_0] : memref<128x32xbf16, #tpu.memory_space<vmem>>, vector<128x32xbf16>
    %c0_1 = arith.constant 0 : index
    %c0_2 = arith.constant 0 : index
    %1 = vector.load %arg2[%c0_1, %c0_2] : memref<32x256xbf16, #tpu.memory_space<vmem>>, vector<32x256xbf16>
    %cst = arith.constant dense<0.000000e+00> : vector<128x256xf32>
    %2 = tpu.matmul %0, %1, %cst {dimension_numbers = #tpu.dot_dimension_numbers<[1], [0], [0], [1], [0, 0, 1, 1], [], []>} : vector<128x32xbf16>, vector<32x256xbf16>, vector<128x256xf32> -> vector<128x256xf32>
    %c0_3 = arith.constant 0 : index
    %c0_4 = arith.constant 0 : index
    %3 = vector.load %arg3[%c0_3, %c0_4] : memref<1x256xf32, #tpu.memory_space<vmem>>, vector<1x256xf32>
    %4 = vector.broadcast %3 : vector<1x256xf32> to vector<128x256xf32>
    %5 = arith.addf %2, %4 : vector<128x256xf32>
    %cst_5 = arith.constant 0.000000e+00 : f32
    %6 = vector.broadcast %cst_5 : f32 to vector<128x256xf32>
    %7 = arith.maximumf %5, %6 : vector<128x256xf32>
    %8 = arith.truncf %7 : vector<128x256xf32> to vector<128x256xbf16>
    %c0_6 = arith.constant 0 : index
    %c0_7 = arith.constant 0 : index
    %c0_8 = arith.constant 0 : index
    %9 = vector.load %arg4[%c0_6, %c0_7, %c0_8] : memref<2x256x256xbf16, #tpu.memory_space<vmem>>, vector<1x256x256xbf16>
    %10 = vector.shape_cast %9 : vector<1x256x256xbf16> to vector<256x256xbf16>
    %cst_9 = arith.constant dense<0.000000e+00> : vector<128x256xf32>
    %11 = tpu.matmul %8, %10, %cst_9 {dimension_numbers = #tpu.dot_dimension_numbers<[1], [0], [0], [1], [0, 0, 1, 1], [], []>} : vector<128x256xbf16>, vector<256x256xbf16>, vector<128x256xf32> -> vector<128x256xf32>
    %c0_10 = arith.constant 0 : index
    %c0_11 = arith.constant 0 : index
    %c0_12 = arith.constant 0 : index
    %12 = vector.load %arg5[%c0_10, %c0_11, %c0_12] : memref<2x1x256xf32, #tpu.memory_space<vmem>>, vector<1x1x256xf32>
    %13 = vector.shape_cast %12 : vector<1x1x256xf32> to vector<1x256xf32>
    %14 = vector.broadcast %13 : vector<1x256xf32> to vector<128x256xf32>
    %15 = arith.addf %11, %14 : vector<128x256xf32>
    %cst_13 = arith.constant dense<0.000000e+00> : vector<128xf32>
    %16 = vector.multi_reduction <add>, %15, %cst_13 [1] : vector<128x256xf32> to vector<128xf32>
    %17 = vector.shape_cast %16 : vector<128xf32> to vector<128x1xf32>
    %cst_14 = arith.constant 3.906250e-03 : f32
    %18 = vector.broadcast %cst_14 : f32 to vector<128x1xf32>
    %19 = arith.mulf %17, %18 : vector<128x1xf32>
    %20 = vector.broadcast %19 : vector<128x1xf32> to vector<128x256xf32>
    %21 = arith.subf %15, %20 : vector<128x256xf32>
    %22 = arith.mulf %21, %21 : vector<128x256xf32>
    %cst_15 = arith.constant dense<0.000000e+00> : vector<128xf32>
    %23 = vector.multi_reduction <add>, %22, %cst_15 [1] : vector<128x256xf32> to vector<128xf32>
    %24 = vector.shape_cast %23 : vector<128xf32> to vector<128x1xf32>
    %cst_16 = arith.constant 3.906250e-03 : f32
    %25 = vector.broadcast %cst_16 : f32 to vector<128x1xf32>
    %26 = arith.mulf %24, %25 : vector<128x1xf32>
    %cst_17 = arith.constant 9.99999974E-6 : f32
    %27 = vector.broadcast %cst_17 : f32 to vector<128x1xf32>
    %28 = arith.addf %26, %27 : vector<128x1xf32>
    %29 = math.rsqrt %28 : vector<128x1xf32>
    %30 = vector.broadcast %29 : vector<128x1xf32> to vector<128x256xf32>
    %31 = arith.mulf %21, %30 : vector<128x256xf32>
    %c0_18 = arith.constant 0 : index
    %c0_19 = arith.constant 0 : index
    %c0_20 = arith.constant 0 : index
    %32 = vector.load %arg6[%c0_18, %c0_19, %c0_20] : memref<2x1x256xf32, #tpu.memory_space<vmem>>, vector<1x1x256xf32>
    %33 = vector.shape_cast %32 : vector<1x1x256xf32> to vector<1x256xf32>
    %34 = vector.broadcast %33 : vector<1x256xf32> to vector<128x256xf32>
    %35 = arith.mulf %31, %34 : vector<128x256xf32>
    %c0_21 = arith.constant 0 : index
    %c0_22 = arith.constant 0 : index
    %c0_23 = arith.constant 0 : index
    %36 = vector.load %arg7[%c0_21, %c0_22, %c0_23] : memref<2x1x256xf32, #tpu.memory_space<vmem>>, vector<1x1x256xf32>
    %37 = vector.shape_cast %36 : vector<1x1x256xf32> to vector<1x256xf32>
    %38 = vector.broadcast %37 : vector<1x256xf32> to vector<128x256xf32>
    %39 = arith.addf %35, %38 : vector<128x256xf32>
    %cst_24 = arith.constant 0.000000e+00 : f32
    %40 = vector.broadcast %cst_24 : f32 to vector<128x256xf32>
    %41 = arith.maximumf %39, %40 : vector<128x256xf32>
    %42 = arith.addf %41, %7 : vector<128x256xf32>
    %43 = arith.truncf %42 : vector<128x256xf32> to vector<128x256xbf16>
    %c1 = arith.constant 1 : index
    %c0_25 = arith.constant 0 : index
    %c0_26 = arith.constant 0 : index
    %44 = vector.load %arg4[%c1, %c0_25, %c0_26] : memref<2x256x256xbf16, #tpu.memory_space<vmem>>, vector<1x256x256xbf16>
    %45 = vector.shape_cast %44 : vector<1x256x256xbf16> to vector<256x256xbf16>
    %cst_27 = arith.constant dense<0.000000e+00> : vector<128x256xf32>
    %46 = tpu.matmul %43, %45, %cst_27 {dimension_numbers = #tpu.dot_dimension_numbers<[1], [0], [0], [1], [0, 0, 1, 1], [], []>} : vector<128x256xbf16>, vector<256x256xbf16>, vector<128x256xf32> -> vector<128x256xf32>
    %c1_28 = arith.constant 1 : index
    %c0_29 = arith.constant 0 : index
    %c0_30 = arith.constant 0 : index
    %47 = vector.load %arg5[%c1_28, %c0_29, %c0_30] : memref<2x1x256xf32, #tpu.memory_space<vmem>>, vector<1x1x256xf32>
    %48 = vector.shape_cast %47 : vector<1x1x256xf32> to vector<1x256xf32>
    %49 = vector.broadcast %48 : vector<1x256xf32> to vector<128x256xf32>
    %50 = arith.addf %46, %49 : vector<128x256xf32>
    %cst_31 = arith.constant dense<0.000000e+00> : vector<128xf32>
    %51 = vector.multi_reduction <add>, %50, %cst_31 [1] : vector<128x256xf32> to vector<128xf32>
    %52 = vector.shape_cast %51 : vector<128xf32> to vector<128x1xf32>
    %cst_32 = arith.constant 3.906250e-03 : f32
    %53 = vector.broadcast %cst_32 : f32 to vector<128x1xf32>
    %54 = arith.mulf %52, %53 : vector<128x1xf32>
    %55 = vector.broadcast %54 : vector<128x1xf32> to vector<128x256xf32>
    %56 = arith.subf %50, %55 : vector<128x256xf32>
    %57 = arith.mulf %56, %56 : vector<128x256xf32>
    %cst_33 = arith.constant dense<0.000000e+00> : vector<128xf32>
    %58 = vector.multi_reduction <add>, %57, %cst_33 [1] : vector<128x256xf32> to vector<128xf32>
    %59 = vector.shape_cast %58 : vector<128xf32> to vector<128x1xf32>
    %cst_34 = arith.constant 3.906250e-03 : f32
    %60 = vector.broadcast %cst_34 : f32 to vector<128x1xf32>
    %61 = arith.mulf %59, %60 : vector<128x1xf32>
    %cst_35 = arith.constant 9.99999974E-6 : f32
    %62 = vector.broadcast %cst_35 : f32 to vector<128x1xf32>
    %63 = arith.addf %61, %62 : vector<128x1xf32>
    %64 = math.rsqrt %63 : vector<128x1xf32>
    %65 = vector.broadcast %64 : vector<128x1xf32> to vector<128x256xf32>
    %66 = arith.mulf %56, %65 : vector<128x256xf32>
    %c1_36 = arith.constant 1 : index
    %c0_37 = arith.constant 0 : index
    %c0_38 = arith.constant 0 : index
    %67 = vector.load %arg6[%c1_36, %c0_37, %c0_38] : memref<2x1x256xf32, #tpu.memory_space<vmem>>, vector<1x1x256xf32>
    %68 = vector.shape_cast %67 : vector<1x1x256xf32> to vector<1x256xf32>
    %69 = vector.broadcast %68 : vector<1x256xf32> to vector<128x256xf32>
    %70 = arith.mulf %66, %69 : vector<128x256xf32>
    %c1_39 = arith.constant 1 : index
    %c0_40 = arith.constant 0 : index
    %c0_41 = arith.constant 0 : index
    %71 = vector.load %arg7[%c1_39, %c0_40, %c0_41] : memref<2x1x256xf32, #tpu.memory_space<vmem>>, vector<1x1x256xf32>
    %72 = vector.shape_cast %71 : vector<1x1x256xf32> to vector<1x256xf32>
    %73 = vector.broadcast %72 : vector<1x256xf32> to vector<128x256xf32>
    %74 = arith.addf %70, %73 : vector<128x256xf32>
    %cst_42 = arith.constant 0.000000e+00 : f32
    %75 = vector.broadcast %cst_42 : f32 to vector<128x256xf32>
    %76 = arith.maximumf %74, %75 : vector<128x256xf32>
    %77 = arith.addf %76, %42 : vector<128x256xf32>
    %c0_43 = arith.constant 0 : index
    %c0_44 = arith.constant 0 : index
    %78 = vector.load %arg8[%c0_43, %c0_44] : memref<8x256xbf16, #tpu.memory_space<vmem>>, vector<8x256xbf16>
    %79 = arith.truncf %77 : vector<128x256xf32> to vector<128x256xbf16>
    %cst_45 = arith.constant dense<0.000000e+00> : vector<8x128xf32>
    %80 = tpu.matmul %78, %79, %cst_45 {dimension_numbers = #tpu.dot_dimension_numbers<[1], [1], [0], [0], [0, 0, 1, 0], [], []>} : vector<8x256xbf16>, vector<128x256xbf16>, vector<8x128xf32> -> vector<8x128xf32>
    %81 = vector.extract_strided_slice %80 {offsets = [0, 0], sizes = [1, 128], strides = [1, 1]} : vector<8x128xf32> to vector<1x128xf32>
    %c0_46 = arith.constant 0 : index
    %82 = memref.load %arg9[%c0_46] : memref<1xf32, #tpu.memory_space<smem>>
    %83 = vector.broadcast %82 : f32 to vector<1x128xf32>
    %84 = arith.addf %81, %83 : vector<1x128xf32>
    %c0_47 = arith.constant 0 : index
    %c0_48 = arith.constant 0 : index
    %85 = vector.load %arg10[%c0_47, %c0_48] : memref<1x128xf32, #tpu.memory_space<vmem>>, vector<1x128xf32>
    tpu.vector_store %arg10[%c0_47, %c0_48], %84 {strides = array<i32>} : memref<1x128xf32, #tpu.memory_space<vmem>>, vector<1x128xf32>,
    return
  }
  func.func @transform_0(%arg0: i32) -> (i32, i32) {
    %c0_i32 = arith.constant 0 : i32
    %c0_i32_0 = arith.constant 0 : i32
    return %arg0, %c0_i32 : i32, i32
  }
  func.func @transform_1(%arg0: i32) -> (i32, i32) {
    %c0_i32 = arith.constant 0 : i32
    %c0_i32_0 = arith.constant 0 : i32
    %c0_i32_1 = arith.constant 0 : i32
    return %c0_i32, %c0_i32_0 : i32, i32
  }
  func.func @transform_2(%arg0: i32) -> (i32, i32) {
    %c0_i32 = arith.constant 0 : i32
    %c0_i32_0 = arith.constant 0 : i32
    %c0_i32_1 = arith.constant 0 : i32
    return %c0_i32, %c0_i32_0 : i32, i32
  }
  func.func @transform_3(%arg0: i32) -> (i32, i32, i32) {
    %c0_i32 = arith.constant 0 : i32
    %c0_i32_0 = arith.constant 0 : i32
    %c0_i32_1 = arith.constant 0 : i32
    %c0_i32_2 = arith.constant 0 : i32
    return %c0_i32, %c0_i32_0, %c0_i32_1 : i32, i32, i32
  }
  func.func @transform_4(%arg0: i32) -> (i32, i32, i32) {
    %c0_i32 = arith.constant 0 : i32
    %c0_i32_0 = arith.constant 0 : i32
    %c0_i32_1 = arith.constant 0 : i32
    %c0_i32_2 = arith.constant 0 : i32
    return %c0_i32, %c0_i32_0, %c0_i32_1 : i32, i32, i32
  }
  func.func @transform_5(%arg0: i32) -> (i32, i32, i32) {
    %c0_i32 = arith.constant 0 : i32
    %c0_i32_0 = arith.constant 0 : i32
    %c0_i32_1 = arith.constant 0 : i32
    %c0_i32_2 = arith.constant 0 : i32
    return %c0_i32, %c0_i32_0, %c0_i32_1 : i32, i32, i32
  }
  func.func @transform_6(%arg0: i32) -> (i32, i32, i32) {
    %c0_i32 = arith.constant 0 : i32
    %c0_i32_0 = arith.constant 0 : i32
    %c0_i32_1 = arith.constant 0 : i32
    %c0_i32_2 = arith.constant 0 : i32
    return %c0_i32, %c0_i32_0, %c0_i32_1 : i32, i32, i32
  }
  func.func @transform_7(%arg0: i32) -> (i32, i32) {
    %c0_i32 = arith.constant 0 : i32
    %c0_i32_0 = arith.constant 0 : i32
    %c0_i32_1 = arith.constant 0 : i32
    return %c0_i32, %c0_i32_0 : i32, i32
  }
  func.func @transform_8(%arg0: i32) -> i32 {
    %c0_i32 = arith.constant 0 : i32
    %c0_i32_0 = arith.constant 0 : i32
    return %c0_i32 : i32
  }
  func.func @transform_9(%arg0: i32) -> (i32, i32) {
    %c0_i32 = arith.constant 0 : i32
    %c0_i32_0 = arith.constant 0 : i32
    return %c0_i32, %arg0 : i32, i32
  }
}

module attributes {stable_mosaic.version = 11 : i64} {
  func.func @score_model_kernel(%arg0: i32, %arg1: memref<128x32xbf16, #tpu.memory_space<vmem>>, %arg2: memref<32x256xbf16, #tpu.memory_space<vmem>>, %arg3: memref<1x256xf32, #tpu.memory_space<vmem>>, %arg4: memref<2x256x256xbf16, #tpu.memory_space<vmem>>, %arg5: memref<2x1x256xf32, #tpu.memory_space<vmem>>, %arg6: memref<2x1x256xf32, #tpu.memory_space<vmem>>, %arg7: memref<2x1x256xf32, #tpu.memory_space<vmem>>, %arg8: memref<8x256xbf16, #tpu.memory_space<vmem>>, %arg9: memref<1xf32, #tpu.memory_space<smem>>, %arg10: memref<1x128xf32, #tpu.memory_space<vmem>>) attributes {dimension_semantics = [#tpu.dimension_semantics<parallel>], iteration_bounds = array<i64: 2>, scalar_prefetch = 0 : i64, scratch_operands = 0 : i64, tpu.core_type = #tpu.core_type<tc>, window_params = [{transform_indices = @transform_0, window_bounds = array<i64: 128, 32>}, {pipeline_mode = #tpu.pipeline_mode<synchronous>, transform_indices = @transform_1, window_bounds = array<i64: 32, 256>}, {pipeline_mode = #tpu.pipeline_mode<synchronous>, transform_indices = @transform_2, window_bounds = array<i64: 1, 256>}, {pipeline_mode = #tpu.pipeline_mode<synchronous>, transform_indices = @transform_3, window_bounds = array<i64: 2, 256, 256>}, {pipeline_mode = #tpu.pipeline_mode<synchronous>, transform_indices = @transform_4, window_bounds = array<i64: 2, 1, 256>}, {pipeline_mode = #tpu.pipeline_mode<synchronous>, transform_indices = @transform_5, window_bounds = array<i64: 2, 1, 256>}, {pipeline_mode = #tpu.pipeline_mode<synchronous>, transform_indices = @transform_6, window_bounds = array<i64: 2, 1, 256>}, {pipeline_mode = #tpu.pipeline_mode<synchronous>, transform_indices = @transform_7, window_bounds = array<i64: 8, 256>}, {transform_indices = @transform_8, window_bounds = array<i64: 1>}, {transform_indices = @transform_9, window_bounds = array<i64: 1, 128>}]} {
    %c0 = arith.constant 0 : index
    %c0_0 = arith.constant 0 : index
    %0 = vector.load %arg1[%c0, %c0_0] : memref<128x32xbf16, #tpu.memory_space<vmem>>, vector<128x32xbf16>
    %c0_1 = arith.constant 0 : index
    %c0_2 = arith.constant 0 : index
    %1 = vector.load %arg2[%c0_1, %c0_2] : memref<32x256xbf16, #tpu.memory_space<vmem>>, vector<32x256xbf16>
    %cst = arith.constant dense<0.000000e+00> : vector<128x256xf32>
    %2 = tpu.matmul %0, %1, %cst {dimension_numbers = #tpu.dot_dimension_numbers<[1], [0], [0], [1], [0, 0, 1, 1], [], []>} : vector<128x32xbf16>, vector<32x256xbf16>, vector<128x256xf32> -> vector<128x256xf32>
    %c0_3 = arith.constant 0 : index
    %c0_4 = arith.constant 0 : index
    %3 = vector.load %arg3[%c0_3, %c0_4] : memref<1x256xf32, #tpu.memory_space<vmem>>, vector<1x256xf32>
    %4 = vector.broadcast %3 : vector<1x256xf32> to vector<128x256xf32>
    %5 = arith.addf %2, %4 : vector<128x256xf32>
    %cst_5 = arith.constant 0.000000e+00 : f32
    %6 = vector.broadcast %cst_5 : f32 to vector<128x256xf32>
    %7 = arith.maximumf %5, %6 : vector<128x256xf32>
    %8 = arith.truncf %7 : vector<128x256xf32> to vector<128x256xbf16>
    %c0_6 = arith.constant 0 : index
    %c0_7 = arith.constant 0 : index
    %c0_8 = arith.constant 0 : index
    %9 = vector.load %arg4[%c0_6, %c0_7, %c0_8] : memref<2x256x256xbf16, #tpu.memory_space<vmem>>, vector<1x256x256xbf16>
    %10 = vector.shape_cast %9 : vector<1x256x256xbf16> to vector<256x256xbf16>
    %cst_9 = arith.constant dense<0.000000e+00> : vector<128x256xf32>
    %11 = tpu.matmul %8, %10, %cst_9 {dimension_numbers = #tpu.dot_dimension_numbers<[1], [0], [0], [1], [0, 0, 1, 1], [], []>} : vector<128x256xbf16>, vector<256x256xbf16>, vector<128x256xf32> -> vector<128x256xf32>
    %c0_10 = arith.constant 0 : index
    %c0_11 = arith.constant 0 : index
    %c0_12 = arith.constant 0 : index
    %12 = vector.load %arg5[%c0_10, %c0_11, %c0_12] : memref<2x1x256xf32, #tpu.memory_space<vmem>>, vector<1x1x256xf32>
    %13 = vector.shape_cast %12 : vector<1x1x256xf32> to vector<1x256xf32>
    %14 = vector.broadcast %13 : vector<1x256xf32> to vector<128x256xf32>
    %15 = arith.addf %11, %14 : vector<128x256xf32>
    %cst_13 = arith.constant dense<0.000000e+00> : vector<128xf32>
    %16 = vector.multi_reduction <add>, %15, %cst_13 [1] : vector<128x256xf32> to vector<128xf32>
    %17 = vector.shape_cast %16 : vector<128xf32> to vector<128x1xf32>
    %cst_14 = arith.constant 3.906250e-03 : f32
    %18 = vector.broadcast %cst_14 : f32 to vector<128x1xf32>
    %19 = arith.mulf %17, %18 : vector<128x1xf32>
    %20 = vector.broadcast %19 : vector<128x1xf32> to vector<128x256xf32>
    %21 = arith.subf %15, %20 : vector<128x256xf32>
    %22 = arith.mulf %21, %21 : vector<128x256xf32>
    %cst_15 = arith.constant dense<0.000000e+00> : vector<128xf32>
    %23 = vector.multi_reduction <add>, %22, %cst_15 [1] : vector<128x256xf32> to vector<128xf32>
    %24 = vector.shape_cast %23 : vector<128xf32> to vector<128x1xf32>
    %cst_16 = arith.constant 3.906250e-03 : f32
    %25 = vector.broadcast %cst_16 : f32 to vector<128x1xf32>
    %26 = arith.mulf %24, %25 : vector<128x1xf32>
    %cst_17 = arith.constant 9.99999974E-6 : f32
    %27 = vector.broadcast %cst_17 : f32 to vector<128x1xf32>
    %28 = arith.addf %26, %27 : vector<128x1xf32>
    %29 = math.rsqrt %28 : vector<128x1xf32>
    %30 = vector.broadcast %29 : vector<128x1xf32> to vector<128x256xf32>
    %31 = arith.mulf %21, %30 : vector<128x256xf32>
    %c0_18 = arith.constant 0 : index
    %c0_19 = arith.constant 0 : index
    %c0_20 = arith.constant 0 : index
    %32 = vector.load %arg6[%c0_18, %c0_19, %c0_20] : memref<2x1x256xf32, #tpu.memory_space<vmem>>, vector<1x1x256xf32>
    %33 = vector.shape_cast %32 : vector<1x1x256xf32> to vector<1x256xf32>
    %34 = vector.broadcast %33 : vector<1x256xf32> to vector<128x256xf32>
    %35 = arith.mulf %31, %34 : vector<128x256xf32>
    %c0_21 = arith.constant 0 : index
    %c0_22 = arith.constant 0 : index
    %c0_23 = arith.constant 0 : index
    %36 = vector.load %arg7[%c0_21, %c0_22, %c0_23] : memref<2x1x256xf32, #tpu.memory_space<vmem>>, vector<1x1x256xf32>
    %37 = vector.shape_cast %36 : vector<1x1x256xf32> to vector<1x256xf32>
    %38 = vector.broadcast %37 : vector<1x256xf32> to vector<128x256xf32>
    %39 = arith.addf %35, %38 : vector<128x256xf32>
    %cst_24 = arith.constant 0.000000e+00 : f32
    %40 = vector.broadcast %cst_24 : f32 to vector<128x256xf32>
    %41 = arith.maximumf %39, %40 : vector<128x256xf32>
    %42 = arith.addf %41, %7 : vector<128x256xf32>
    %43 = arith.truncf %42 : vector<128x256xf32> to vector<128x256xbf16>
    %c1 = arith.constant 1 : index
    %c0_25 = arith.constant 0 : index
    %c0_26 = arith.constant 0 : index
    %44 = vector.load %arg4[%c1, %c0_25, %c0_26] : memref<2x256x256xbf16, #tpu.memory_space<vmem>>, vector<1x256x256xbf16>
    %45 = vector.shape_cast %44 : vector<1x256x256xbf16> to vector<256x256xbf16>
    %cst_27 = arith.constant dense<0.000000e+00> : vector<128x256xf32>
    %46 = tpu.matmul %43, %45, %cst_27 {dimension_numbers = #tpu.dot_dimension_numbers<[1], [0], [0], [1], [0, 0, 1, 1], [], []>} : vector<128x256xbf16>, vector<256x256xbf16>, vector<128x256xf32> -> vector<128x256xf32>
    %c1_28 = arith.constant 1 : index
    %c0_29 = arith.constant 0 : index
    %c0_30 = arith.constant 0 : index
    %47 = vector.load %arg5[%c1_28, %c0_29, %c0_30] : memref<2x1x256xf32, #tpu.memory_space<vmem>>, vector<1x1x256xf32>
    %48 = vector.shape_cast %47 : vector<1x1x256xf32> to vector<1x256xf32>
    %49 = vector.broadcast %48 : vector<1x256xf32> to vector<128x256xf32>
    %50 = arith.addf %46, %49 : vector<128x256xf32>
    %cst_31 = arith.constant dense<0.000000e+00> : vector<128xf32>
    %51 = vector.multi_reduction <add>, %50, %cst_31 [1] : vector<128x256xf32> to vector<128xf32>
    %52 = vector.shape_cast %51 : vector<128xf32> to vector<128x1xf32>
    %cst_32 = arith.constant 3.906250e-03 : f32
    %53 = vector.broadcast %cst_32 : f32 to vector<128x1xf32>
    %54 = arith.mulf %52, %53 : vector<128x1xf32>
    %55 = vector.broadcast %54 : vector<128x1xf32> to vector<128x256xf32>
    %56 = arith.subf %50, %55 : vector<128x256xf32>
    %57 = arith.mulf %56, %56 : vector<128x256xf32>
    %cst_33 = arith.constant dense<0.000000e+00> : vector<128xf32>
    %58 = vector.multi_reduction <add>, %57, %cst_33 [1] : vector<128x256xf32> to vector<128xf32>
    %59 = vector.shape_cast %58 : vector<128xf32> to vector<128x1xf32>
    %cst_34 = arith.constant 3.906250e-03 : f32
    %60 = vector.broadcast %cst_34 : f32 to vector<128x1xf32>
    %61 = arith.mulf %59, %60 : vector<128x1xf32>
    %cst_35 = arith.constant 9.99999974E-6 : f32
    %62 = vector.broadcast %cst_35 : f32 to vector<128x1xf32>
    %63 = arith.addf %61, %62 : vector<128x1xf32>
    %64 = math.rsqrt %63 : vector<128x1xf32>
    %65 = vector.broadcast %64 : vector<128x1xf32> to vector<128x256xf32>
    %66 = arith.mulf %56, %65 : vector<128x256xf32>
    %c1_36 = arith.constant 1 : index
    %c0_37 = arith.constant 0 : index
    %c0_38 = arith.constant 0 : index
    %67 = vector.load %arg6[%c1_36, %c0_37, %c0_38] : memref<2x1x256xf32, #tpu.memory_space<vmem>>, vector<1x1x256xf32>
    %68 = vector.shape_cast %67 : vector<1x1x256xf32> to vector<1x256xf32>
    %69 = vector.broadcast %68 : vector<1x256xf32> to vector<128x256xf32>
    %70 = arith.mulf %66, %69 : vector<128x256xf32>
    %c1_39 = arith.constant 1 : index
    %c0_40 = arith.constant 0 : index
    %c0_41 = arith.constant 0 : index
    %71 = vector.load %arg7[%c1_39, %c0_40, %c0_41] : memref<2x1x256xf32, #tpu.memory_space<vmem>>, vector<1x1x256xf32>
    %72 = vector.shape_cast %71 : vector<1x1x256xf32> to vector<1x256xf32>
    %73 = vector.broadcast %72 : vector<1x256xf32> to vector<128x256xf32>
    %74 = arith.addf %70, %73 : vector<128x256xf32>
    %cst_42 = arith.constant 0.000000e+00 : f32
    %75 = vector.broadcast %cst_42 : f32 to vector<128x256xf32>
    %76 = arith.maximumf %74, %75 : vector<128x256xf32>
    %77 = arith.addf %76, %42 : vector<128x256xf32>
    %c0_43 = arith.constant 0 : index
    %c0_44 = arith.constant 0 : index
    %78 = vector.load %arg8[%c0_43, %c0_44] : memref<8x256xbf16, #tpu.memory_space<vmem>>, vector<8x256xbf16>
    %79 = arith.truncf %77 : vector<128x256xf32> to vector<128x256xbf16>
    %cst_45 = arith.constant dense<0.000000e+00> : vector<8x128xf32>
    %80 = tpu.matmul %78, %79, %cst_45 {dimension_numbers = #tpu.dot_dimension_numbers<[1], [1], [0], [0], [0, 0, 1, 0], [], []>} : vector<8x256xbf16>, vector<128x256xbf16>, vector<8x128xf32> -> vector<8x128xf32>
    %81 = vector.extract_strided_slice %80 {offsets = [0, 0], sizes = [1, 128], strides = [1, 1]} : vector<8x128xf32> to vector<1x128xf32>
    %c0_46 = arith.constant 0 : index
    %82 = memref.load %arg9[%c0_46] : memref<1xf32, #tpu.memory_space<smem>>
    %83 = vector.broadcast %82 : f32 to vector<1x128xf32>
    %84 = arith.addf %81, %83 : vector<1x128xf32>
    %c0_47 = arith.constant 0 : index
    %c0_48 = arith.constant 0 : index
    %85 = vector.load %arg10[%c0_47, %c0_48] : memref<1x128xf32, #tpu.memory_space<vmem>>, vector<1x128xf32>
    tpu.vector_store %arg10[%c0_47, %c0_48], %84 {strides = array<i32>} : memref<1x128xf32, #tpu.memory_space<vmem>>, vector<1x128xf32>,
    return
  }
  func.func @transform_0(%arg0: i32) -> (i32, i32) {
    %c0_i32 = arith.constant 0 : i32
    %c0_i32_0 = arith.constant 0 : i32
    return %arg0, %c0_i32 : i32, i32
  }
  func.func @transform_1(%arg0: i32) -> (i32, i32) {
    %c0_i32 = arith.constant 0 : i32
    %c0_i32_0 = arith.constant 0 : i32
    %c0_i32_1 = arith.constant 0 : i32
    return %c0_i32, %c0_i32_0 : i32, i32
  }
  func.func @transform_2(%arg0: i32) -> (i32, i32) {
    %c0_i32 = arith.constant 0 : i32
    %c0_i32_0 = arith.constant 0 : i32
    %c0_i32_1 = arith.constant 0 : i32
    return %c0_i32, %c0_i32_0 : i32, i32
  }
  func.func @transform_3(%arg0: i32) -> (i32, i32, i32) {
    %c0_i32 = arith.constant 0 : i32
    %c0_i32_0 = arith.constant 0 : i32
    %c0_i32_1 = arith.constant 0 : i32
    %c0_i32_2 = arith.constant 0 : i32
    return %c0_i32, %c0_i32_0, %c0_i32_1 : i32, i32, i32
  }
  func.func @transform_4(%arg0: i32) -> (i32, i32, i32) {
    %c0_i32 = arith.constant 0 : i32
    %c0_i32_0 = arith.constant 0 : i32
    %c0_i32_1 = arith.constant 0 : i32
    %c0_i32_2 = arith.constant 0 : i32
    return %c0_i32, %c0_i32_0, %c0_i32_1 : i32, i32, i32
  }
  func.func @transform_5(%arg0: i32) -> (i32, i32, i32) {
    %c0_i32 = arith.constant 0 : i32
    %c0_i32_0 = arith.constant 0 : i32
    %c0_i32_1 = arith.constant 0 : i32
    %c0_i32_2 = arith.constant 0 : i32
    return %c0_i32, %c0_i32_0, %c0_i32_1 : i32, i32, i32
  }
  func.func @transform_6(%arg0: i32) -> (i32, i32, i32) {
    %c0_i32 = arith.constant 0 : i32
    %c0_i32_0 = arith.constant 0 : i32
    %c0_i32_1 = arith.constant 0 : i32
    %c0_i32_2 = arith.constant 0 : i32
    return %c0_i32, %c0_i32_0, %c0_i32_1 : i32, i32, i32
  }
  func.func @transform_7(%arg0: i32) -> (i32, i32) {
    %c0_i32 = arith.constant 0 : i32
    %c0_i32_0 = arith.constant 0 : i32
    %c0_i32_1 = arith.constant 0 : i32
    return %c0_i32, %c0_i32_0 : i32, i32
  }
  func.func @transform_8(%arg0: i32) -> i32 {
    %c0_i32 = arith.constant 0 : i32
    %c0_i32_0 = arith.constant 0 : i32
    return %c0_i32 : i32
  }
  func.func @transform_9(%arg0: i32) -> (i32, i32) {
    %c0_i32 = arith.constant 0 : i32
    %c0_i32_0 = arith.constant 0 : i32
    return %c0_i32, %arg0 : i32, i32
  }
}

</mosaic_0001>

<llo_original>
// kernel: tpu_custom_call.1
$region0: #{tpu_custom_call.1}
  #allocation0 [shape = 'u32[]', space=smem, size = 0x4, offset = 0x4, fixed_abs, tag = 'smem constant byte address 0x4 - core index']
  #allocation1 [shape = 'u32[144,128]{1,0:T(1,128)}', space=vmem, size = 0x12000, scoped, tag = 'internal scratch']
  #allocation2 [shape = 'f32[1]{0:T(128)S(6)}', space=smem, size = 0x200, scoped, tag = 'scoped memory for tpu_custom_call.1']
  %s0 = inlined_call_operand.hbm [shape: bf16[256,32], index: 0, kind: input, shape index: {}]
  %s1 = inlined_call_operand.hbm [shape: bf16[32,256], index: 1, kind: input, shape index: {}]
  %s2 = inlined_call_operand.hbm [shape: f32[1,256], index: 2, kind: input, shape index: {}]
  %s3 = inlined_call_operand.hbm [shape: bf16[2,256,256], index: 3, kind: input, shape index: {}]
  %s4 = inlined_call_operand.hbm [shape: f32[2,1,256], index: 4, kind: input, shape index: {}]
  %s5 = inlined_call_operand.hbm [shape: f32[2,1,256], index: 5, kind: input, shape index: {}]
  %s6 = inlined_call_operand.hbm [shape: f32[2,1,256], index: 6, kind: input, shape index: {}]
  %s7 = inlined_call_operand.hbm [shape: bf16[8,256], index: 7, kind: input, shape index: {}]
  %s8 = inlined_call_operand.<no memory space> [shape: f32[1], index: 8, kind: input, shape index: {}]
  %s9 = inlined_call_operand.hbm [shape: f32[1,256], index: 9, kind: output, shape index: {}]
  %s10 = sld [smem:[#allocation0]]
  $region101: #{tpu_custom_call.1} parent=0
    _
  %s12 = ssub.s32 1, %s10
  %s13 = scalar_select 0, %s12, %s10
  %14 = sst [smem:[#allocation2]] %s8
  $region1: #{tpu_custom_call.1} parent=0
    #allocation3 [shape = 'u8[65536]{0}', space=vmem, size = 0x10000, scoped, tag = 'input window, operand 0']
    #allocation4 [shape = 's32[2]{0}', space=sflag, size = 0x8, scoped, tag = 'scoped memory for tpu_custom_call.1']
    #allocation5 [shape = 's32[2]{0}', space=sflag, size = 0x8, scoped, tag = 'scoped memory for tpu_custom_call.1']
    #allocation6 [shape = 'u8[16384]{0}', space=vmem, size = 0x4000, scoped, tag = 'input window, operand 1, single buffered']
    #allocation7 [shape = 's32[1]{0}', space=sflag, size = 0x4, scoped, tag = 'scoped memory for tpu_custom_call.1']
    #allocation8 [shape = 'u8[1024]{0}', space=vmem, size = 0x400, scoped, tag = 'input window, operand 2, single buffered']
    #allocation9 [shape = 'u8[262144]{0}', space=vmem, size = 0x40000, scoped, tag = 'input window, operand 3, single buffered']
    #allocation10 [shape = 's32[1]{0}', space=sflag, size = 0x4, scoped, tag = 'scoped memory for tpu_custom_call.1']
    #allocation11 [shape = 'u8[2048]{0}', space=vmem, size = 0x800, scoped, tag = 'input window, operand 4, single buffered']
    #allocation12 [shape = 'u8[2048]{0}', space=vmem, size = 0x800, scoped, tag = 'input window, operand 5, single buffered']
    #allocation13 [shape = 's32[1]{0}', space=sflag, size = 0x4, scoped, tag = 'scoped memory for tpu_custom_call.1']
    #allocation14 [shape = 'u8[2048]{0}', space=vmem, size = 0x800, scoped, tag = 'input window, operand 6, single buffered']
    #allocation15 [shape = 'u8[4096]{0}', space=vmem, size = 0x1000, scoped, tag = 'input window, operand 7, single buffered']
    #allocation16 [shape = 's32[1]{0}', space=sflag, size = 0x4, scoped, tag = 'scoped memory for tpu_custom_call.1']
    #allocation17 [shape = 'u8[1024]{0}', space=vmem, size = 0x400, scoped, tag = 'output window, operand 0']
    %15 = vsyncpa [#allocation4], 0
    %s16 = scalar_lea.sflag [#allocation4], 1
    %17 = vsyncpa %s16, 0
    %18 = vsyncpa [#allocation7], 0
    %19 = vsyncpa [#allocation10], 0
    %20 = vsyncpa [#allocation13], 0
    %21 = vsyncpa [#allocation16], 0
    %22 = vsyncpa [#allocation5], 0
    %s23 = scalar_lea.sflag [#allocation5], 1
    %24 = vsyncpa %s23, 0
    loop: start=0, step=1, limit=4
    $region2: #{tpu_custom_call.1} parent=1 // loop_pre_header
      _
    $region3: #{tpu_custom_call.1} parent=1 // loop_header
      %s26 = sphi 0, %s30
      %p27 = scmp.ge.s32.totalorder %s26, 4
      %s36 = sphi 0, %s38
      %s39 = sphi 0, %s36
      %s40 = sphi 0, %s39
      %s56 = sphi 0, %s40
      %s60 = sphi 0, %s60
      %s62 = sphi 0, %s60
      %s63 = sphi 0, %s62
      %s77 = sphi 0, %s63
      %s81 = sphi 0, %s81
      %s83 = sphi 0, %s81
      %s84 = sphi 0, %s83
      %s98 = sphi 0, %s84
      %s102 = sphi 0, %s102
      %s104 = sphi 0, %s102
      %s105 = sphi 0, %s104
      %s119 = sphi 0, %s105
      %s123 = sphi 0, %s123
      %s125 = sphi 0, %s123
      %s126 = sphi 0, %s125
      %s140 = sphi 0, %s126
      %s144 = sphi 0, %s144
      %s146 = sphi 0, %s144
      %s147 = sphi 0, %s146
      %s161 = sphi 0, %s147
      %s165 = sphi 0, %s165
      %s167 = sphi 0, %s165
      %s168 = sphi 0, %s167
      %s182 = sphi 0, %s168
      %s186 = sphi 0, %s186
      %s188 = sphi 0, %s186
      %s189 = sphi 0, %s188
      %s203 = sphi 0, %s189
      %s207 = sphi 0, %s207
      %s209 = sphi 0, %s207
      %s210 = sphi 0, %s209
      %s224 = sphi 0, %s210
      %s230 = sphi 0, %s232
      %s233 = sphi 0, %s230
      %s234 = sphi 0, %s233
      %s250 = sphi 0, %s234
    $region4: #{tpu_custom_call.1} parent=1 // loop_header_branch
      %29 = sbr.rel (%p27) target = $region8
    $region5: #{tpu_custom_call.1} parent=1 // loop_body
      %s31 = ssub.s32 %s26, 1
      %s32 = ssub.s32 %s26, 2
      %s33 = sadd.s32 %s26, 1
      %s34 = ssub.s32 %s26, %s33
      %p35 = scmp.eq.s32.totalorder %s34, 0
      %s37 = sadd.s32 %s36, 1
      %s38 = scalar_select %p35, %s36, %s37
      %p41 = pneg %p35
      %p42 = scmp.eq.s32.totalorder %s26, 1
      %p43 = por %p41, %p42
      %p44 = scmp.ne.s32.totalorder %s36, %s39
      %p45 = scmp.eq.s32.totalorder %s26, 0
      %p46 = por %p44, %p45
      %p47 = scmp.ne.s32.totalorder %s36, %s39
      %p48 = scmp.eq.s32.totalorder %s31, 1
      %p49 = por %p47, %p48
      %p50 = scmp.ne.s32.totalorder %s39, %s40
      %p51 = scmp.eq.s32.totalorder %s31, 0
      %p52 = por %p50, %p51
      %p53 = scmp.ne.s32.totalorder %s39, %s40
      %p54 = scmp.eq.s32.totalorder %s32, 1
      %p55 = por %p53, %p54
      %p57 = scmp.ne.s32.totalorder %s40, %s56
      %p58 = scmp.eq.s32.totalorder %s32, 0
      %p59 = por %p57, %p58
      %s61 = sadd.s32 %s60, 1
      %p64 = scmp.eq.s32.totalorder %s26, 1
      %p65 = scmp.ne.s32.totalorder %s60, %s62
      %p66 = scmp.eq.s32.totalorder %s26, 0
      %p67 = por %p65, %p66
      %p68 = scmp.ne.s32.totalorder %s60, %s62
      %p69 = scmp.eq.s32.totalorder %s31, 1
      %p70 = por %p68, %p69
      %p71 = scmp.ne.s32.totalorder %s62, %s63
      %p72 = scmp.eq.s32.totalorder %s31, 0
      %p73 = por %p71, %p72
      %p74 = scmp.ne.s32.totalorder %s62, %s63
      %p75 = scmp.eq.s32.totalorder %s32, 1
      %p76 = por %p74, %p75
      %p78 = scmp.ne.s32.totalorder %s63, %s77
      %p79 = scmp.eq.s32.totalorder %s32, 0
      %p80 = por %p78, %p79
      %s82 = sadd.s32 %s81, 1
      %p85 = scmp.eq.s32.totalorder %s26, 1
      %p86 = scmp.ne.s32.totalorder %s81, %s83
      %p87 = scmp.eq.s32.totalorder %s26, 0
      %p88 = por %p86, %p87
      %p89 = scmp.ne.s32.totalorder %s81, %s83
      %p90 = scmp.eq.s32.totalorder %s31, 1
      %p91 = por %p89, %p90
      %p92 = scmp.ne.s32.totalorder %s83, %s84
      %p93 = scmp.eq.s32.totalorder %s31, 0
      %p94 = por %p92, %p93
      %p95 = scmp.ne.s32.totalorder %s83, %s84
      %p96 = scmp.eq.s32.totalorder %s32, 1
      %p97 = por %p95, %p96
      %p99 = scmp.ne.s32.totalorder %s84, %s98
      %p100 = scmp.eq.s32.totalorder %s32, 0
      %p101 = por %p99, %p100
      %s103 = sadd.s32 %s102, 1
      %p106 = scmp.eq.s32.totalorder %s26, 1
      %p107 = scmp.ne.s32.totalorder %s102, %s104
      %p108 = scmp.eq.s32.totalorder %s26, 0
      %p109 = por %p107, %p108
      %p110 = scmp.ne.s32.totalorder %s102, %s104
      %p111 = scmp.eq.s32.totalorder %s31, 1
      %p112 = por %p110, %p111
      %p113 = scmp.ne.s32.totalorder %s104, %s105
      %p114 = scmp.eq.s32.totalorder %s31, 0
      %p115 = por %p113, %p114
      %p116 = scmp.ne.s32.totalorder %s104, %s105
      %p117 = scmp.eq.s32.totalorder %s32, 1
      %p118 = por %p116, %p117
      %p120 = scmp.ne.s32.totalorder %s105, %s119
      %p121 = scmp.eq.s32.totalorder %s32, 0
      %p122 = por %p120, %p121
      %s124 = sadd.s32 %s123, 1
      %p127 = scmp.eq.s32.totalorder %s26, 1
      %p128 = scmp.ne.s32.totalorder %s123, %s125
      %p129 = scmp.eq.s32.totalorder %s26, 0
      %p130 = por %p128, %p129
      %p131 = scmp.ne.s32.totalorder %s123, %s125
      %p132 = scmp.eq.s32.totalorder %s31, 1
      %p133 = por %p131, %p132
      %p134 = scmp.ne.s32.totalorder %s125, %s126
      %p135 = scmp.eq.s32.totalorder %s31, 0
      %p136 = por %p134, %p135
      %p137 = scmp.ne.s32.totalorder %s125, %s126
      %p138 = scmp.eq.s32.totalorder %s32, 1
      %p139 = por %p137, %p138
      %p141 = scmp.ne.s32.totalorder %s126, %s140
      %p142 = scmp.eq.s32.totalorder %s32, 0
      %p143 = por %p141, %p142
      %s145 = sadd.s32 %s144, 1
      %p148 = scmp.eq.s32.totalorder %s26, 1
      %p149 = scmp.ne.s32.totalorder %s144, %s146
      %p150 = scmp.eq.s32.totalorder %s26, 0
      %p151 = por %p149, %p150
      %p152 = scmp.ne.s32.totalorder %s144, %s146
      %p153 = scmp.eq.s32.totalorder %s31, 1
      %p154 = por %p152, %p153
      %p155 = scmp.ne.s32.totalorder %s146, %s147
      %p156 = scmp.eq.s32.totalorder %s31, 0
      %p157 = por %p155, %p156
      %p158 = scmp.ne.s32.totalorder %s146, %s147
      %p159 = scmp.eq.s32.totalorder %s32, 1
      %p160 = por %p158, %p159
      %p162 = scmp.ne.s32.totalorder %s147, %s161
      %p163 = scmp.eq.s32.totalorder %s32, 0
      %p164 = por %p162, %p163
      %s166 = sadd.s32 %s165, 1
      %p169 = scmp.eq.s32.totalorder %s26, 1
      %p170 = scmp.ne.s32.totalorder %s165, %s167
      %p171 = scmp.eq.s32.totalorder %s26, 0
      %p172 = por %p170, %p171
      %p173 = scmp.ne.s32.totalorder %s165, %s167
      %p174 = scmp.eq.s32.totalorder %s31, 1
      %p175 = por %p173, %p174
      %p176 = scmp.ne.s32.totalorder %s167, %s168
      %p177 = scmp.eq.s32.totalorder %s31, 0
      %p178 = por %p176, %p177
      %p179 = scmp.ne.s32.totalorder %s167, %s168
      %p180 = scmp.eq.s32.totalorder %s32, 1
      %p181 = por %p179, %p180
      %p183 = scmp.ne.s32.totalorder %s168, %s182
      %p184 = scmp.eq.s32.totalorder %s32, 0
      %p185 = por %p183, %p184
      %s187 = sadd.s32 %s186, 1
      %p190 = scmp.eq.s32.totalorder %s26, 1
      %p191 = scmp.ne.s32.totalorder %s186, %s188
      %p192 = scmp.eq.s32.totalorder %s26, 0
      %p193 = por %p191, %p192
      %p194 = scmp.ne.s32.totalorder %s186, %s188
      %p195 = scmp.eq.s32.totalorder %s31, 1
      %p196 = por %p194, %p195
      %p197 = scmp.ne.s32.totalorder %s188, %s189
      %p198 = scmp.eq.s32.totalorder %s31, 0
      %p199 = por %p197, %p198
      %p200 = scmp.ne.s32.totalorder %s188, %s189
      %p201 = scmp.eq.s32.totalorder %s32, 1
      %p202 = por %p200, %p201
      %p204 = scmp.ne.s32.totalorder %s189, %s203
      %p205 = scmp.eq.s32.totalorder %s32, 0
      %p206 = por %p204, %p205
      %s208 = sadd.s32 %s207, 1
      %p211 = scmp.eq.s32.totalorder %s26, 1
      %p212 = scmp.ne.s32.totalorder %s207, %s209
      %p213 = scmp.eq.s32.totalorder %s26, 0
      %p214 = por %p212, %p213
      %p215 = scmp.ne.s32.totalorder %s207, %s209
      %p216 = scmp.eq.s32.totalorder %s31, 1
      %p217 = por %p215, %p216
      %p218 = scmp.ne.s32.totalorder %s209, %s210
      %p219 = scmp.eq.s32.totalorder %s31, 0
      %p220 = por %p218, %p219
      %p221 = scmp.ne.s32.totalorder %s209, %s210
      %p222 = scmp.eq.s32.totalorder %s32, 1
      %p223 = por %p221, %p222
      %p225 = scmp.ne.s32.totalorder %s210, %s224
      %p226 = scmp.eq.s32.totalorder %s32, 0
      %p227 = por %p225, %p226
      %s228 = ssub.s32 %s26, %s33
      %p229 = scmp.eq.s32.totalorder %s228, 0
      %s231 = sadd.s32 %s230, 1
      %s232 = scalar_select %p229, %s230, %s231
      %p235 = pneg %p229
      %p236 = scmp.eq.s32.totalorder %s26, 1
      %p237 = por %p235, %p236
      %p238 = scmp.ne.s32.totalorder %s230, %s233
      %p239 = scmp.eq.s32.totalorder %s26, 0
      %p240 = por %p238, %p239
      %p241 = scmp.ne.s32.totalorder %s230, %s233
      %p242 = scmp.eq.s32.totalorder %s31, 1
      %p243 = por %p241, %p242
      %p244 = scmp.ne.s32.totalorder %s233, %s234
      %p245 = scmp.eq.s32.totalorder %s31, 0
      %p246 = por %p244, %p245
      %p247 = scmp.ne.s32.totalorder %s233, %s234
      %p248 = scmp.eq.s32.totalorder %s32, 1
      %p249 = por %p247, %p248
      %p251 = scmp.ne.s32.totalorder %s234, %s250
      %p252 = scmp.eq.s32.totalorder %s32, 0
      %p253 = por %p251, %p252
      %p254 = scmp.le.s32.totalorder 1, %s26
      %p255 = scmp.lt.s32.totalorder %s26, 3
      %p256 = pnand %p254, %p255
      %p257 = pneg %p256
      // Predicated region
      $region9: #{tpu_custom_call.1} parent=5 // pred_check
        _
      $region10: #{tpu_custom_call.1} parent=5 // pred_check_branch
        %259 = sbr.rel (%p256) target = $region12
      $region11: #{tpu_custom_call.1} parent=5 // pred_region
        %s260 = ssub.s32 %s26, 1
        // Predicated region
        $region13: #{tpu_custom_call.1} parent=11 // pred_check
          %p261 = pneg %p73
        $region14: #{tpu_custom_call.1} parent=11 // pred_check_branch
          %263 = sbr.rel (%p261) target = $region16
        $region15: #{tpu_custom_call.1} parent=11 // pred_region
          %s265 = ssub.s32 512, 512
          %266 = vsyncadd [#allocation7], %s265
          %s267 = sshll.u32 [#allocation6], 4
          %s268 = int_to_ptr.vmem [resolvable:$true] %s267
          %273 = dma.hbm_to_vmem [thread:$0]  %s1, 512, %s268, [#allocation7], 128, 128, 8
        $region16: #{tpu_custom_call.1} parent=11 // pred_fallthru
          _
        // Predicated region
        $region17: #{tpu_custom_call.1} parent=11 // pred_check
          %p274 = pneg %p94
        $region18: #{tpu_custom_call.1} parent=11 // pred_check_branch
          %276 = sbr.rel (%p274) target = $region20
        $region19: #{tpu_custom_call.1} parent=11 // pred_region
          %s278 = ssub.s32 32, 32
          %279 = vsyncadd [#allocation7], %s278
          %s281 = sshll.u32 [#allocation8], 4
          %s282 = int_to_ptr.vmem [resolvable:$true] %s281
          %284 = dma.hbm_to_vmem [thread:$0]  %s2, 32, %s282, [#allocation7]
        $region20: #{tpu_custom_call.1} parent=11 // pred_fallthru
          _
        // Predicated region
        $region21: #{tpu_custom_call.1} parent=11 // pred_check
          %p285 = pneg %p115
        $region22: #{tpu_custom_call.1} parent=11 // pred_check_branch
          %287 = sbr.rel (%p285) target = $region24
        $region23: #{tpu_custom_call.1} parent=11 // pred_region
          %s289 = ssub.s32 8192, 8192
          %290 = vsyncadd [#allocation10], %s289
          %s291 = sshll.u32 [#allocation9], 4
          %s292 = int_to_ptr.vmem [resolvable:$true] %s291
          %297 = dma.hbm_to_vmem [thread:$0]  %s3, 8192, %s292, [#allocation10], 128, 128, 8
        $region24: #{tpu_custom_call.1} parent=11 // pred_fallthru
          _
        // Predicated region
        $region25: #{tpu_custom_call.1} parent=11 // pred_check
          %p298 = pneg %p136
        $region26: #{tpu_custom_call.1} parent=11 // pred_check_branch
          %300 = sbr.rel (%p298) target = $region28
        $region27: #{tpu_custom_call.1} parent=11 // pred_region
          %s302 = ssub.s32 64, 64
          %303 = vsyncadd [#allocation10], %s302
          %s304 = sshll.u32 [#allocation11], 4
          %s305 = int_to_ptr.vmem [resolvable:$true] %s304
          %310 = dma.hbm_to_vmem [thread:$0]  %s4, 64, %s305, [#allocation10], 32, 32, 2
        $region28: #{tpu_custom_call.1} parent=11 // pred_fallthru
          _
        // Predicated region
        $region29: #{tpu_custom_call.1} parent=11 // pred_check
          %p311 = pneg %p157
        $region30: #{tpu_custom_call.1} parent=11 // pred_check_branch
          %313 = sbr.rel (%p311) target = $region32
        $region31: #{tpu_custom_call.1} parent=11 // pred_region
          %s315 = ssub.s32 64, 64
          %316 = vsyncadd [#allocation13], %s315
          %s317 = sshll.u32 [#allocation12], 4
          %s318 = int_to_ptr.vmem [resolvable:$true] %s317
          %323 = dma.hbm_to_vmem [thread:$0]  %s5, 64, %s318, [#allocation13], 32, 32, 2
        $region32: #{tpu_custom_call.1} parent=11 // pred_fallthru
          _
        // Predicated region
        $region33: #{tpu_custom_call.1} parent=11 // pred_check
          %p324 = pneg %p178
        $region34: #{tpu_custom_call.1} parent=11 // pred_check_branch
          %326 = sbr.rel (%p324) target = $region36
        $region35: #{tpu_custom_call.1} parent=11 // pred_region
          %s328 = ssub.s32 64, 64
          %329 = vsyncadd [#allocation13], %s328
          %s330 = sshll.u32 [#allocation14], 4
          %s331 = int_to_ptr.vmem [resolvable:$true] %s330
          %336 = dma.hbm_to_vmem [thread:$0]  %s6, 64, %s331, [#allocation13], 32, 32, 2
        $region36: #{tpu_custom_call.1} parent=11 // pred_fallthru
          _
        // Predicated region
        $region37: #{tpu_custom_call.1} parent=11 // pred_check
          %p337 = pneg %p199
        $region38: #{tpu_custom_call.1} parent=11 // pred_check_branch
          %339 = sbr.rel (%p337) target = $region40
        $region39: #{tpu_custom_call.1} parent=11 // pred_region
          %s341 = ssub.s32 128, 128
          %342 = vsyncadd [#allocation16], %s341
          %s344 = sshll.u32 [#allocation15], 4
          %s345 = int_to_ptr.vmem [resolvable:$true] %s344
          %347 = dma.hbm_to_vmem [thread:$0]  %s7, 128, %s345, [#allocation16]
        $region40: #{tpu_custom_call.1} parent=11 // pred_fallthru
          _
        // Predicated region
        $region41: #{tpu_custom_call.1} parent=11 // pred_check
          %p348 = pneg %p220
        $region42: #{tpu_custom_call.1} parent=11 // pred_check_branch
          %350 = sbr.rel (%p348) target = $region44
        $region43: #{tpu_custom_call.1} parent=11 // pred_region
          _
        $region44: #{tpu_custom_call.1} parent=11 // pred_fallthru
          _
      $region12: #{tpu_custom_call.1} parent=5 // pred_fallthru
        _
      %p351 = scmp.lt.s32.totalorder %s26, 2
      // Predicated region
      $region45: #{tpu_custom_call.1} parent=5 // pred_check
        %p352 = pneg %p351
      $region46: #{tpu_custom_call.1} parent=5 // pred_check_branch
        %354 = sbr.rel (%p352) target = $region48
      $region47: #{tpu_custom_call.1} parent=5 // pred_region
        // Predicated region
        $region49: #{tpu_custom_call.1} parent=47 // pred_check
          %p355 = pneg %p46
        $region50: #{tpu_custom_call.1} parent=47 // pred_check_branch
          %357 = sbr.rel (%p355) target = $region52
        $region51: #{tpu_custom_call.1} parent=47 // pred_region
          %s358 = sand.u32 %s36, 1
          %s359 = scalar_lea.sflag [#allocation4], %s358
          %s360 = sand.u32 %s36, 1
          %s361 = smul.addr %s360, 64
          %s362 = scalar_lea.vmem [#allocation3], %s361
          %s363 = smul.u32 16, %s26
          %s365 = ssub.s32 1024, 1024
          %366 = vsyncadd %s359, %s365
          %s367 = smul.addr %s363, 64
          %s368 = scalar_lea.hbm %s0, %s367
          %s369 = sshll.u32 %s362, 4
          %s370 = int_to_ptr.vmem [resolvable:$true] %s369
          %375 = dma.hbm_to_vmem [thread:$0]  %s368, 1024, %s370, %s359, 64, 64, 4
        $region52: #{tpu_custom_call.1} parent=47 // pred_fallthru
          _
      $region48: #{tpu_custom_call.1} parent=5 // pred_fallthru
        _
      %p376 = scmp.le.s32.totalorder 1, %s26
      %p377 = scmp.lt.s32.totalorder %s26, 3
      %p378 = pnand %p376, %p377
      %p379 = pneg %p378
      // Predicated region
      $region53: #{tpu_custom_call.1} parent=5 // pred_check
        _
      $region54: #{tpu_custom_call.1} parent=5 // pred_check_branch
        %381 = sbr.rel (%p378) target = $region56
      $region55: #{tpu_custom_call.1} parent=5 // pred_region
        %s382 = ssub.s32 %s26, 1
        %s383 = sand.u32 %s39, 1
        %s384 = scalar_lea.sflag [#allocation4], %s383
        %s385 = sand.u32 %s39, 1
        %s386 = smul.addr %s385, 64
        %s387 = scalar_lea.vmem [#allocation3], %s386
        // Predicated region
        $region57: #{tpu_custom_call.1} parent=55 // pred_check
          %p388 = pneg %p52
        $region58: #{tpu_custom_call.1} parent=55 // pred_check_branch
          %390 = sbr.rel (%p388) target = $region60
        $region59: #{tpu_custom_call.1} parent=55 // pred_region
          %391 = dma.done %s384, 1024
        $region60: #{tpu_custom_call.1} parent=55 // pred_fallthru
          _
        // Predicated region
        $region61: #{tpu_custom_call.1} parent=55 // pred_check
          %p392 = pneg %p73
        $region62: #{tpu_custom_call.1} parent=55 // pred_check_branch
          %394 = sbr.rel (%p392) target = $region64
        $region63: #{tpu_custom_call.1} parent=55 // pred_region
          %395 = dma.done [#allocation7], 512
        $region64: #{tpu_custom_call.1} parent=55 // pred_fallthru
          _
        // Predicated region
        $region65: #{tpu_custom_call.1} parent=55 // pred_check
          %p396 = pneg %p94
        $region66: #{tpu_custom_call.1} parent=55 // pred_check_branch
          %398 = sbr.rel (%p396) target = $region68
        $region67: #{tpu_custom_call.1} parent=55 // pred_region
          %399 = dma.done [#allocation7], 32
        $region68: #{tpu_custom_call.1} parent=55 // pred_fallthru
          _
        // Predicated region
        $region69: #{tpu_custom_call.1} parent=55 // pred_check
          %p400 = pneg %p115
        $region70: #{tpu_custom_call.1} parent=55 // pred_check_branch
          %402 = sbr.rel (%p400) target = $region72
        $region71: #{tpu_custom_call.1} parent=55 // pred_region
          %403 = dma.done [#allocation10], 8192
        $region72: #{tpu_custom_call.1} parent=55 // pred_fallthru
          _
        // Predicated region
        $region73: #{tpu_custom_call.1} parent=55 // pred_check
          %p404 = pneg %p136
        $region74: #{tpu_custom_call.1} parent=55 // pred_check_branch
          %406 = sbr.rel (%p404) target = $region76
        $region75: #{tpu_custom_call.1} parent=55 // pred_region
          %407 = dma.done [#allocation10], 64
        $region76: #{tpu_custom_call.1} parent=55 // pred_fallthru
          _
        // Predicated region
        $region77: #{tpu_custom_call.1} parent=55 // pred_check
          %p408 = pneg %p157
        $region78: #{tpu_custom_call.1} parent=55 // pred_check_branch
          %410 = sbr.rel (%p408) target = $region80
        $region79: #{tpu_custom_call.1} parent=55 // pred_region
          %411 = dma.done [#allocation13], 64
        $region80: #{tpu_custom_call.1} parent=55 // pred_fallthru
          _
        // Predicated region
        $region81: #{tpu_custom_call.1} parent=55 // pred_check
          %p412 = pneg %p178
        $region82: #{tpu_custom_call.1} parent=55 // pred_check_branch
          %414 = sbr.rel (%p412) target = $region84
        $region83: #{tpu_custom_call.1} parent=55 // pred_region
          %415 = dma.done [#allocation13], 64
        $region84: #{tpu_custom_call.1} parent=55 // pred_fallthru
          _
        // Predicated region
        $region85: #{tpu_custom_call.1} parent=55 // pred_check
          %p416 = pneg %p199
        $region86: #{tpu_custom_call.1} parent=55 // pred_check_branch
          %418 = sbr.rel (%p416) target = $region88
        $region87: #{tpu_custom_call.1} parent=55 // pred_region
          %419 = dma.done [#allocation16], 128
        $region88: #{tpu_custom_call.1} parent=55 // pred_fallthru
          _
        %s420 = sand.u32 %s39, 1
        %s421 = scalar_lea.sflag [#allocation4], %s420
        %s422 = sand.u32 %s39, 1
        %s423 = smul.addr %s422, 64
        %s424 = scalar_lea.vmem [#allocation3], %s423
        %p425 = pneg %p52
        %p426 = pneg %p49
        %p427 = pneg %p73
        %p428 = pneg %p70
        %p429 = pneg %p94
        %p430 = pneg %p91
        %p431 = pneg %p115
        %p432 = pneg %p112
        %p433 = pneg %p136
        %p434 = pneg %p133
        %p435 = pneg %p157
        %p436 = pneg %p154
        %p437 = pneg %p178
        %p438 = pneg %p175
        %p439 = pneg %p199
        %p440 = pneg %p196
        %p441 = pneg %p220
        %p442 = pneg %p217
        %p443 = pneg %p246
        %p444 = pneg %p243
        %s445 = sand.u32 %s233, 1
        %s446 = scalar_lea.sflag [#allocation5], %s445
        %s447 = sand.u32 %s233, 1
        %s448 = scalar_lea.vmem [#allocation17], %s447
        %s449 = smul.u32 16, %s31
        %v451 = vld [vmem:[%s387] sm:$0xf]
        %v452 = vld [vmem:[%s387 + $0x4] sm:$0xf]
        %v453 = vld [vmem:[%s387 + $0x8] sm:$0xf]
        %v454 = vld [vmem:[%s387 + $0xc] sm:$0xf]
        %v455 = vld [vmem:[%s387 + $0x10] sm:$0xf]
        %v456 = vld [vmem:[%s387 + $0x14] sm:$0xf]
        %v457 = vld [vmem:[%s387 + $0x18] sm:$0xf]
        %v458 = vld [vmem:[%s387 + $0x1c] sm:$0xf]
        %v459 = vld [vmem:[%s387 + $0x20] sm:$0xf]
        %v460 = vld [vmem:[%s387 + $0x24] sm:$0xf]
        %v461 = vld [vmem:[%s387 + $0x28] sm:$0xf]
        %v462 = vld [vmem:[%s387 + $0x2c] sm:$0xf]
        %v463 = vld [vmem:[%s387 + $0x30] sm:$0xf]
        %v464 = vld [vmem:[%s387 + $0x34] sm:$0xf]
        %v465 = vld [vmem:[%s387 + $0x38] sm:$0xf]
        %v466 = vld [vmem:[%s387 + $0x3c] sm:$0xf]
        %v467 = vld [vmem:[#allocation6] sm:$0xff]
        %v468 = vld [vmem:[#allocation6 + $0x8] sm:$0xff]
        %v469 = vld [vmem:[#allocation6 + $0x10] sm:$0xff]
        %v470 = vld [vmem:[#allocation6 + $0x18] sm:$0xff]
        %v471 = vld [vmem:[#allocation8] sm:$0x3]
        %v473 = vlaneseq
        %v474 = vshrl.u32 %v473, 7
        %v475 = vsub.s32 0, %v474
        %v476 = vrot.slane %v471, %v475
        %v477 = vlaneseq
        %v478 = vshrl.u32 %v477, 7
        %v479 = vsub.s32 1, %v478
        %v480 = vrot.slane %v471, %v479
        %v499 = vunpack.c.l.b16 %v451
        %v500 = vunpack.c.l.b16 %v452
        %v501 = vunpack.c.l.b16 %v453
        %v502 = vunpack.c.l.b16 %v454
        %v503 = vunpack.c.l.b16 %v455
        %v504 = vunpack.c.l.b16 %v456
        %v505 = vunpack.c.l.b16 %v457
        %v506 = vunpack.c.l.b16 %v458
        %v507 = vunpack.c.l.b16 %v459
        %v508 = vunpack.c.l.b16 %v460
        %v509 = vunpack.c.l.b16 %v461
        %v510 = vunpack.c.l.b16 %v462
        %v511 = vunpack.c.l.b16 %v463
        %v512 = vunpack.c.l.b16 %v464
        %v513 = vunpack.c.l.b16 %v465
        %v514 = vunpack.c.l.b16 %v466
        %v515 = vpack.c.b16 %v500, %v499
        %v516 = vpack.c.b16 %v502, %v501
        %v517 = vpack.c.b16 %v504, %v503
        %v518 = vpack.c.b16 %v506, %v505
        %v519 = vpack.c.b16 %v508, %v507
        %v520 = vpack.c.b16 %v510, %v509
        %v521 = vpack.c.b16 %v512, %v511
        %v522 = vpack.c.b16 %v514, %v513
        %v527 = vunpack.c.l.b16 %v467
        %v528 = vunpack.c.h.b16 %v467
        %v529 = vunpack.c.l.b16 %v468
        %v530 = vunpack.c.h.b16 %v468
        %v531 = vunpack.c.l.b16 %v469
        %v532 = vunpack.c.h.b16 %v469
        %v533 = vunpack.c.l.b16 %v470
        %v534 = vunpack.c.h.b16 %v470
        %v535 = vpack.c.b16 %v529, %v527
        %v536 = vpack.c.b16 %v530, %v528
        %v537 = vpack.c.b16 %v533, %v531
        %v538 = vpack.c.b16 %v534, %v532
        %vm543 = vcmask 261120
        %v545 = vsel %vm543, %v515, 0
        %v548 = vsel %vm543, %v516, 0
        %v551 = vsel %vm543, %v517, 0
        %v554 = vsel %vm543, %v518, 0
        %v557 = vsel %vm543, %v519, 0
        %v560 = vsel %vm543, %v520, 0
        %v563 = vsel %vm543, %v521, 0
        %v566 = vsel %vm543, %v522, 0
        %568 = vmatprep.subr.bf16.mxu0 %v536
        %569 = vmatpush1.bf16.msra.mxu0 %v535
        %570 = vmatprep.subr.bf16.mxu0 %v538
        %571 = vmatpush1.bf16.msra.mxu0 %v537
        %572 = vmatprep.subr.bf16.mxu0 0
        %573 = vmatpush1.bf16.msra.mxu0 0
        %574 = vmatprep.subr.bf16.mxu0 0
        %575 = vmatpush1.bf16.msra.mxu0 0
        %576 = vmatprep.subr.bf16.mxu0 0
        %577 = vmatpush1.bf16.msra.mxu0 0
        %578 = vmatprep.subr.bf16.mxu0 0
        %579 = vmatpush1.bf16.msra.mxu0 0
        %580 = vmatprep.subr.bf16.mxu0 0
        %581 = vmatpush1.bf16.msra.mxu0 0
        %582 = vmatprep.subr.bf16.mxu0 0
        %583 = vmatpush1.bf16.msra.mxu0 0
        %584 = vmatprep.subr.bf16.mxu0 0
        %585 = vmatpush1.bf16.msra.mxu0 0
        %586 = vmatprep.subr.bf16.mxu0 0
        %587 = vmatpush1.bf16.msra.mxu0 0
        %588 = vmatprep.subr.bf16.mxu0 0
        %589 = vmatpush1.bf16.msra.mxu0 0
        %590 = vmatprep.subr.bf16.mxu0 0
        %591 = vmatpush1.bf16.msra.mxu0 0
        %592 = vmatprep.subr.bf16.mxu0 0
        %593 = vmatpush1.bf16.msra.mxu0 0
        %594 = vmatprep.subr.bf16.mxu0 0
        %595 = vmatpush1.bf16.msra.mxu0 0
        %596 = vmatprep.subr.bf16.mxu0 0
        %597 = vmatpush1.bf16.msra.mxu0 0
        %598 = vmatprep.subr.bf16.mxu0 0
        %599 = vmatpush1.bf16.msra.mxu0 0
        %600 = vmatprep.mubr.bf16.mxu0 0
        %601 = vmatmul.mubr.bf16.gmra.mrb[0].mxu0 %v545
        %v602 = vpop.f32.mrb[0].mxu0
        %v603 = vadd.f32 %v476, %v602
        %v604 = vpop.f32.mrb[0].mxu0
        %v605 = vadd.f32 %v480, %v604
        %v606 = vpop.f32.mrb[0].mxu0
        %v607 = vadd.f32 %v476, %v606
        %v608 = vpop.f32.mrb[0].mxu0
        %v609 = vadd.f32 %v480, %v608
        %610 = vmatprep.mubr.bf16.mxu0 0
        %611 = vmatmul.mubr.bf16.gmra.mrb[0].mxu0 %v548
        %v612 = vpop.f32.mrb[0].mxu0
        %v613 = vadd.f32 %v476, %v612
        %v614 = vpop.f32.mrb[0].mxu0
        %v615 = vadd.f32 %v480, %v614
        %v616 = vpop.f32.mrb[0].mxu0
        %v617 = vadd.f32 %v476, %v616
        %v618 = vpop.f32.mrb[0].mxu0
        %v619 = vadd.f32 %v480, %v618
        %620 = vmatprep.mubr.bf16.mxu0 0
        %621 = vmatmul.mubr.bf16.gmra.mrb[0].mxu0 %v551
        %v622 = vpop.f32.mrb[0].mxu0
        %v623 = vadd.f32 %v476, %v622
        %v624 = vpop.f32.mrb[0].mxu0
        %v625 = vadd.f32 %v480, %v624
        %v626 = vpop.f32.mrb[0].mxu0
        %v627 = vadd.f32 %v476, %v626
        %v628 = vpop.f32.mrb[0].mxu0
        %v629 = vadd.f32 %v480, %v628
        %630 = vmatprep.mubr.bf16.mxu0 0
        %631 = vmatmul.mubr.bf16.gmra.mrb[0].mxu0 %v554
        %v632 = vpop.f32.mrb[0].mxu0
        %v633 = vadd.f32 %v476, %v632
        %v634 = vpop.f32.mrb[0].mxu0
        %v635 = vadd.f32 %v480, %v634
        %v636 = vpop.f32.mrb[0].mxu0
        %v637 = vadd.f32 %v476, %v636
        %v638 = vpop.f32.mrb[0].mxu0
        %v639 = vadd.f32 %v480, %v638
        %640 = vmatprep.mubr.bf16.mxu0 0
        %641 = vmatmul.mubr.bf16.gmra.mrb[0].mxu0 %v557
        %v642 = vpop.f32.mrb[0].mxu0
        %v643 = vadd.f32 %v476, %v642
        %v644 = vpop.f32.mrb[0].mxu0
        %v645 = vadd.f32 %v480, %v644
        %v646 = vpop.f32.mrb[0].mxu0
        %v647 = vadd.f32 %v476, %v646
        %v648 = vpop.f32.mrb[0].mxu0
        %v649 = vadd.f32 %v480, %v648
        %650 = vmatprep.mubr.bf16.mxu0 0
        %651 = vmatmul.mubr.bf16.gmra.mrb[0].mxu0 %v560
        %v652 = vpop.f32.mrb[0].mxu0
        %v653 = vadd.f32 %v476, %v652
        %v654 = vpop.f32.mrb[0].mxu0
        %v655 = vadd.f32 %v480, %v654
        %v656 = vpop.f32.mrb[0].mxu0
        %v657 = vadd.f32 %v476, %v656
        %v658 = vpop.f32.mrb[0].mxu0
        %v659 = vadd.f32 %v480, %v658
        %660 = vmatprep.mubr.bf16.mxu0 0
        %661 = vmatmul.mubr.bf16.gmra.mrb[0].mxu0 %v563
        %v662 = vpop.f32.mrb[0].mxu0
        %v663 = vadd.f32 %v476, %v662
        %v664 = vpop.f32.mrb[0].mxu0
        %v665 = vadd.f32 %v480, %v664
        %v666 = vpop.f32.mrb[0].mxu0
        %v667 = vadd.f32 %v476, %v666
        %v668 = vpop.f32.mrb[0].mxu0
        %v669 = vadd.f32 %v480, %v668
        %670 = vmatprep.mubr.bf16.mxu0 0
        %671 = vmatmul.mubr.bf16.gmra.mrb[0].mxu0 %v566
        %v672 = vpop.f32.mrb[0].mxu0
        %v673 = vadd.f32 %v476, %v672
        %v674 = vpop.f32.mrb[0].mxu0
        %v675 = vadd.f32 %v480, %v674
        %v676 = vpop.f32.mrb[0].mxu0
        %v677 = vadd.f32 %v476, %v676
        %v678 = vpop.f32.mrb[0].mxu0
        %v679 = vadd.f32 %v480, %v678
        %680 = vdwg.mxu0
        %v681 = vmax.f32 %v603, 0.0
        %v682 = vmax.f32 %v605, 0.0
        %v683 = vmax.f32 %v607, 0.0
        %v684 = vmax.f32 %v609, 0.0
        %v685 = vmax.f32 %v613, 0.0
        %v686 = vmax.f32 %v615, 0.0
        %v687 = vmax.f32 %v617, 0.0
        %v688 = vmax.f32 %v619, 0.0
        %v689 = vmax.f32 %v623, 0.0
        %v690 = vmax.f32 %v625, 0.0
        %v691 = vmax.f32 %v627, 0.0
        %v692 = vmax.f32 %v629, 0.0
        %v693 = vmax.f32 %v633, 0.0
        %v694 = vmax.f32 %v635, 0.0
        %v695 = vmax.f32 %v637, 0.0
        %v696 = vmax.f32 %v639, 0.0
        %v697 = vmax.f32 %v643, 0.0
        %v698 = vmax.f32 %v645, 0.0
        %v699 = vmax.f32 %v647, 0.0
        %v700 = vmax.f32 %v649, 0.0
        %v701 = vmax.f32 %v653, 0.0
        %v702 = vmax.f32 %v655, 0.0
        %v703 = vmax.f32 %v657, 0.0
        %v704 = vmax.f32 %v659, 0.0
        %v705 = vmax.f32 %v663, 0.0
        %v706 = vmax.f32 %v665, 0.0
        %v707 = vmax.f32 %v667, 0.0
        %v708 = vmax.f32 %v669, 0.0
        %v709 = vmax.f32 %v673, 0.0
        %v710 = vmax.f32 %v675, 0.0
        %v711 = vmax.f32 %v677, 0.0
        %v712 = vmax.f32 %v679, 0.0
        %v713 = vpack.c.bf16 %v683, %v681
        %v714 = vpack.c.bf16 %v684, %v682
        %v715 = vpack.c.bf16 %v687, %v685
        %v716 = vpack.c.bf16 %v688, %v686
        %v717 = vpack.c.bf16 %v691, %v689
        %v718 = vpack.c.bf16 %v692, %v690
        %v719 = vpack.c.bf16 %v695, %v693
        %v720 = vpack.c.bf16 %v696, %v694
        %v721 = vpack.c.bf16 %v699, %v697
        %v722 = vpack.c.bf16 %v700, %v698
        %v723 = vpack.c.bf16 %v703, %v701
        %v724 = vpack.c.bf16 %v704, %v702
        %v725 = vpack.c.bf16 %v707, %v705
        %v726 = vpack.c.bf16 %v708, %v706
        %v727 = vpack.c.bf16 %v711, %v709
        %v728 = vpack.c.bf16 %v712, %v710
        %v729 = vld [vmem:[#allocation9] sm:$0xff]
        %v730 = vld [vmem:[#allocation9 + $0x8] sm:$0xff]
        %v731 = vld [vmem:[#allocation9 + $0x10] sm:$0xff]
        %v732 = vld [vmem:[#allocation9 + $0x18] sm:$0xff]
        %v733 = vld [vmem:[#allocation9 + $0x20] sm:$0xff]
        %v734 = vld [vmem:[#allocation9 + $0x28] sm:$0xff]
        %v735 = vld [vmem:[#allocation9 + $0x30] sm:$0xff]
        %v736 = vld [vmem:[#allocation9 + $0x38] sm:$0xff]
        %v737 = vld [vmem:[#allocation9 + $0x40] sm:$0xff]
        %v738 = vld [vmem:[#allocation9 + $0x48] sm:$0xff]
        %v739 = vld [vmem:[#allocation9 + $0x50] sm:$0xff]
        %v740 = vld [vmem:[#allocation9 + $0x58] sm:$0xff]
        %v741 = vld [vmem:[#allocation9 + $0x60] sm:$0xff]
        %v742 = vld [vmem:[#allocation9 + $0x68] sm:$0xff]
        %v743 = vld [vmem:[#allocation9 + $0x70] sm:$0xff]
        %v744 = vld [vmem:[#allocation9 + $0x78] sm:$0xff]
        %v745 = vld [vmem:[#allocation9 + $0x80] sm:$0xff]
        %v746 = vld [vmem:[#allocation9 + $0x88] sm:$0xff]
        %v747 = vld [vmem:[#allocation9 + $0x90] sm:$0xff]
        %v748 = vld [vmem:[#allocation9 + $0x98] sm:$0xff]
        %v749 = vld [vmem:[#allocation9 + $0xa0] sm:$0xff]
        %v750 = vld [vmem:[#allocation9 + $0xa8] sm:$0xff]
        %v751 = vld [vmem:[#allocation9 + $0xb0] sm:$0xff]
        %v752 = vld [vmem:[#allocation9 + $0xb8] sm:$0xff]
        %v753 = vld [vmem:[#allocation9 + $0xc0] sm:$0xff]
        %v754 = vld [vmem:[#allocation9 + $0xc8] sm:$0xff]
        %v755 = vld [vmem:[#allocation9 + $0xd0] sm:$0xff]
        %v756 = vld [vmem:[#allocation9 + $0xd8] sm:$0xff]
        %v757 = vld [vmem:[#allocation9 + $0xe0] sm:$0xff]
        %v758 = vld [vmem:[#allocation9 + $0xe8] sm:$0xff]
        %v759 = vld [vmem:[#allocation9 + $0xf0] sm:$0xff]
        %v760 = vld [vmem:[#allocation9 + $0xf8] sm:$0xff]
        %v761 = vld [vmem:[#allocation11] sm:$0x3]
        %v763 = vlaneseq
        %v764 = vshrl.u32 %v763, 7
        %v765 = vsub.s32 0, %v764
        %v766 = vrot.slane %v761, %v765
        %v767 = vlaneseq
        %v768 = vshrl.u32 %v767, 7
        %v769 = vsub.s32 1, %v768
        %v770 = vrot.slane %v761, %v769
        %v805 = vunpack.c.l.b16 %v729
        %v806 = vunpack.c.h.b16 %v729
        %v807 = vunpack.c.l.b16 %v730
        %v808 = vunpack.c.h.b16 %v730
        %v809 = vunpack.c.l.b16 %v731
        %v810 = vunpack.c.h.b16 %v731
        %v811 = vunpack.c.l.b16 %v732
        %v812 = vunpack.c.h.b16 %v732
        %v813 = vunpack.c.l.b16 %v733
        %v814 = vunpack.c.h.b16 %v733
        %v815 = vunpack.c.l.b16 %v734
        %v816 = vunpack.c.h.b16 %v734
        %v817 = vunpack.c.l.b16 %v735
        %v818 = vunpack.c.h.b16 %v735
        %v819 = vunpack.c.l.b16 %v736
        %v820 = vunpack.c.h.b16 %v736
        %v821 = vunpack.c.l.b16 %v737
        %v822 = vunpack.c.h.b16 %v737
        %v823 = vunpack.c.l.b16 %v738
        %v824 = vunpack.c.h.b16 %v738
        %v825 = vunpack.c.l.b16 %v739
        %v826 = vunpack.c.h.b16 %v739
        %v827 = vunpack.c.l.b16 %v740
        %v828 = vunpack.c.h.b16 %v740
        %v829 = vunpack.c.l.b16 %v741
        %v830 = vunpack.c.h.b16 %v741
        %v831 = vunpack.c.l.b16 %v742
        %v832 = vunpack.c.h.b16 %v742
        %v833 = vunpack.c.l.b16 %v743
        %v834 = vunpack.c.h.b16 %v743
        %v835 = vunpack.c.l.b16 %v744
        %v836 = vunpack.c.h.b16 %v744
        %v837 = vunpack.c.l.b16 %v745
        %v838 = vunpack.c.h.b16 %v745
        %v839 = vunpack.c.l.b16 %v746
        %v840 = vunpack.c.h.b16 %v746
        %v841 = vunpack.c.l.b16 %v747
        %v842 = vunpack.c.h.b16 %v747
        %v843 = vunpack.c.l.b16 %v748
        %v844 = vunpack.c.h.b16 %v748
        %v845 = vunpack.c.l.b16 %v749
        %v846 = vunpack.c.h.b16 %v749
        %v847 = vunpack.c.l.b16 %v750
        %v848 = vunpack.c.h.b16 %v750
        %v849 = vunpack.c.l.b16 %v751
        %v850 = vunpack.c.h.b16 %v751
        %v851 = vunpack.c.l.b16 %v752
        %v852 = vunpack.c.h.b16 %v752
        %v853 = vunpack.c.l.b16 %v753
        %v854 = vunpack.c.h.b16 %v753
        %v855 = vunpack.c.l.b16 %v754
        %v856 = vunpack.c.h.b16 %v754
        %v857 = vunpack.c.l.b16 %v755
        %v858 = vunpack.c.h.b16 %v755
        %v859 = vunpack.c.l.b16 %v756
        %v860 = vunpack.c.h.b16 %v756
        %v861 = vunpack.c.l.b16 %v757
        %v862 = vunpack.c.h.b16 %v757
        %v863 = vunpack.c.l.b16 %v758
        %v864 = vunpack.c.h.b16 %v758
        %v865 = vunpack.c.l.b16 %v759
        %v866 = vunpack.c.h.b16 %v759
        %v867 = vunpack.c.l.b16 %v760
        %v868 = vunpack.c.h.b16 %v760
        %v869 = vpack.c.b16 %v807, %v805
        %v870 = vpack.c.b16 %v808, %v806
        %v871 = vpack.c.b16 %v811, %v809
        %v872 = vpack.c.b16 %v812, %v810
        %v873 = vpack.c.b16 %v815, %v813
        %v874 = vpack.c.b16 %v816, %v814
        %v875 = vpack.c.b16 %v819, %v817
        %v876 = vpack.c.b16 %v820, %v818
        %v877 = vpack.c.b16 %v823, %v821
        %v878 = vpack.c.b16 %v824, %v822
        %v879 = vpack.c.b16 %v827, %v825
        %v880 = vpack.c.b16 %v828, %v826
        %v881 = vpack.c.b16 %v831, %v829
        %v882 = vpack.c.b16 %v832, %v830
        %v883 = vpack.c.b16 %v835, %v833
        %v884 = vpack.c.b16 %v836, %v834
        %v885 = vpack.c.b16 %v839, %v837
        %v886 = vpack.c.b16 %v840, %v838
        %v887 = vpack.c.b16 %v843, %v841
        %v888 = vpack.c.b16 %v844, %v842
        %v889 = vpack.c.b16 %v847, %v845
        %v890 = vpack.c.b16 %v848, %v846
        %v891 = vpack.c.b16 %v851, %v849
        %v892 = vpack.c.b16 %v852, %v850
        %v893 = vpack.c.b16 %v855, %v853
        %v894 = vpack.c.b16 %v856, %v854
        %v895 = vpack.c.b16 %v859, %v857
        %v896 = vpack.c.b16 %v860, %v858
        %v897 = vpack.c.b16 %v863, %v861
        %v898 = vpack.c.b16 %v864, %v862
        %v899 = vpack.c.b16 %v867, %v865
        %v900 = vpack.c.b16 %v868, %v866
        %933 = vmatprep.subr.bf16.mxu0 %v870
        %934 = vmatpush1.bf16.msra.mxu0 %v869
        %935 = vmatprep.subr.bf16.mxu0 %v872
        %936 = vmatpush1.bf16.msra.mxu0 %v871
        %937 = vmatprep.subr.bf16.mxu0 %v874
        %938 = vmatpush1.bf16.msra.mxu0 %v873
        %939 = vmatprep.subr.bf16.mxu0 %v876
        %940 = vmatpush1.bf16.msra.mxu0 %v875
        %941 = vmatprep.subr.bf16.mxu0 %v878
        %942 = vmatpush1.bf16.msra.mxu0 %v877
        %943 = vmatprep.subr.bf16.mxu0 %v880
        %944 = vmatpush1.bf16.msra.mxu0 %v879
        %945 = vmatprep.subr.bf16.mxu0 %v882
        %946 = vmatpush1.bf16.msra.mxu0 %v881
        %947 = vmatprep.subr.bf16.mxu0 %v884
        %948 = vmatpush1.bf16.msra.mxu0 %v883
        %949 = vmatprep.subr.bf16.mxu0 %v886
        %950 = vmatpush1.bf16.msra.mxu0 %v885
        %951 = vmatprep.subr.bf16.mxu0 %v888
        %952 = vmatpush1.bf16.msra.mxu0 %v887
        %953 = vmatprep.subr.bf16.mxu0 %v890
        %954 = vmatpush1.bf16.msra.mxu0 %v889
        %955 = vmatprep.subr.bf16.mxu0 %v892
        %956 = vmatpush1.bf16.msra.mxu0 %v891
        %957 = vmatprep.subr.bf16.mxu0 %v894
        %958 = vmatpush1.bf16.msra.mxu0 %v893
        %959 = vmatprep.subr.bf16.mxu0 %v896
        %960 = vmatpush1.bf16.msra.mxu0 %v895
        %961 = vmatprep.subr.bf16.mxu0 %v898
        %962 = vmatpush1.bf16.msra.mxu0 %v897
        %963 = vmatprep.subr.bf16.mxu0 %v900
        %964 = vmatpush1.bf16.msra.mxu0 %v899
        %965 = vmatprep.mubr.bf16.mxu0 %v714
        %966 = vmatmul.mubr.bf16.gmra.mrb[0].mxu0 %v713
        %v967 = vpop.f32.mrb[0].mxu0
        %v968 = vadd.f32 %v766, %v967
        %v969 = vpop.f32.mrb[0].mxu0
        %v970 = vadd.f32 %v770, %v969
        %v971 = vpop.f32.mrb[0].mxu0
        %v972 = vadd.f32 %v766, %v971
        %v973 = vpop.f32.mrb[0].mxu0
        %v974 = vadd.f32 %v770, %v973
        %975 = vmatprep.mubr.bf16.mxu0 %v716
        %976 = vmatmul.mubr.bf16.gmra.mrb[0].mxu0 %v715
        %v977 = vpop.f32.mrb[0].mxu0
        %v978 = vadd.f32 %v766, %v977
        %v979 = vpop.f32.mrb[0].mxu0
        %v980 = vadd.f32 %v770, %v979
        %v981 = vpop.f32.mrb[0].mxu0
        %v982 = vadd.f32 %v766, %v981
        %v983 = vpop.f32.mrb[0].mxu0
        %v984 = vadd.f32 %v770, %v983
        %985 = vmatprep.mubr.bf16.mxu0 %v718
        %986 = vmatmul.mubr.bf16.gmra.mrb[0].mxu0 %v717
        %v987 = vpop.f32.mrb[0].mxu0
        %v988 = vadd.f32 %v766, %v987
        %v989 = vpop.f32.mrb[0].mxu0
        %v990 = vadd.f32 %v770, %v989
        %v991 = vpop.f32.mrb[0].mxu0
        %v992 = vadd.f32 %v766, %v991
        %v993 = vpop.f32.mrb[0].mxu0
        %v994 = vadd.f32 %v770, %v993
        %995 = vmatprep.mubr.bf16.mxu0 %v720
        %996 = vmatmul.mubr.bf16.gmra.mrb[0].mxu0 %v719
        %v997 = vpop.f32.mrb[0].mxu0
        %v998 = vadd.f32 %v766, %v997
        %v999 = vpop.f32.mrb[0].mxu0
        %v1000 = vadd.f32 %v770, %v999
        %v1001 = vpop.f32.mrb[0].mxu0
        %v1002 = vadd.f32 %v766, %v1001
        %v1003 = vpop.f32.mrb[0].mxu0
        %v1004 = vadd.f32 %v770, %v1003
        %1005 = vmatprep.mubr.bf16.mxu0 %v722
        %1006 = vmatmul.mubr.bf16.gmra.mrb[0].mxu0 %v721
        %v1007 = vpop.f32.mrb[0].mxu0
        %v1008 = vadd.f32 %v766, %v1007
        %v1009 = vpop.f32.mrb[0].mxu0
        %v1010 = vadd.f32 %v770, %v1009
        %v1011 = vpop.f32.mrb[0].mxu0
        %v1012 = vadd.f32 %v766, %v1011
        %v1013 = vpop.f32.mrb[0].mxu0
        %v1014 = vadd.f32 %v770, %v1013
        %1015 = vmatprep.mubr.bf16.mxu0 %v724
        %1016 = vmatmul.mubr.bf16.gmra.mrb[0].mxu0 %v723
        %v1017 = vpop.f32.mrb[0].mxu0
        %v1018 = vadd.f32 %v766, %v1017
        %v1019 = vpop.f32.mrb[0].mxu0
        %v1020 = vadd.f32 %v770, %v1019
        %v1021 = vpop.f32.mrb[0].mxu0
        %v1022 = vadd.f32 %v766, %v1021
        %v1023 = vpop.f32.mrb[0].mxu0
        %v1024 = vadd.f32 %v770, %v1023
        %1025 = vmatprep.mubr.bf16.mxu0 %v726
        %1026 = vmatmul.mubr.bf16.gmra.mrb[0].mxu0 %v725
        %v1027 = vpop.f32.mrb[0].mxu0
        %v1028 = vadd.f32 %v766, %v1027
        %v1029 = vpop.f32.mrb[0].mxu0
        %v1030 = vadd.f32 %v770, %v1029
        %v1031 = vpop.f32.mrb[0].mxu0
        %v1032 = vadd.f32 %v766, %v1031
        %v1033 = vpop.f32.mrb[0].mxu0
        %v1034 = vadd.f32 %v770, %v1033
        %1035 = vmatprep.mubr.bf16.mxu0 %v728
        %1036 = vmatmul.mubr.bf16.gmra.mrb[0].mxu0 %v727
        %v1037 = vpop.f32.mrb[0].mxu0
        %v1038 = vadd.f32 %v766, %v1037
        %v1039 = vpop.f32.mrb[0].mxu0
        %v1040 = vadd.f32 %v770, %v1039
        %v1041 = vpop.f32.mrb[0].mxu0
        %v1042 = vadd.f32 %v766, %v1041
        %v1043 = vpop.f32.mrb[0].mxu0
        %v1044 = vadd.f32 %v770, %v1043
        %1045 = vdwg.mxu0
        %v1046 = vadd.f32 %v968, %v970
        %1047 = vadd.xlane.f32.xlu0 %v1046
        %v1048 = vpop.xlane.xlu0 %1047
        %v1049 = vadd.f32 %v972, %v974
        %1050 = vadd.xlane.f32.xlu0 %v1049
        %v1051 = vpop.xlane.xlu0 %1050
        %v1052 = vadd.f32 %v978, %v980
        %1053 = vadd.xlane.f32.xlu0 %v1052
        %v1054 = vpop.xlane.xlu0 %1053
        %v1055 = vadd.f32 %v982, %v984
        %1056 = vadd.xlane.f32.xlu0 %v1055
        %v1057 = vpop.xlane.xlu0 %1056
        %v1058 = vadd.f32 %v988, %v990
        %1059 = vadd.xlane.f32.xlu0 %v1058
        %v1060 = vpop.xlane.xlu0 %1059
        %v1061 = vadd.f32 %v992, %v994
        %1062 = vadd.xlane.f32.xlu0 %v1061
        %v1063 = vpop.xlane.xlu0 %1062
        %v1064 = vadd.f32 %v998, %v1000
        %1065 = vadd.xlane.f32.xlu0 %v1064
        %v1066 = vpop.xlane.xlu0 %1065
        %v1067 = vadd.f32 %v1002, %v1004
        %1068 = vadd.xlane.f32.xlu0 %v1067
        %v1069 = vpop.xlane.xlu0 %1068
        %v1070 = vadd.f32 %v1008, %v1010
        %1071 = vadd.xlane.f32.xlu0 %v1070
        %v1072 = vpop.xlane.xlu0 %1071
        %v1073 = vadd.f32 %v1012, %v1014
        %1074 = vadd.xlane.f32.xlu0 %v1073
        %v1075 = vpop.xlane.xlu0 %1074
        %v1076 = vadd.f32 %v1018, %v1020
        %1077 = vadd.xlane.f32.xlu0 %v1076
        %v1078 = vpop.xlane.xlu0 %1077
        %v1079 = vadd.f32 %v1022, %v1024
        %1080 = vadd.xlane.f32.xlu0 %v1079
        %v1081 = vpop.xlane.xlu0 %1080
        %v1082 = vadd.f32 %v1028, %v1030
        %1083 = vadd.xlane.f32.xlu0 %v1082
        %v1084 = vpop.xlane.xlu0 %1083
        %v1085 = vadd.f32 %v1032, %v1034
        %1086 = vadd.xlane.f32.xlu0 %v1085
        %v1087 = vpop.xlane.xlu0 %1086
        %v1088 = vadd.f32 %v1038, %v1040
        %1089 = vadd.xlane.f32.xlu0 %v1088
        %v1090 = vpop.xlane.xlu0 %1089
        %v1091 = vadd.f32 %v1042, %v1044
        %1092 = vadd.xlane.f32.xlu0 %v1091
        %v1093 = vpop.xlane.xlu0 %1092
        %v1094 = vmul.f32 %v1048, 0.00390625
        %v1095 = vmul.f32 %v1051, 0.00390625
        %v1096 = vmul.f32 %v1054, 0.00390625
        %v1097 = vmul.f32 %v1057, 0.00390625
        %v1098 = vmul.f32 %v1060, 0.00390625
        %v1099 = vmul.f32 %v1063, 0.00390625
        %v1100 = vmul.f32 %v1066, 0.00390625
        %v1101 = vmul.f32 %v1069, 0.00390625
        %v1102 = vmul.f32 %v1072, 0.00390625
        %v1103 = vmul.f32 %v1075, 0.00390625
        %v1104 = vmul.f32 %v1078, 0.00390625
        %v1105 = vmul.f32 %v1081, 0.00390625
        %v1106 = vmul.f32 %v1084, 0.00390625
        %v1107 = vmul.f32 %v1087, 0.00390625
        %v1108 = vmul.f32 %v1090, 0.00390625
        %v1109 = vmul.f32 %v1093, 0.00390625
        %v1110 = vsub.f32 %v968, %v1094
        %v1111 = vsub.f32 %v970, %v1094
        %v1112 = vsub.f32 %v972, %v1095
        %v1113 = vsub.f32 %v974, %v1095
        %v1114 = vsub.f32 %v978, %v1096
        %v1115 = vsub.f32 %v980, %v1096
        %v1116 = vsub.f32 %v982, %v1097
        %v1117 = vsub.f32 %v984, %v1097
        %v1118 = vsub.f32 %v988, %v1098
        %v1119 = vsub.f32 %v990, %v1098
        %v1120 = vsub.f32 %v992, %v1099
        %v1121 = vsub.f32 %v994, %v1099
        %v1122 = vsub.f32 %v998, %v1100
        %v1123 = vsub.f32 %v1000, %v1100
        %v1124 = vsub.f32 %v1002, %v1101
        %v1125 = vsub.f32 %v1004, %v1101
        %v1126 = vsub.f32 %v1008, %v1102
        %v1127 = vsub.f32 %v1010, %v1102
        %v1128 = vsub.f32 %v1012, %v1103
        %v1129 = vsub.f32 %v1014, %v1103
        %v1130 = vsub.f32 %v1018, %v1104
        %v1131 = vsub.f32 %v1020, %v1104
        %v1132 = vsub.f32 %v1022, %v1105
        %v1133 = vsub.f32 %v1024, %v1105
        %v1134 = vsub.f32 %v1028, %v1106
        %v1135 = vsub.f32 %v1030, %v1106
        %v1136 = vsub.f32 %v1032, %v1107
        %v1137 = vsub.f32 %v1034, %v1107
        %v1138 = vsub.f32 %v1038, %v1108
        %v1139 = vsub.f32 %v1040, %v1108
        %v1140 = vsub.f32 %v1042, %v1109
        %v1141 = vsub.f32 %v1044, %v1109
        %v1142 = vmul.f32 %v1110, %v1110
        %v1143 = vmul.f32 %v1111, %v1111
        %v1144 = vmul.f32 %v1112, %v1112
        %v1145 = vmul.f32 %v1113, %v1113
        %v1146 = vmul.f32 %v1114, %v1114
        %v1147 = vmul.f32 %v1115, %v1115
        %v1148 = vmul.f32 %v1116, %v1116
        %v1149 = vmul.f32 %v1117, %v1117
        %v1150 = vmul.f32 %v1118, %v1118
        %v1151 = vmul.f32 %v1119, %v1119
        %v1152 = vmul.f32 %v1120, %v1120
        %v1153 = vmul.f32 %v1121, %v1121
        %v1154 = vmul.f32 %v1122, %v1122
        %v1155 = vmul.f32 %v1123, %v1123
        %v1156 = vmul.f32 %v1124, %v1124
        %v1157 = vmul.f32 %v1125, %v1125
        %v1158 = vmul.f32 %v1126, %v1126
        %v1159 = vmul.f32 %v1127, %v1127
        %v1160 = vmul.f32 %v1128, %v1128
        %v1161 = vmul.f32 %v1129, %v1129
        %v1162 = vmul.f32 %v1130, %v1130
        %v1163 = vmul.f32 %v1131, %v1131
        %v1164 = vmul.f32 %v1132, %v1132
        %v1165 = vmul.f32 %v1133, %v1133
        %v1166 = vmul.f32 %v1134, %v1134
        %v1167 = vmul.f32 %v1135, %v1135
        %v1168 = vmul.f32 %v1136, %v1136
        %v1169 = vmul.f32 %v1137, %v1137
        %v1170 = vmul.f32 %v1138, %v1138
        %v1171 = vmul.f32 %v1139, %v1139
        %v1172 = vmul.f32 %v1140, %v1140
        %v1173 = vmul.f32 %v1141, %v1141
        %v1174 = vadd.f32 %v1142, %v1143
        %1175 = vadd.xlane.f32.xlu0 %v1174
        %v1176 = vpop.xlane.xlu0 %1175
        %v1177 = vadd.f32 %v1144, %v1145
        %1178 = vadd.xlane.f32.xlu0 %v1177
        %v1179 = vpop.xlane.xlu0 %1178
        %v1180 = vadd.f32 %v1146, %v1147
        %1181 = vadd.xlane.f32.xlu0 %v1180
        %v1182 = vpop.xlane.xlu0 %1181
        %v1183 = vadd.f32 %v1148, %v1149
        %1184 = vadd.xlane.f32.xlu0 %v1183
        %v1185 = vpop.xlane.xlu0 %1184
        %v1186 = vadd.f32 %v1150, %v1151
        %1187 = vadd.xlane.f32.xlu0 %v1186
        %v1188 = vpop.xlane.xlu0 %1187
        %v1189 = vadd.f32 %v1152, %v1153
        %1190 = vadd.xlane.f32.xlu0 %v1189
        %v1191 = vpop.xlane.xlu0 %1190
        %v1192 = vadd.f32 %v1154, %v1155
        %1193 = vadd.xlane.f32.xlu0 %v1192
        %v1194 = vpop.xlane.xlu0 %1193
        %v1195 = vadd.f32 %v1156, %v1157
        %1196 = vadd.xlane.f32.xlu0 %v1195
        %v1197 = vpop.xlane.xlu0 %1196
        %v1198 = vadd.f32 %v1158, %v1159
        %1199 = vadd.xlane.f32.xlu0 %v1198
        %v1200 = vpop.xlane.xlu0 %1199
        %v1201 = vadd.f32 %v1160, %v1161
        %1202 = vadd.xlane.f32.xlu0 %v1201
        %v1203 = vpop.xlane.xlu0 %1202
        %v1204 = vadd.f32 %v1162, %v1163
        %1205 = vadd.xlane.f32.xlu0 %v1204
        %v1206 = vpop.xlane.xlu0 %1205
        %v1207 = vadd.f32 %v1164, %v1165
        %1208 = vadd.xlane.f32.xlu0 %v1207
        %v1209 = vpop.xlane.xlu0 %1208
        %v1210 = vadd.f32 %v1166, %v1167
        %1211 = vadd.xlane.f32.xlu0 %v1210
        %v1212 = vpop.xlane.xlu0 %1211
        %v1213 = vadd.f32 %v1168, %v1169
        %1214 = vadd.xlane.f32.xlu0 %v1213
        %v1215 = vpop.xlane.xlu0 %1214
        %v1216 = vadd.f32 %v1170, %v1171
        %1217 = vadd.xlane.f32.xlu0 %v1216
        %v1218 = vpop.xlane.xlu0 %1217
        %v1219 = vadd.f32 %v1172, %v1173
        %1220 = vadd.xlane.f32.xlu0 %v1219
        %v1221 = vpop.xlane.xlu0 %1220
        %v1222 = vmul.f32 %v1176, 0.00390625
        %v1223 = vmul.f32 %v1179, 0.00390625
        %v1224 = vmul.f32 %v1182, 0.00390625
        %v1225 = vmul.f32 %v1185, 0.00390625
        %v1226 = vmul.f32 %v1188, 0.00390625
        %v1227 = vmul.f32 %v1191, 0.00390625
        %v1228 = vmul.f32 %v1194, 0.00390625
        %v1229 = vmul.f32 %v1197, 0.00390625
        %v1230 = vmul.f32 %v1200, 0.00390625
        %v1231 = vmul.f32 %v1203, 0.00390625
        %v1232 = vmul.f32 %v1206, 0.00390625
        %v1233 = vmul.f32 %v1209, 0.00390625
        %v1234 = vmul.f32 %v1212, 0.00390625
        %v1235 = vmul.f32 %v1215, 0.00390625
        %v1236 = vmul.f32 %v1218, 0.00390625
        %v1237 = vmul.f32 %v1221, 0.00390625
        %v1238 = vadd.f32 %v1222, 1e-05
        %v1239 = vadd.f32 %v1223, 1e-05
        %v1240 = vadd.f32 %v1224, 1e-05
        %v1241 = vadd.f32 %v1225, 1e-05
        %v1242 = vadd.f32 %v1226, 1e-05
        %v1243 = vadd.f32 %v1227, 1e-05
        %v1244 = vadd.f32 %v1228, 1e-05
        %v1245 = vadd.f32 %v1229, 1e-05
        %v1246 = vadd.f32 %v1230, 1e-05
        %v1247 = vadd.f32 %v1231, 1e-05
        %v1248 = vadd.f32 %v1232, 1e-05
        %v1249 = vadd.f32 %v1233, 1e-05
        %v1250 = vadd.f32 %v1234, 1e-05
        %v1251 = vadd.f32 %v1235, 1e-05
        %v1252 = vadd.f32 %v1236, 1e-05
        %v1253 = vadd.f32 %v1237, 1e-05
        %v1254 = vrsqrt.pop %v1238
        %v1255 = vrsqrt.pop %v1239
        %v1256 = vrsqrt.pop %v1240
        %v1257 = vrsqrt.pop %v1241
        %v1258 = vrsqrt.pop %v1242
        %v1259 = vrsqrt.pop %v1243
        %v1260 = vrsqrt.pop %v1244
        %v1261 = vrsqrt.pop %v1245
        %v1262 = vrsqrt.pop %v1246
        %v1263 = vrsqrt.pop %v1247
        %v1264 = vrsqrt.pop %v1248
        %v1265 = vrsqrt.pop %v1249
        %v1266 = vrsqrt.pop %v1250
        %v1267 = vrsqrt.pop %v1251
        %v1268 = vrsqrt.pop %v1252
        %v1269 = vrsqrt.pop %v1253
        %v1270 = vmul.f32 %v1110, %v1254
        %v1271 = vmul.f32 %v1111, %v1254
        %v1272 = vmul.f32 %v1112, %v1255
        %v1273 = vmul.f32 %v1113, %v1255
        %v1274 = vmul.f32 %v1114, %v1256
        %v1275 = vmul.f32 %v1115, %v1256
        %v1276 = vmul.f32 %v1116, %v1257
        %v1277 = vmul.f32 %v1117, %v1257
        %v1278 = vmul.f32 %v1118, %v1258
        %v1279 = vmul.f32 %v1119, %v1258
        %v1280 = vmul.f32 %v1120, %v1259
        %v1281 = vmul.f32 %v1121, %v1259
        %v1282 = vmul.f32 %v1122, %v1260
        %v1283 = vmul.f32 %v1123, %v1260
        %v1284 = vmul.f32 %v1124, %v1261
        %v1285 = vmul.f32 %v1125, %v1261
        %v1286 = vmul.f32 %v1126, %v1262
        %v1287 = vmul.f32 %v1127, %v1262
        %v1288 = vmul.f32 %v1128, %v1263
        %v1289 = vmul.f32 %v1129, %v1263
        %v1290 = vmul.f32 %v1130, %v1264
        %v1291 = vmul.f32 %v1131, %v1264
        %v1292 = vmul.f32 %v1132, %v1265
        %v1293 = vmul.f32 %v1133, %v1265
        %v1294 = vmul.f32 %v1134, %v1266
        %v1295 = vmul.f32 %v1135, %v1266
        %v1296 = vmul.f32 %v1136, %v1267
        %v1297 = vmul.f32 %v1137, %v1267
        %v1298 = vmul.f32 %v1138, %v1268
        %v1299 = vmul.f32 %v1139, %v1268
        %v1300 = vmul.f32 %v1140, %v1269
        %v1301 = vmul.f32 %v1141, %v1269
        %v1302 = vld [vmem:[#allocation12] sm:$0x3]
        %v1304 = vlaneseq
        %v1305 = vshrl.u32 %v1304, 7
        %v1306 = vsub.s32 0, %v1305
        %v1307 = vrot.slane %v1302, %v1306
        %v1308 = vlaneseq
        %v1309 = vshrl.u32 %v1308, 7
        %v1310 = vsub.s32 1, %v1309
        %v1311 = vrot.slane %v1302, %v1310
        %v1314 = vmul.f32 %v1270, %v1307
        %v1315 = vmul.f32 %v1271, %v1311
        %v1316 = vmul.f32 %v1272, %v1307
        %v1317 = vmul.f32 %v1273, %v1311
        %v1318 = vmul.f32 %v1274, %v1307
        %v1319 = vmul.f32 %v1275, %v1311
        %v1320 = vmul.f32 %v1276, %v1307
        %v1321 = vmul.f32 %v1277, %v1311
        %v1322 = vmul.f32 %v1278, %v1307
        %v1323 = vmul.f32 %v1279, %v1311
        %v1324 = vmul.f32 %v1280, %v1307
        %v1325 = vmul.f32 %v1281, %v1311
        %v1326 = vmul.f32 %v1282, %v1307
        %v1327 = vmul.f32 %v1283, %v1311
        %v1328 = vmul.f32 %v1284, %v1307
        %v1329 = vmul.f32 %v1285, %v1311
        %v1330 = vmul.f32 %v1286, %v1307
        %v1331 = vmul.f32 %v1287, %v1311
        %v1332 = vmul.f32 %v1288, %v1307
        %v1333 = vmul.f32 %v1289, %v1311
        %v1334 = vmul.f32 %v1290, %v1307
        %v1335 = vmul.f32 %v1291, %v1311
        %v1336 = vmul.f32 %v1292, %v1307
        %v1337 = vmul.f32 %v1293, %v1311
        %v1338 = vmul.f32 %v1294, %v1307
        %v1339 = vmul.f32 %v1295, %v1311
        %v1340 = vmul.f32 %v1296, %v1307
        %v1341 = vmul.f32 %v1297, %v1311
        %v1342 = vmul.f32 %v1298, %v1307
        %v1343 = vmul.f32 %v1299, %v1311
        %v1344 = vmul.f32 %v1300, %v1307
        %v1345 = vmul.f32 %v1301, %v1311
        %v1346 = vld [vmem:[#allocation14] sm:$0x3]
        %v1348 = vlaneseq
        %v1349 = vshrl.u32 %v1348, 7
        %v1350 = vsub.s32 0, %v1349
        %v1351 = vrot.slane %v1346, %v1350
        %v1352 = vlaneseq
        %v1353 = vshrl.u32 %v1352, 7
        %v1354 = vsub.s32 1, %v1353
        %v1355 = vrot.slane %v1346, %v1354
        %v1358 = vadd.f32 %v1314, %v1351
        %v1359 = vadd.f32 %v1315, %v1355
        %v1360 = vadd.f32 %v1316, %v1351
        %v1361 = vadd.f32 %v1317, %v1355
        %v1362 = vadd.f32 %v1318, %v1351
        %v1363 = vadd.f32 %v1319, %v1355
        %v1364 = vadd.f32 %v1320, %v1351
        %v1365 = vadd.f32 %v1321, %v1355
        %v1366 = vadd.f32 %v1322, %v1351
        %v1367 = vadd.f32 %v1323, %v1355
        %v1368 = vadd.f32 %v1324, %v1351
        %v1369 = vadd.f32 %v1325, %v1355
        %v1370 = vadd.f32 %v1326, %v1351
        %v1371 = vadd.f32 %v1327, %v1355
        %v1372 = vadd.f32 %v1328, %v1351
        %v1373 = vadd.f32 %v1329, %v1355
        %v1374 = vadd.f32 %v1330, %v1351
        %v1375 = vadd.f32 %v1331, %v1355
        %v1376 = vadd.f32 %v1332, %v1351
        %v1377 = vadd.f32 %v1333, %v1355
        %v1378 = vadd.f32 %v1334, %v1351
        %v1379 = vadd.f32 %v1335, %v1355
        %v1380 = vadd.f32 %v1336, %v1351
        %v1381 = vadd.f32 %v1337, %v1355
        %v1382 = vadd.f32 %v1338, %v1351
        %v1383 = vadd.f32 %v1339, %v1355
        %v1384 = vadd.f32 %v1340, %v1351
        %v1385 = vadd.f32 %v1341, %v1355
        %v1386 = vadd.f32 %v1342, %v1351
        %v1387 = vadd.f32 %v1343, %v1355
        %v1388 = vadd.f32 %v1344, %v1351
        %v1389 = vadd.f32 %v1345, %v1355
        %v1390 = vmax.f32 %v1358, 0.0
        %v1391 = vmax.f32 %v1359, 0.0
        %v1392 = vmax.f32 %v1360, 0.0
        %v1393 = vmax.f32 %v1361, 0.0
        %v1394 = vmax.f32 %v1362, 0.0
        %v1395 = vmax.f32 %v1363, 0.0
        %v1396 = vmax.f32 %v1364, 0.0
        %v1397 = vmax.f32 %v1365, 0.0
        %v1398 = vmax.f32 %v1366, 0.0
        %v1399 = vmax.f32 %v1367, 0.0
        %v1400 = vmax.f32 %v1368, 0.0
        %v1401 = vmax.f32 %v1369, 0.0
        %v1402 = vmax.f32 %v1370, 0.0
        %v1403 = vmax.f32 %v1371, 0.0
        %v1404 = vmax.f32 %v1372, 0.0
        %v1405 = vmax.f32 %v1373, 0.0
        %v1406 = vmax.f32 %v1374, 0.0
        %v1407 = vmax.f32 %v1375, 0.0
        %v1408 = vmax.f32 %v1376, 0.0
        %v1409 = vmax.f32 %v1377, 0.0
        %v1410 = vmax.f32 %v1378, 0.0
        %v1411 = vmax.f32 %v1379, 0.0
        %v1412 = vmax.f32 %v1380, 0.0
        %v1413 = vmax.f32 %v1381, 0.0
        %v1414 = vmax.f32 %v1382, 0.0
        %v1415 = vmax.f32 %v1383, 0.0
        %v1416 = vmax.f32 %v1384, 0.0
        %v1417 = vmax.f32 %v1385, 0.0
        %v1418 = vmax.f32 %v1386, 0.0
        %v1419 = vmax.f32 %v1387, 0.0
        %v1420 = vmax.f32 %v1388, 0.0
        %v1421 = vmax.f32 %v1389, 0.0
        %v1422 = vadd.f32 %v1390, %v681
        %v1423 = vadd.f32 %v1391, %v682
        %v1424 = vadd.f32 %v1392, %v683
        %v1425 = vadd.f32 %v1393, %v684
        %v1426 = vadd.f32 %v1394, %v685
        %v1427 = vadd.f32 %v1395, %v686
        %v1428 = vadd.f32 %v1396, %v687
        %v1429 = vadd.f32 %v1397, %v688
        %v1430 = vadd.f32 %v1398, %v689
        %v1431 = vadd.f32 %v1399, %v690
        %v1432 = vadd.f32 %v1400, %v691
        %v1433 = vadd.f32 %v1401, %v692
        %v1434 = vadd.f32 %v1402, %v693
        %v1435 = vadd.f32 %v1403, %v694
        %v1436 = vadd.f32 %v1404, %v695
        %v1437 = vadd.f32 %v1405, %v696
        %v1438 = vadd.f32 %v1406, %v697
        %v1439 = vadd.f32 %v1407, %v698
        %v1440 = vadd.f32 %v1408, %v699
        %v1441 = vadd.f32 %v1409, %v700
        %v1442 = vadd.f32 %v1410, %v701
        %v1443 = vadd.f32 %v1411, %v702
        %v1444 = vadd.f32 %v1412, %v703
        %v1445 = vadd.f32 %v1413, %v704
        %v1446 = vadd.f32 %v1414, %v705
        %v1447 = vadd.f32 %v1415, %v706
        %v1448 = vadd.f32 %v1416, %v707
        %v1449 = vadd.f32 %v1417, %v708
        %v1450 = vadd.f32 %v1418, %v709
        %v1451 = vadd.f32 %v1419, %v710
        %v1452 = vadd.f32 %v1420, %v711
        %v1453 = vadd.f32 %v1421, %v712
        %v1454 = vpack.c.bf16 %v1424, %v1422
        %v1455 = vpack.c.bf16 %v1425, %v1423
        %v1456 = vpack.c.bf16 %v1428, %v1426
        %v1457 = vpack.c.bf16 %v1429, %v1427
        %v1458 = vpack.c.bf16 %v1432, %v1430
        %v1459 = vpack.c.bf16 %v1433, %v1431
        %v1460 = vpack.c.bf16 %v1436, %v1434
        %v1461 = vpack.c.bf16 %v1437, %v1435
        %v1462 = vpack.c.bf16 %v1440, %v1438
        %v1463 = vpack.c.bf16 %v1441, %v1439
        %v1464 = vpack.c.bf16 %v1444, %v1442
        %v1465 = vpack.c.bf16 %v1445, %v1443
        %v1466 = vpack.c.bf16 %v1448, %v1446
        %v1467 = vpack.c.bf16 %v1449, %v1447
        %v1468 = vpack.c.bf16 %v1452, %v1450
        %v1469 = vpack.c.bf16 %v1453, %v1451
        %s1470 = scalar_lea.vmem [#allocation9], 256
        %v1471 = vld [vmem:[%s1470] sm:$0xff]
        %v1472 = vld [vmem:[%s1470 + $0x8] sm:$0xff]
        %v1473 = vld [vmem:[%s1470 + $0x10] sm:$0xff]
        %v1474 = vld [vmem:[%s1470 + $0x18] sm:$0xff]
        %v1475 = vld [vmem:[%s1470 + $0x20] sm:$0xff]
        %v1476 = vld [vmem:[%s1470 + $0x28] sm:$0xff]
        %v1477 = vld [vmem:[%s1470 + $0x30] sm:$0xff]
        %v1478 = vld [vmem:[%s1470 + $0x38] sm:$0xff]
        %v1479 = vld [vmem:[%s1470 + $0x40] sm:$0xff]
        %v1480 = vld [vmem:[%s1470 + $0x48] sm:$0xff]
        %v1481 = vld [vmem:[%s1470 + $0x50] sm:$0xff]
        %v1482 = vld [vmem:[%s1470 + $0x58] sm:$0xff]
        %v1483 = vld [vmem:[%s1470 + $0x60] sm:$0xff]
        %v1484 = vld [vmem:[%s1470 + $0x68] sm:$0xff]
        %v1485 = vld [vmem:[%s1470 + $0x70] sm:$0xff]
        %v1486 = vld [vmem:[%s1470 + $0x78] sm:$0xff]
        %v1487 = vld [vmem:[%s1470 + $0x80] sm:$0xff]
        %v1488 = vld [vmem:[%s1470 + $0x88] sm:$0xff]
        %v1489 = vld [vmem:[%s1470 + $0x90] sm:$0xff]
        %v1490 = vld [vmem:[%s1470 + $0x98] sm:$0xff]
        %v1491 = vld [vmem:[%s1470 + $0xa0] sm:$0xff]
        %v1492 = vld [vmem:[%s1470 + $0xa8] sm:$0xff]
        %v1493 = vld [vmem:[%s1470 + $0xb0] sm:$0xff]
        %v1494 = vld [vmem:[%s1470 + $0xb8] sm:$0xff]
        %v1495 = vld [vmem:[%s1470 + $0xc0] sm:$0xff]
        %v1496 = vld [vmem:[%s1470 + $0xc8] sm:$0xff]
        %v1497 = vld [vmem:[%s1470 + $0xd0] sm:$0xff]
        %v1498 = vld [vmem:[%s1470 + $0xd8] sm:$0xff]
        %v1499 = vld [vmem:[%s1470 + $0xe0] sm:$0xff]
        %v1500 = vld [vmem:[%s1470 + $0xe8] sm:$0xff]
        %v1501 = vld [vmem:[%s1470 + $0xf0] sm:$0xff]
        %v1502 = vld [vmem:[%s1470 + $0xf8] sm:$0xff]
        %s1503 = scalar_lea.vmem [#allocation11], 2
        %v1504 = vld [vmem:[%s1503] sm:$0x3]
        %v1506 = vlaneseq
        %v1507 = vshrl.u32 %v1506, 7
        %v1508 = vsub.s32 0, %v1507
        %v1509 = vrot.slane %v1504, %v1508
        %v1510 = vlaneseq
        %v1511 = vshrl.u32 %v1510, 7
        %v1512 = vsub.s32 1, %v1511
        %v1513 = vrot.slane %v1504, %v1512
        %v1548 = vunpack.c.l.b16 %v1471
        %v1549 = vunpack.c.h.b16 %v1471
        %v1550 = vunpack.c.l.b16 %v1472
        %v1551 = vunpack.c.h.b16 %v1472
        %v1552 = vunpack.c.l.b16 %v1473
        %v1553 = vunpack.c.h.b16 %v1473
        %v1554 = vunpack.c.l.b16 %v1474
        %v1555 = vunpack.c.h.b16 %v1474
        %v1556 = vunpack.c.l.b16 %v1475
        %v1557 = vunpack.c.h.b16 %v1475
        %v1558 = vunpack.c.l.b16 %v1476
        %v1559 = vunpack.c.h.b16 %v1476
        %v1560 = vunpack.c.l.b16 %v1477
        %v1561 = vunpack.c.h.b16 %v1477
        %v1562 = vunpack.c.l.b16 %v1478
        %v1563 = vunpack.c.h.b16 %v1478
        %v1564 = vunpack.c.l.b16 %v1479
        %v1565 = vunpack.c.h.b16 %v1479
        %v1566 = vunpack.c.l.b16 %v1480
        %v1567 = vunpack.c.h.b16 %v1480
        %v1568 = vunpack.c.l.b16 %v1481
        %v1569 = vunpack.c.h.b16 %v1481
        %v1570 = vunpack.c.l.b16 %v1482
        %v1571 = vunpack.c.h.b16 %v1482
        %v1572 = vunpack.c.l.b16 %v1483
        %v1573 = vunpack.c.h.b16 %v1483
        %v1574 = vunpack.c.l.b16 %v1484
        %v1575 = vunpack.c.h.b16 %v1484
        %v1576 = vunpack.c.l.b16 %v1485
        %v1577 = vunpack.c.h.b16 %v1485
        %v1578 = vunpack.c.l.b16 %v1486
        %v1579 = vunpack.c.h.b16 %v1486
        %v1580 = vunpack.c.l.b16 %v1487
        %v1581 = vunpack.c.h.b16 %v1487
        %v1582 = vunpack.c.l.b16 %v1488
        %v1583 = vunpack.c.h.b16 %v1488
        %v1584 = vunpack.c.l.b16 %v1489
        %v1585 = vunpack.c.h.b16 %v1489
        %v1586 = vunpack.c.l.b16 %v1490
        %v1587 = vunpack.c.h.b16 %v1490
        %v1588 = vunpack.c.l.b16 %v1491
        %v1589 = vunpack.c.h.b16 %v1491
        %v1590 = vunpack.c.l.b16 %v1492
        %v1591 = vunpack.c.h.b16 %v1492
        %v1592 = vunpack.c.l.b16 %v1493
        %v1593 = vunpack.c.h.b16 %v1493
        %v1594 = vunpack.c.l.b16 %v1494
        %v1595 = vunpack.c.h.b16 %v1494
        %v1596 = vunpack.c.l.b16 %v1495
        %v1597 = vunpack.c.h.b16 %v1495
        %v1598 = vunpack.c.l.b16 %v1496
        %v1599 = vunpack.c.h.b16 %v1496
        %v1600 = vunpack.c.l.b16 %v1497
        %v1601 = vunpack.c.h.b16 %v1497
        %v1602 = vunpack.c.l.b16 %v1498
        %v1603 = vunpack.c.h.b16 %v1498
        %v1604 = vunpack.c.l.b16 %v1499
        %v1605 = vunpack.c.h.b16 %v1499
        %v1606 = vunpack.c.l.b16 %v1500
        %v1607 = vunpack.c.h.b16 %v1500
        %v1608 = vunpack.c.l.b16 %v1501
        %v1609 = vunpack.c.h.b16 %v1501
        %v1610 = vunpack.c.l.b16 %v1502
        %v1611 = vunpack.c.h.b16 %v1502
        %v1612 = vpack.c.b16 %v1550, %v1548
        %v1613 = vpack.c.b16 %v1551, %v1549
        %v1614 = vpack.c.b16 %v1554, %v1552
        %v1615 = vpack.c.b16 %v1555, %v1553
        %v1616 = vpack.c.b16 %v1558, %v1556
        %v1617 = vpack.c.b16 %v1559, %v1557
        %v1618 = vpack.c.b16 %v1562, %v1560
        %v1619 = vpack.c.b16 %v1563, %v1561
        %v1620 = vpack.c.b16 %v1566, %v1564
        %v1621 = vpack.c.b16 %v1567, %v1565
        %v1622 = vpack.c.b16 %v1570, %v1568
        %v1623 = vpack.c.b16 %v1571, %v1569
        %v1624 = vpack.c.b16 %v1574, %v1572
        %v1625 = vpack.c.b16 %v1575, %v1573
        %v1626 = vpack.c.b16 %v1578, %v1576
        %v1627 = vpack.c.b16 %v1579, %v1577
        %v1628 = vpack.c.b16 %v1582, %v1580
        %v1629 = vpack.c.b16 %v1583, %v1581
        %v1630 = vpack.c.b16 %v1586, %v1584
        %v1631 = vpack.c.b16 %v1587, %v1585
        %v1632 = vpack.c.b16 %v1590, %v1588
        %v1633 = vpack.c.b16 %v1591, %v1589
        %v1634 = vpack.c.b16 %v1594, %v1592
        %v1635 = vpack.c.b16 %v1595, %v1593
        %v1636 = vpack.c.b16 %v1598, %v1596
        %v1637 = vpack.c.b16 %v1599, %v1597
        %v1638 = vpack.c.b16 %v1602, %v1600
        %v1639 = vpack.c.b16 %v1603, %v1601
        %v1640 = vpack.c.b16 %v1606, %v1604
        %v1641 = vpack.c.b16 %v1607, %v1605
        %v1642 = vpack.c.b16 %v1610, %v1608
        %v1643 = vpack.c.b16 %v1611, %v1609
        %1676 = vmatprep.subr.bf16.mxu0 %v1613
        %1677 = vmatpush1.bf16.msra.mxu0 %v1612
        %1678 = vmatprep.subr.bf16.mxu0 %v1615
        %1679 = vmatpush1.bf16.msra.mxu0 %v1614
        %1680 = vmatprep.subr.bf16.mxu0 %v1617
        %1681 = vmatpush1.bf16.msra.mxu0 %v1616
        %1682 = vmatprep.subr.bf16.mxu0 %v1619
        %1683 = vmatpush1.bf16.msra.mxu0 %v1618
        %1684 = vmatprep.subr.bf16.mxu0 %v1621
        %1685 = vmatpush1.bf16.msra.mxu0 %v1620
        %1686 = vmatprep.subr.bf16.mxu0 %v1623
        %1687 = vmatpush1.bf16.msra.mxu0 %v1622
        %1688 = vmatprep.subr.bf16.mxu0 %v1625
        %1689 = vmatpush1.bf16.msra.mxu0 %v1624
        %1690 = vmatprep.subr.bf16.mxu0 %v1627
        %1691 = vmatpush1.bf16.msra.mxu0 %v1626
        %1692 = vmatprep.subr.bf16.mxu0 %v1629
        %1693 = vmatpush1.bf16.msra.mxu0 %v1628
        %1694 = vmatprep.subr.bf16.mxu0 %v1631
        %1695 = vmatpush1.bf16.msra.mxu0 %v1630
        %1696 = vmatprep.subr.bf16.mxu0 %v1633
        %1697 = vmatpush1.bf16.msra.mxu0 %v1632
        %1698 = vmatprep.subr.bf16.mxu0 %v1635
        %1699 = vmatpush1.bf16.msra.mxu0 %v1634
        %1700 = vmatprep.subr.bf16.mxu0 %v1637
        %1701 = vmatpush1.bf16.msra.mxu0 %v1636
        %1702 = vmatprep.subr.bf16.mxu0 %v1639
        %1703 = vmatpush1.bf16.msra.mxu0 %v1638
        %1704 = vmatprep.subr.bf16.mxu0 %v1641
        %1705 = vmatpush1.bf16.msra.mxu0 %v1640
        %1706 = vmatprep.subr.bf16.mxu0 %v1643
        %1707 = vmatpush1.bf16.msra.mxu0 %v1642
        %1708 = vmatprep.mubr.bf16.mxu0 %v1455
        %1709 = vmatmul.mubr.bf16.gmra.mrb[0].mxu0 %v1454
        %v1710 = vpop.f32.mrb[0].mxu0
        %v1711 = vadd.f32 %v1509, %v1710
        %v1712 = vpop.f32.mrb[0].mxu0
        %v1713 = vadd.f32 %v1513, %v1712
        %v1714 = vpop.f32.mrb[0].mxu0
        %v1715 = vadd.f32 %v1509, %v1714
        %v1716 = vpop.f32.mrb[0].mxu0
        %v1717 = vadd.f32 %v1513, %v1716
        %1718 = vmatprep.mubr.bf16.mxu0 %v1457
        %1719 = vmatmul.mubr.bf16.gmra.mrb[0].mxu0 %v1456
        %v1720 = vpop.f32.mrb[0].mxu0
        %v1721 = vadd.f32 %v1509, %v1720
        %v1722 = vpop.f32.mrb[0].mxu0
        %v1723 = vadd.f32 %v1513, %v1722
        %v1724 = vpop.f32.mrb[0].mxu0
        %v1725 = vadd.f32 %v1509, %v1724
        %v1726 = vpop.f32.mrb[0].mxu0
        %v1727 = vadd.f32 %v1513, %v1726
        %1728 = vmatprep.mubr.bf16.mxu0 %v1459
        %1729 = vmatmul.mubr.bf16.gmra.mrb[0].mxu0 %v1458
        %v1730 = vpop.f32.mrb[0].mxu0
        %v1731 = vadd.f32 %v1509, %v1730
        %v1732 = vpop.f32.mrb[0].mxu0
        %v1733 = vadd.f32 %v1513, %v1732
        %v1734 = vpop.f32.mrb[0].mxu0
        %v1735 = vadd.f32 %v1509, %v1734
        %v1736 = vpop.f32.mrb[0].mxu0
        %v1737 = vadd.f32 %v1513, %v1736
        %1738 = vmatprep.mubr.bf16.mxu0 %v1461
        %1739 = vmatmul.mubr.bf16.gmra.mrb[0].mxu0 %v1460
        %v1740 = vpop.f32.mrb[0].mxu0
        %v1741 = vadd.f32 %v1509, %v1740
        %v1742 = vpop.f32.mrb[0].mxu0
        %v1743 = vadd.f32 %v1513, %v1742
        %v1744 = vpop.f32.mrb[0].mxu0
        %v1745 = vadd.f32 %v1509, %v1744
        %v1746 = vpop.f32.mrb[0].mxu0
        %v1747 = vadd.f32 %v1513, %v1746
        %1748 = vmatprep.mubr.bf16.mxu0 %v1463
        %1749 = vmatmul.mubr.bf16.gmra.mrb[0].mxu0 %v1462
        %v1750 = vpop.f32.mrb[0].mxu0
        %v1751 = vadd.f32 %v1509, %v1750
        %v1752 = vpop.f32.mrb[0].mxu0
        %v1753 = vadd.f32 %v1513, %v1752
        %v1754 = vpop.f32.mrb[0].mxu0
        %v1755 = vadd.f32 %v1509, %v1754
        %v1756 = vpop.f32.mrb[0].mxu0
        %v1757 = vadd.f32 %v1513, %v1756
        %1758 = vmatprep.mubr.bf16.mxu0 %v1465
        %1759 = vmatmul.mubr.bf16.gmra.mrb[0].mxu0 %v1464
        %v1760 = vpop.f32.mrb[0].mxu0
        %v1761 = vadd.f32 %v1509, %v1760
        %v1762 = vpop.f32.mrb[0].mxu0
        %v1763 = vadd.f32 %v1513, %v1762
        %v1764 = vpop.f32.mrb[0].mxu0
        %v1765 = vadd.f32 %v1509, %v1764
        %v1766 = vpop.f32.mrb[0].mxu0
        %v1767 = vadd.f32 %v1513, %v1766
        %1768 = vmatprep.mubr.bf16.mxu0 %v1467
        %1769 = vmatmul.mubr.bf16.gmra.mrb[0].mxu0 %v1466
        %v1770 = vpop.f32.mrb[0].mxu0
        %v1771 = vadd.f32 %v1509, %v1770
        %v1772 = vpop.f32.mrb[0].mxu0
        %v1773 = vadd.f32 %v1513, %v1772
        %v1774 = vpop.f32.mrb[0].mxu0
        %v1775 = vadd.f32 %v1509, %v1774
        %v1776 = vpop.f32.mrb[0].mxu0
        %v1777 = vadd.f32 %v1513, %v1776
        %1778 = vmatprep.mubr.bf16.mxu0 %v1469
        %1779 = vmatmul.mubr.bf16.gmra.mrb[0].mxu0 %v1468
        %v1780 = vpop.f32.mrb[0].mxu0
        %v1781 = vadd.f32 %v1509, %v1780
        %v1782 = vpop.f32.mrb[0].mxu0
        %v1783 = vadd.f32 %v1513, %v1782
        %v1784 = vpop.f32.mrb[0].mxu0
        %v1785 = vadd.f32 %v1509, %v1784
        %v1786 = vpop.f32.mrb[0].mxu0
        %v1787 = vadd.f32 %v1513, %v1786
        %1788 = vdwg.mxu0
        %v1789 = vadd.f32 %v1711, %v1713
        %1790 = vadd.xlane.f32.xlu0 %v1789
        %v1791 = vpop.xlane.xlu0 %1790
        %v1792 = vadd.f32 %v1715, %v1717
        %1793 = vadd.xlane.f32.xlu0 %v1792
        %v1794 = vpop.xlane.xlu0 %1793
        %v1795 = vadd.f32 %v1721, %v1723
        %1796 = vadd.xlane.f32.xlu0 %v1795
        %v1797 = vpop.xlane.xlu0 %1796
        %v1798 = vadd.f32 %v1725, %v1727
        %1799 = vadd.xlane.f32.xlu0 %v1798
        %v1800 = vpop.xlane.xlu0 %1799
        %v1801 = vadd.f32 %v1731, %v1733
        %1802 = vadd.xlane.f32.xlu0 %v1801
        %v1803 = vpop.xlane.xlu0 %1802
        %v1804 = vadd.f32 %v1735, %v1737
        %1805 = vadd.xlane.f32.xlu0 %v1804
        %v1806 = vpop.xlane.xlu0 %1805
        %v1807 = vadd.f32 %v1741, %v1743
        %1808 = vadd.xlane.f32.xlu0 %v1807
        %v1809 = vpop.xlane.xlu0 %1808
        %v1810 = vadd.f32 %v1745, %v1747
        %1811 = vadd.xlane.f32.xlu0 %v1810
        %v1812 = vpop.xlane.xlu0 %1811
        %v1813 = vadd.f32 %v1751, %v1753
        %1814 = vadd.xlane.f32.xlu0 %v1813
        %v1815 = vpop.xlane.xlu0 %1814
        %v1816 = vadd.f32 %v1755, %v1757
        %1817 = vadd.xlane.f32.xlu0 %v1816
        %v1818 = vpop.xlane.xlu0 %1817
        %v1819 = vadd.f32 %v1761, %v1763
        %1820 = vadd.xlane.f32.xlu0 %v1819
        %v1821 = vpop.xlane.xlu0 %1820
        %v1822 = vadd.f32 %v1765, %v1767
        %1823 = vadd.xlane.f32.xlu0 %v1822
        %v1824 = vpop.xlane.xlu0 %1823
        %v1825 = vadd.f32 %v1771, %v1773
        %1826 = vadd.xlane.f32.xlu0 %v1825
        %v1827 = vpop.xlane.xlu0 %1826
        %v1828 = vadd.f32 %v1775, %v1777
        %1829 = vadd.xlane.f32.xlu0 %v1828
        %v1830 = vpop.xlane.xlu0 %1829
        %v1831 = vadd.f32 %v1781, %v1783
        %1832 = vadd.xlane.f32.xlu0 %v1831
        %v1833 = vpop.xlane.xlu0 %1832
        %v1834 = vadd.f32 %v1785, %v1787
        %1835 = vadd.xlane.f32.xlu0 %v1834
        %v1836 = vpop.xlane.xlu0 %1835
        %v1837 = vmul.f32 %v1791, 0.00390625
        %v1838 = vmul.f32 %v1794, 0.00390625
        %v1839 = vmul.f32 %v1797, 0.00390625
        %v1840 = vmul.f32 %v1800, 0.00390625
        %v1841 = vmul.f32 %v1803, 0.00390625
        %v1842 = vmul.f32 %v1806, 0.00390625
        %v1843 = vmul.f32 %v1809, 0.00390625
        %v1844 = vmul.f32 %v1812, 0.00390625
        %v1845 = vmul.f32 %v1815, 0.00390625
        %v1846 = vmul.f32 %v1818, 0.00390625
        %v1847 = vmul.f32 %v1821, 0.00390625
        %v1848 = vmul.f32 %v1824, 0.00390625
        %v1849 = vmul.f32 %v1827, 0.00390625
        %v1850 = vmul.f32 %v1830, 0.00390625
        %v1851 = vmul.f32 %v1833, 0.00390625
        %v1852 = vmul.f32 %v1836, 0.00390625
        %v1853 = vsub.f32 %v1711, %v1837
        %v1854 = vsub.f32 %v1713, %v1837
        %v1855 = vsub.f32 %v1715, %v1838
        %v1856 = vsub.f32 %v1717, %v1838
        %v1857 = vsub.f32 %v1721, %v1839
        %v1858 = vsub.f32 %v1723, %v1839
        %v1859 = vsub.f32 %v1725, %v1840
        %v1860 = vsub.f32 %v1727, %v1840
        %v1861 = vsub.f32 %v1731, %v1841
        %v1862 = vsub.f32 %v1733, %v1841
        %v1863 = vsub.f32 %v1735, %v1842
        %v1864 = vsub.f32 %v1737, %v1842
        %v1865 = vsub.f32 %v1741, %v1843
        %v1866 = vsub.f32 %v1743, %v1843
        %v1867 = vsub.f32 %v1745, %v1844
        %v1868 = vsub.f32 %v1747, %v1844
        %v1869 = vsub.f32 %v1751, %v1845
        %v1870 = vsub.f32 %v1753, %v1845
        %v1871 = vsub.f32 %v1755, %v1846
        %v1872 = vsub.f32 %v1757, %v1846
        %v1873 = vsub.f32 %v1761, %v1847
        %v1874 = vsub.f32 %v1763, %v1847
        %v1875 = vsub.f32 %v1765, %v1848
        %v1876 = vsub.f32 %v1767, %v1848
        %v1877 = vsub.f32 %v1771, %v1849
        %v1878 = vsub.f32 %v1773, %v1849
        %v1879 = vsub.f32 %v1775, %v1850
        %v1880 = vsub.f32 %v1777, %v1850
        %v1881 = vsub.f32 %v1781, %v1851
        %v1882 = vsub.f32 %v1783, %v1851
        %v1883 = vsub.f32 %v1785, %v1852
        %v1884 = vsub.f32 %v1787, %v1852
        %v1885 = vmul.f32 %v1853, %v1853
        %v1886 = vmul.f32 %v1854, %v1854
        %v1887 = vmul.f32 %v1855, %v1855
        %v1888 = vmul.f32 %v1856, %v1856
        %v1889 = vmul.f32 %v1857, %v1857
        %v1890 = vmul.f32 %v1858, %v1858
        %v1891 = vmul.f32 %v1859, %v1859
        %v1892 = vmul.f32 %v1860, %v1860
        %v1893 = vmul.f32 %v1861, %v1861
        %v1894 = vmul.f32 %v1862, %v1862
        %v1895 = vmul.f32 %v1863, %v1863
        %v1896 = vmul.f32 %v1864, %v1864
        %v1897 = vmul.f32 %v1865, %v1865
        %v1898 = vmul.f32 %v1866, %v1866
        %v1899 = vmul.f32 %v1867, %v1867
        %v1900 = vmul.f32 %v1868, %v1868
        %v1901 = vmul.f32 %v1869, %v1869
        %v1902 = vmul.f32 %v1870, %v1870
        %v1903 = vmul.f32 %v1871, %v1871
        %v1904 = vmul.f32 %v1872, %v1872
        %v1905 = vmul.f32 %v1873, %v1873
        %v1906 = vmul.f32 %v1874, %v1874
        %v1907 = vmul.f32 %v1875, %v1875
        %v1908 = vmul.f32 %v1876, %v1876
        %v1909 = vmul.f32 %v1877, %v1877
        %v1910 = vmul.f32 %v1878, %v1878
        %v1911 = vmul.f32 %v1879, %v1879
        %v1912 = vmul.f32 %v1880, %v1880
        %v1913 = vmul.f32 %v1881, %v1881
        %v1914 = vmul.f32 %v1882, %v1882
        %v1915 = vmul.f32 %v1883, %v1883
        %v1916 = vmul.f32 %v1884, %v1884
        %v1917 = vadd.f32 %v1885, %v1886
        %1918 = vadd.xlane.f32.xlu0 %v1917
        %v1919 = vpop.xlane.xlu0 %1918
        %v1920 = vadd.f32 %v1887, %v1888
        %1921 = vadd.xlane.f32.xlu0 %v1920
        %v1922 = vpop.xlane.xlu0 %1921
        %v1923 = vadd.f32 %v1889, %v1890
        %1924 = vadd.xlane.f32.xlu0 %v1923
        %v1925 = vpop.xlane.xlu0 %1924
        %v1926 = vadd.f32 %v1891, %v1892
        %1927 = vadd.xlane.f32.xlu0 %v1926
        %v1928 = vpop.xlane.xlu0 %1927
        %v1929 = vadd.f32 %v1893, %v1894
        %1930 = vadd.xlane.f32.xlu0 %v1929
        %v1931 = vpop.xlane.xlu0 %1930
        %v1932 = vadd.f32 %v1895, %v1896
        %1933 = vadd.xlane.f32.xlu0 %v1932
        %v1934 = vpop.xlane.xlu0 %1933
        %v1935 = vadd.f32 %v1897, %v1898
        %1936 = vadd.xlane.f32.xlu0 %v1935
        %v1937 = vpop.xlane.xlu0 %1936
        %v1938 = vadd.f32 %v1899, %v1900
        %1939 = vadd.xlane.f32.xlu0 %v1938
        %v1940 = vpop.xlane.xlu0 %1939
        %v1941 = vadd.f32 %v1901, %v1902
        %1942 = vadd.xlane.f32.xlu0 %v1941
        %v1943 = vpop.xlane.xlu0 %1942
        %v1944 = vadd.f32 %v1903, %v1904
        %1945 = vadd.xlane.f32.xlu0 %v1944
        %v1946 = vpop.xlane.xlu0 %1945
        %v1947 = vadd.f32 %v1905, %v1906
        %1948 = vadd.xlane.f32.xlu0 %v1947
        %v1949 = vpop.xlane.xlu0 %1948
        %v1950 = vadd.f32 %v1907, %v1908
        %1951 = vadd.xlane.f32.xlu0 %v1950
        %v1952 = vpop.xlane.xlu0 %1951
        %v1953 = vadd.f32 %v1909, %v1910
        %1954 = vadd.xlane.f32.xlu0 %v1953
        %v1955 = vpop.xlane.xlu0 %1954
        %v1956 = vadd.f32 %v1911, %v1912
        %1957 = vadd.xlane.f32.xlu0 %v1956
        %v1958 = vpop.xlane.xlu0 %1957
        %v1959 = vadd.f32 %v1913, %v1914
        %1960 = vadd.xlane.f32.xlu0 %v1959
        %v1961 = vpop.xlane.xlu0 %1960
        %v1962 = vadd.f32 %v1915, %v1916
        %1963 = vadd.xlane.f32.xlu0 %v1962
        %v1964 = vpop.xlane.xlu0 %1963
        %v1965 = vmul.f32 %v1919, 0.00390625
        %v1966 = vmul.f32 %v1922, 0.00390625
        %v1967 = vmul.f32 %v1925, 0.00390625
        %v1968 = vmul.f32 %v1928, 0.00390625
        %v1969 = vmul.f32 %v1931, 0.00390625
        %v1970 = vmul.f32 %v1934, 0.00390625
        %v1971 = vmul.f32 %v1937, 0.00390625
        %v1972 = vmul.f32 %v1940, 0.00390625
        %v1973 = vmul.f32 %v1943, 0.00390625
        %v1974 = vmul.f32 %v1946, 0.00390625
        %v1975 = vmul.f32 %v1949, 0.00390625
        %v1976 = vmul.f32 %v1952, 0.00390625
        %v1977 = vmul.f32 %v1955, 0.00390625
        %v1978 = vmul.f32 %v1958, 0.00390625
        %v1979 = vmul.f32 %v1961, 0.00390625
        %v1980 = vmul.f32 %v1964, 0.00390625
        %v1981 = vadd.f32 %v1965, 1e-05
        %v1982 = vadd.f32 %v1966, 1e-05
        %v1983 = vadd.f32 %v1967, 1e-05
        %v1984 = vadd.f32 %v1968, 1e-05
        %v1985 = vadd.f32 %v1969, 1e-05
        %v1986 = vadd.f32 %v1970, 1e-05
        %v1987 = vadd.f32 %v1971, 1e-05
        %v1988 = vadd.f32 %v1972, 1e-05
        %v1989 = vadd.f32 %v1973, 1e-05
        %v1990 = vadd.f32 %v1974, 1e-05
        %v1991 = vadd.f32 %v1975, 1e-05
        %v1992 = vadd.f32 %v1976, 1e-05
        %v1993 = vadd.f32 %v1977, 1e-05
        %v1994 = vadd.f32 %v1978, 1e-05
        %v1995 = vadd.f32 %v1979, 1e-05
        %v1996 = vadd.f32 %v1980, 1e-05
        %v1997 = vrsqrt.pop %v1981
        %v1998 = vrsqrt.pop %v1982
        %v1999 = vrsqrt.pop %v1983
        %v2000 = vrsqrt.pop %v1984
        %v2001 = vrsqrt.pop %v1985
        %v2002 = vrsqrt.pop %v1986
        %v2003 = vrsqrt.pop %v1987
        %v2004 = vrsqrt.pop %v1988
        %v2005 = vrsqrt.pop %v1989
        %v2006 = vrsqrt.pop %v1990
        %v2007 = vrsqrt.pop %v1991
        %v2008 = vrsqrt.pop %v1992
        %v2009 = vrsqrt.pop %v1993
        %v2010 = vrsqrt.pop %v1994
        %v2011 = vrsqrt.pop %v1995
        %v2012 = vrsqrt.pop %v1996
        %v2013 = vmul.f32 %v1853, %v1997
        %v2014 = vmul.f32 %v1854, %v1997
        %v2015 = vmul.f32 %v1855, %v1998
        %v2016 = vmul.f32 %v1856, %v1998
        %v2017 = vmul.f32 %v1857, %v1999
        %v2018 = vmul.f32 %v1858, %v1999
        %v2019 = vmul.f32 %v1859, %v2000
        %v2020 = vmul.f32 %v1860, %v2000
        %v2021 = vmul.f32 %v1861, %v2001
        %v2022 = vmul.f32 %v1862, %v2001
        %v2023 = vmul.f32 %v1863, %v2002
        %v2024 = vmul.f32 %v1864, %v2002
        %v2025 = vmul.f32 %v1865, %v2003
        %v2026 = vmul.f32 %v1866, %v2003
        %v2027 = vmul.f32 %v1867, %v2004
        %v2028 = vmul.f32 %v1868, %v2004
        %v2029 = vmul.f32 %v1869, %v2005
        %v2030 = vmul.f32 %v1870, %v2005
        %v2031 = vmul.f32 %v1871, %v2006
        %v2032 = vmul.f32 %v1872, %v2006
        %v2033 = vmul.f32 %v1873, %v2007
        %v2034 = vmul.f32 %v1874, %v2007
        %v2035 = vmul.f32 %v1875, %v2008
        %v2036 = vmul.f32 %v1876, %v2008
        %v2037 = vmul.f32 %v1877, %v2009
        %v2038 = vmul.f32 %v1878, %v2009
        %v2039 = vmul.f32 %v1879, %v2010
        %v2040 = vmul.f32 %v1880, %v2010
        %v2041 = vmul.f32 %v1881, %v2011
        %v2042 = vmul.f32 %v1882, %v2011
        %v2043 = vmul.f32 %v1883, %v2012
        %v2044 = vmul.f32 %v1884, %v2012
        %s2045 = scalar_lea.vmem [#allocation12], 2
        %v2046 = vld [vmem:[%s2045] sm:$0x3]
        %v2048 = vlaneseq
        %v2049 = vshrl.u32 %v2048, 7
        %v2050 = vsub.s32 0, %v2049
        %v2051 = vrot.slane %v2046, %v2050
        %v2052 = vlaneseq
        %v2053 = vshrl.u32 %v2052, 7
        %v2054 = vsub.s32 1, %v2053
        %v2055 = vrot.slane %v2046, %v2054
        %v2058 = vmul.f32 %v2013, %v2051
        %v2059 = vmul.f32 %v2014, %v2055
        %v2060 = vmul.f32 %v2015, %v2051
        %v2061 = vmul.f32 %v2016, %v2055
        %v2062 = vmul.f32 %v2017, %v2051
        %v2063 = vmul.f32 %v2018, %v2055
        %v2064 = vmul.f32 %v2019, %v2051
        %v2065 = vmul.f32 %v2020, %v2055
        %v2066 = vmul.f32 %v2021, %v2051
        %v2067 = vmul.f32 %v2022, %v2055
        %v2068 = vmul.f32 %v2023, %v2051
        %v2069 = vmul.f32 %v2024, %v2055
        %v2070 = vmul.f32 %v2025, %v2051
        %v2071 = vmul.f32 %v2026, %v2055
        %v2072 = vmul.f32 %v2027, %v2051
        %v2073 = vmul.f32 %v2028, %v2055
        %v2074 = vmul.f32 %v2029, %v2051
        %v2075 = vmul.f32 %v2030, %v2055
        %v2076 = vmul.f32 %v2031, %v2051
        %v2077 = vmul.f32 %v2032, %v2055
        %v2078 = vmul.f32 %v2033, %v2051
        %v2079 = vmul.f32 %v2034, %v2055
        %v2080 = vmul.f32 %v2035, %v2051
        %v2081 = vmul.f32 %v2036, %v2055
        %v2082 = vmul.f32 %v2037, %v2051
        %v2083 = vmul.f32 %v2038, %v2055
        %v2084 = vmul.f32 %v2039, %v2051
        %v2085 = vmul.f32 %v2040, %v2055
        %v2086 = vmul.f32 %v2041, %v2051
        %v2087 = vmul.f32 %v2042, %v2055
        %v2088 = vmul.f32 %v2043, %v2051
        %v2089 = vmul.f32 %v2044, %v2055
        %s2090 = scalar_lea.vmem [#allocation14], 2
        %v2091 = vld [vmem:[%s2090] sm:$0x3]
        %v2093 = vlaneseq
        %v2094 = vshrl.u32 %v2093, 7
        %v2095 = vsub.s32 0, %v2094
        %v2096 = vrot.slane %v2091, %v2095
        %v2097 = vlaneseq
        %v2098 = vshrl.u32 %v2097, 7
        %v2099 = vsub.s32 1, %v2098
        %v2100 = vrot.slane %v2091, %v2099
        %v2103 = vadd.f32 %v2058, %v2096
        %v2104 = vadd.f32 %v2059, %v2100
        %v2105 = vadd.f32 %v2060, %v2096
        %v2106 = vadd.f32 %v2061, %v2100
        %v2107 = vadd.f32 %v2062, %v2096
        %v2108 = vadd.f32 %v2063, %v2100
        %v2109 = vadd.f32 %v2064, %v2096
        %v2110 = vadd.f32 %v2065, %v2100
        %v2111 = vadd.f32 %v2066, %v2096
        %v2112 = vadd.f32 %v2067, %v2100
        %v2113 = vadd.f32 %v2068, %v2096
        %v2114 = vadd.f32 %v2069, %v2100
        %v2115 = vadd.f32 %v2070, %v2096
        %v2116 = vadd.f32 %v2071, %v2100
        %v2117 = vadd.f32 %v2072, %v2096
        %v2118 = vadd.f32 %v2073, %v2100
        %v2119 = vadd.f32 %v2074, %v2096
        %v2120 = vadd.f32 %v2075, %v2100
        %v2121 = vadd.f32 %v2076, %v2096
        %v2122 = vadd.f32 %v2077, %v2100
        %v2123 = vadd.f32 %v2078, %v2096
        %v2124 = vadd.f32 %v2079, %v2100
        %v2125 = vadd.f32 %v2080, %v2096
        %v2126 = vadd.f32 %v2081, %v2100
        %v2127 = vadd.f32 %v2082, %v2096
        %v2128 = vadd.f32 %v2083, %v2100
        %v2129 = vadd.f32 %v2084, %v2096
        %v2130 = vadd.f32 %v2085, %v2100
        %v2131 = vadd.f32 %v2086, %v2096
        %v2132 = vadd.f32 %v2087, %v2100
        %v2133 = vadd.f32 %v2088, %v2096
        %v2134 = vadd.f32 %v2089, %v2100
        %v2135 = vmax.f32 %v2103, 0.0
        %v2136 = vmax.f32 %v2104, 0.0
        %v2137 = vmax.f32 %v2105, 0.0
        %v2138 = vmax.f32 %v2106, 0.0
        %v2139 = vmax.f32 %v2107, 0.0
        %v2140 = vmax.f32 %v2108, 0.0
        %v2141 = vmax.f32 %v2109, 0.0
        %v2142 = vmax.f32 %v2110, 0.0
        %v2143 = vmax.f32 %v2111, 0.0
        %v2144 = vmax.f32 %v2112, 0.0
        %v2145 = vmax.f32 %v2113, 0.0
        %v2146 = vmax.f32 %v2114, 0.0
        %v2147 = vmax.f32 %v2115, 0.0
        %v2148 = vmax.f32 %v2116, 0.0
        %v2149 = vmax.f32 %v2117, 0.0
        %v2150 = vmax.f32 %v2118, 0.0
        %v2151 = vmax.f32 %v2119, 0.0
        %v2152 = vmax.f32 %v2120, 0.0
        %v2153 = vmax.f32 %v2121, 0.0
        %v2154 = vmax.f32 %v2122, 0.0
        %v2155 = vmax.f32 %v2123, 0.0
        %v2156 = vmax.f32 %v2124, 0.0
        %v2157 = vmax.f32 %v2125, 0.0
        %v2158 = vmax.f32 %v2126, 0.0
        %v2159 = vmax.f32 %v2127, 0.0
        %v2160 = vmax.f32 %v2128, 0.0
        %v2161 = vmax.f32 %v2129, 0.0
        %v2162 = vmax.f32 %v2130, 0.0
        %v2163 = vmax.f32 %v2131, 0.0
        %v2164 = vmax.f32 %v2132, 0.0
        %v2165 = vmax.f32 %v2133, 0.0
        %v2166 = vmax.f32 %v2134, 0.0
        %v2167 = vadd.f32 %v2135, %v1422
        %v2168 = vadd.f32 %v2136, %v1423
        %v2169 = vadd.f32 %v2137, %v1424
        %v2170 = vadd.f32 %v2138, %v1425
        %v2171 = vadd.f32 %v2139, %v1426
        %v2172 = vadd.f32 %v2140, %v1427
        %v2173 = vadd.f32 %v2141, %v1428
        %v2174 = vadd.f32 %v2142, %v1429
        %v2175 = vadd.f32 %v2143, %v1430
        %v2176 = vadd.f32 %v2144, %v1431
        %v2177 = vadd.f32 %v2145, %v1432
        %v2178 = vadd.f32 %v2146, %v1433
        %v2179 = vadd.f32 %v2147, %v1434
        %v2180 = vadd.f32 %v2148, %v1435
        %v2181 = vadd.f32 %v2149, %v1436
        %v2182 = vadd.f32 %v2150, %v1437
        %v2183 = vadd.f32 %v2151, %v1438
        %v2184 = vadd.f32 %v2152, %v1439
        %v2185 = vadd.f32 %v2153, %v1440
        %v2186 = vadd.f32 %v2154, %v1441
        %v2187 = vadd.f32 %v2155, %v1442
        %v2188 = vadd.f32 %v2156, %v1443
        %v2189 = vadd.f32 %v2157, %v1444
        %v2190 = vadd.f32 %v2158, %v1445
        %v2191 = vadd.f32 %v2159, %v1446
        %v2192 = vadd.f32 %v2160, %v1447
        %v2193 = vadd.f32 %v2161, %v1448
        %v2194 = vadd.f32 %v2162, %v1449
        %v2195 = vadd.f32 %v2163, %v1450
        %v2196 = vadd.f32 %v2164, %v1451
        %v2197 = vadd.f32 %v2165, %v1452
        %v2198 = vadd.f32 %v2166, %v1453
        %v2199 = vld [vmem:[#allocation15] sm:$0xff]
        %v2200 = vpack.c.bf16 %v2169, %v2167
        %v2201 = vpack.c.bf16 %v2170, %v2168
        %v2202 = vpack.c.bf16 %v2173, %v2171
        %v2203 = vpack.c.bf16 %v2174, %v2172
        %v2204 = vpack.c.bf16 %v2177, %v2175
        %v2205 = vpack.c.bf16 %v2178, %v2176
        %v2206 = vpack.c.bf16 %v2181, %v2179
        %v2207 = vpack.c.bf16 %v2182, %v2180
        %v2208 = vpack.c.bf16 %v2185, %v2183
        %v2209 = vpack.c.bf16 %v2186, %v2184
        %v2210 = vpack.c.bf16 %v2189, %v2187
        %v2211 = vpack.c.bf16 %v2190, %v2188
        %v2212 = vpack.c.bf16 %v2193, %v2191
        %v2213 = vpack.c.bf16 %v2194, %v2192
        %v2214 = vpack.c.bf16 %v2197, %v2195
        %v2215 = vpack.c.bf16 %v2198, %v2196
        %v2217 = vunpack.c.l.b16 %v2199
        %v2218 = vunpack.c.h.b16 %v2199
        %v2219 = vpack.c.b16 %v2217, %v2217
        %v2220 = vpack.c.b16 %v2218, %v2218
        %2223 = vmatprep.subr.bf16.mxu0 %v2201
        %2224 = vmatpush1.bf16.xpose.msra.mxu0 %v2200
        %2225 = vmatprep.subr.bf16.mxu0 %v2203
        %2226 = vmatpush1.bf16.xpose.msra.mxu0 %v2202
        %2227 = vmatprep.subr.bf16.mxu0 %v2205
        %2228 = vmatpush1.bf16.xpose.msra.mxu0 %v2204
        %2229 = vmatprep.subr.bf16.mxu0 %v2207
        %2230 = vmatpush1.bf16.xpose.msra.mxu0 %v2206
        %2231 = vmatprep.subr.bf16.mxu0 %v2209
        %2232 = vmatpush1.bf16.xpose.msra.mxu0 %v2208
        %2233 = vmatprep.subr.bf16.mxu0 %v2211
        %2234 = vmatpush1.bf16.xpose.msra.mxu0 %v2210
        %2235 = vmatprep.subr.bf16.mxu0 %v2213
        %2236 = vmatpush1.bf16.xpose.msra.mxu0 %v2212
        %2237 = vmatprep.subr.bf16.mxu0 %v2215
        %2238 = vmatpush1.bf16.xpose.msra.mxu0 %v2214
        %2239 = vmatprep.subr.bf16.mxu0 0
        %2240 = vmatpush1.bf16.xpose.msra.mxu0 0
        %2241 = vmatprep.subr.bf16.mxu0 0
        %2242 = vmatpush1.bf16.xpose.msra.mxu0 0
        %2243 = vmatprep.subr.bf16.mxu0 0
        %2244 = vmatpush1.bf16.xpose.msra.mxu0 0
        %2245 = vmatprep.subr.bf16.mxu0 0
        %2246 = vmatpush1.bf16.xpose.msra.mxu0 0
        %2247 = vmatprep.subr.bf16.mxu0 0
        %2248 = vmatpush1.bf16.xpose.msra.mxu0 0
        %2249 = vmatprep.subr.bf16.mxu0 0
        %2250 = vmatpush1.bf16.xpose.msra.mxu0 0
        %2251 = vmatprep.subr.bf16.mxu0 0
        %2252 = vmatpush1.bf16.xpose.msra.mxu0 0
        %2253 = vmatprep.subr.bf16.mxu0 0
        %2254 = vmatpush1.bf16.xpose.msra.mxu0 0
        %2255 = vmatprep.mubr.bf16.mxu0 %v2220
        %2256 = vmatmul.mubr.bf16.gmra.mrb[0].mxu0 %v2219
        %v2257 = vpop.f32.mrb[0].mxu0
        %v2258 = vadd.f32 0.0, %v2257
        %v2259 = vpop.f32.mrb[0].mxu0
        %v2260 = vpop.f32.mrb[0].mxu0
        %v2261 = vpop.f32.mrb[0].mxu0
        %2262 = vdwg.mxu0
        %s2263 = sld [smem:[#allocation2]]
        %v2264 = vstv %s2263
        %v2265 = vadd.f32 %v2258, %v2264
        %2266 = vst [vmem:[%s448] sm:$0x1] %v2265
        %s2267 = sand.u32 %s233, 1
        %s2268 = scalar_lea.sflag [#allocation5], %s2267
        %s2269 = sand.u32 %s233, 1
        %s2270 = scalar_lea.vmem [#allocation17], %s2269
        // Predicated region
        $region89: #{tpu_custom_call.1} parent=55 // pred_check
          %p2271 = pneg %p243
        $region90: #{tpu_custom_call.1} parent=55 // pred_check_branch
          %2273 = sbr.rel (%p2271) target = $region92
        $region91: #{tpu_custom_call.1} parent=55 // pred_region
          %s2275 = ssub.s32 16, 16
          %2276 = vsyncadd %s2268, %s2275
          %s2277 = smul.addr %s31, 16
          %s2278 = scalar_lea.hbm %s9, %s2277
          %s2280 = sshll.u32 %s2270, 4
          %s2281 = int_to_ptr.vmem [resolvable:$true] %s2280
          %2283 = dma.vmem_to_hbm [thread:$0]  %s2281, 16, %s2278, %s2268
        $region92: #{tpu_custom_call.1} parent=55 // pred_fallthru
          _
      $region56: #{tpu_custom_call.1} parent=5 // pred_fallthru
        _
      %p2284 = scmp.le.s32.totalorder 2, %s26
      // Predicated region
      $region93: #{tpu_custom_call.1} parent=5 // pred_check
        %p2285 = pneg %p2284
      $region94: #{tpu_custom_call.1} parent=5 // pred_check_branch
        %2287 = sbr.rel (%p2285) target = $region96
      $region95: #{tpu_custom_call.1} parent=5 // pred_region
        %s2288 = ssub.s32 %s26, 2
        // Predicated region
        $region97: #{tpu_custom_call.1} parent=95 // pred_check
          %p2289 = pneg %p249
        $region98: #{tpu_custom_call.1} parent=95 // pred_check_branch
          %2291 = sbr.rel (%p2289) target = $region100
        $region99: #{tpu_custom_call.1} parent=95 // pred_region
          %s2292 = sand.u32 %s234, 1
          %s2293 = scalar_lea.sflag [#allocation5], %s2292
          %s2294 = sand.u32 %s234, 1
          %s2295 = scalar_lea.vmem [#allocation17], %s2294
          %2296 = dma.done %s2293, 16
        $region100: #{tpu_custom_call.1} parent=95 // pred_fallthru
          _
      $region96: #{tpu_custom_call.1} parent=5 // pred_fallthru
        _
    $region6: #{tpu_custom_call.1} parent=1 // loop_footer
      %s30 = sadd.s32 1, %s26
    $region7: #{tpu_custom_call.1} parent=1 // loop_footer_branch
      %25 = sbr.rel target = $region3
    $region8: #{tpu_custom_call.1} parent=1 // loop_exit
      _
    %2297 = vsyncpa [#allocation4], 1
    %s2298 = scalar_lea.sflag [#allocation4], 1
    %2299 = vsyncpa %s2298, 1
    %2300 = vsyncpa [#allocation7], 1
    %2301 = vsyncpa [#allocation10], 1
    %2302 = vsyncpa [#allocation13], 1
    %2303 = vsyncpa [#allocation16], 1
    %2304 = vsyncpa [#allocation5], 1
    %s2305 = scalar_lea.sflag [#allocation5], 1
    %2306 = vsyncpa %s2305, 1

// kernel: tpu_custom_call.1
$region0: #{tpu_custom_call.1}
  #allocation0 [shape = 'u32[]', space=smem, size = 0x4, offset = 0x4, fixed_abs, tag = 'smem constant byte address 0x4 - core index']
  #allocation1 [shape = 'u32[144,128]{1,0:T(1,128)}', space=vmem, size = 0x12000, scoped, tag = 'internal scratch']
  #allocation2 [shape = 'f32[1]{0:T(128)S(6)}', space=smem, size = 0x200, scoped, tag = 'scoped memory for tpu_custom_call.1']
  %s0 = inlined_call_operand.hbm [shape: bf16[256,32], index: 0, kind: input, shape index: {}]
  %s1 = inlined_call_operand.hbm [shape: bf16[32,256], index: 1, kind: input, shape index: {}]
  %s2 = inlined_call_operand.hbm [shape: f32[1,256], index: 2, kind: input, shape index: {}]
  %s3 = inlined_call_operand.hbm [shape: bf16[2,256,256], index: 3, kind: input, shape index: {}]
  %s4 = inlined_call_operand.hbm [shape: f32[2,1,256], index: 4, kind: input, shape index: {}]
  %s5 = inlined_call_operand.hbm [shape: f32[2,1,256], index: 5, kind: input, shape index: {}]
  %s6 = inlined_call_operand.hbm [shape: f32[2,1,256], index: 6, kind: input, shape index: {}]
  %s7 = inlined_call_operand.hbm [shape: bf16[8,256], index: 7, kind: input, shape index: {}]
  %s8 = inlined_call_operand.<no memory space> [shape: f32[1], index: 8, kind: input, shape index: {}]
  %s9 = inlined_call_operand.hbm [shape: f32[1,256], index: 9, kind: output, shape index: {}]
  %s10 = sld [smem:[#allocation0]]
  $region101: #{tpu_custom_call.1} parent=0
    _
  %s12 = ssub.s32 1, %s10
  %s13 = scalar_select 0, %s12, %s10
  %14 = sst [smem:[#allocation2]] %s8
  $region1: #{tpu_custom_call.1} parent=0
    #allocation3 [shape = 'u8[65536]{0}', space=vmem, size = 0x10000, scoped, tag = 'input window, operand 0']
    #allocation4 [shape = 's32[2]{0}', space=sflag, size = 0x8, scoped, tag = 'scoped memory for tpu_custom_call.1']
    #allocation5 [shape = 's32[2]{0}', space=sflag, size = 0x8, scoped, tag = 'scoped memory for tpu_custom_call.1']
    #allocation6 [shape = 'u8[16384]{0}', space=vmem, size = 0x4000, scoped, tag = 'input window, operand 1, single buffered']
    #allocation7 [shape = 's32[1]{0}', space=sflag, size = 0x4, scoped, tag = 'scoped memory for tpu_custom_call.1']
    #allocation8 [shape = 'u8[1024]{0}', space=vmem, size = 0x400, scoped, tag = 'input window, operand 2, single buffered']
    #allocation9 [shape = 'u8[262144]{0}', space=vmem, size = 0x40000, scoped, tag = 'input window, operand 3, single buffered']
    #allocation10 [shape = 's32[1]{0}', space=sflag, size = 0x4, scoped, tag = 'scoped memory for tpu_custom_call.1']
    #allocation11 [shape = 'u8[2048]{0}', space=vmem, size = 0x800, scoped, tag = 'input window, operand 4, single buffered']
    #allocation12 [shape = 'u8[2048]{0}', space=vmem, size = 0x800, scoped, tag = 'input window, operand 5, single buffered']
    #allocation13 [shape = 's32[1]{0}', space=sflag, size = 0x4, scoped, tag = 'scoped memory for tpu_custom_call.1']
    #allocation14 [shape = 'u8[2048]{0}', space=vmem, size = 0x800, scoped, tag = 'input window, operand 6, single buffered']
    #allocation15 [shape = 'u8[4096]{0}', space=vmem, size = 0x1000, scoped, tag = 'input window, operand 7, single buffered']
    #allocation16 [shape = 's32[1]{0}', space=sflag, size = 0x4, scoped, tag = 'scoped memory for tpu_custom_call.1']
    #allocation17 [shape = 'u8[1024]{0}', space=vmem, size = 0x400, scoped, tag = 'output window, operand 0']
    %15 = vsyncpa [#allocation4], 0
    %s16 = scalar_lea.sflag [#allocation4], 1
    %17 = vsyncpa %s16, 0
    %18 = vsyncpa [#allocation7], 0
    %19 = vsyncpa [#allocation10], 0
    %20 = vsyncpa [#allocation13], 0
    %21 = vsyncpa [#allocation16], 0
    %22 = vsyncpa [#allocation5], 0
    %s23 = scalar_lea.sflag [#allocation5], 1
    %24 = vsyncpa %s23, 0
    loop: start=0, step=1, limit=4
    $region2: #{tpu_custom_call.1} parent=1 // loop_pre_header
      _
    $region3: #{tpu_custom_call.1} parent=1 // loop_header
      %s26 = sphi 0, %s30
      %p27 = scmp.ge.s32.totalorder %s26, 4
      %s36 = sphi 0, %s38
      %s39 = sphi 0, %s36
      %s40 = sphi 0, %s39
      %s56 = sphi 0, %s40
      %s60 = sphi 0, %s60
      %s62 = sphi 0, %s60
      %s63 = sphi 0, %s62
      %s77 = sphi 0, %s63
      %s81 = sphi 0, %s81
      %s83 = sphi 0, %s81
      %s84 = sphi 0, %s83
      %s98 = sphi 0, %s84
      %s102 = sphi 0, %s102
      %s104 = sphi 0, %s102
      %s105 = sphi 0, %s104
      %s119 = sphi 0, %s105
      %s123 = sphi 0, %s123
      %s125 = sphi 0, %s123
      %s126 = sphi 0, %s125
      %s140 = sphi 0, %s126
      %s144 = sphi 0, %s144
      %s146 = sphi 0, %s144
      %s147 = sphi 0, %s146
      %s161 = sphi 0, %s147
      %s165 = sphi 0, %s165
      %s167 = sphi 0, %s165
      %s168 = sphi 0, %s167
      %s182 = sphi 0, %s168
      %s186 = sphi 0, %s186
      %s188 = sphi 0, %s186
      %s189 = sphi 0, %s188
      %s203 = sphi 0, %s189
      %s207 = sphi 0, %s207
      %s209 = sphi 0, %s207
      %s210 = sphi 0, %s209
      %s224 = sphi 0, %s210
      %s230 = sphi 0, %s232
      %s233 = sphi 0, %s230
      %s234 = sphi 0, %s233
      %s250 = sphi 0, %s234
    $region4: #{tpu_custom_call.1} parent=1 // loop_header_branch
      %29 = sbr.rel (%p27) target = $region8
    $region5: #{tpu_custom_call.1} parent=1 // loop_body
      %s31 = ssub.s32 %s26, 1
      %s32 = ssub.s32 %s26, 2
      %s33 = sadd.s32 %s26, 1
      %s34 = ssub.s32 %s26, %s33
      %p35 = scmp.eq.s32.totalorder %s34, 0
      %s37 = sadd.s32 %s36, 1
      %s38 = scalar_select %p35, %s36, %s37
      %p41 = pneg %p35
      %p42 = scmp.eq.s32.totalorder %s26, 1
      %p43 = por %p41, %p42
      %p44 = scmp.ne.s32.totalorder %s36, %s39
      %p45 = scmp.eq.s32.totalorder %s26, 0
      %p46 = por %p44, %p45
      %p47 = scmp.ne.s32.totalorder %s36, %s39
      %p48 = scmp.eq.s32.totalorder %s31, 1
      %p49 = por %p47, %p48
      %p50 = scmp.ne.s32.totalorder %s39, %s40
      %p51 = scmp.eq.s32.totalorder %s31, 0
      %p52 = por %p50, %p51
      %p53 = scmp.ne.s32.totalorder %s39, %s40
      %p54 = scmp.eq.s32.totalorder %s32, 1
      %p55 = por %p53, %p54
      %p57 = scmp.ne.s32.totalorder %s40, %s56
      %p58 = scmp.eq.s32.totalorder %s32, 0
      %p59 = por %p57, %p58
      %s61 = sadd.s32 %s60, 1
      %p64 = scmp.eq.s32.totalorder %s26, 1
      %p65 = scmp.ne.s32.totalorder %s60, %s62
      %p66 = scmp.eq.s32.totalorder %s26, 0
      %p67 = por %p65, %p66
      %p68 = scmp.ne.s32.totalorder %s60, %s62
      %p69 = scmp.eq.s32.totalorder %s31, 1
      %p70 = por %p68, %p69
      %p71 = scmp.ne.s32.totalorder %s62, %s63
      %p72 = scmp.eq.s32.totalorder %s31, 0
      %p73 = por %p71, %p72
      %p74 = scmp.ne.s32.totalorder %s62, %s63
      %p75 = scmp.eq.s32.totalorder %s32, 1
      %p76 = por %p74, %p75
      %p78 = scmp.ne.s32.totalorder %s63, %s77
      %p79 = scmp.eq.s32.totalorder %s32, 0
      %p80 = por %p78, %p79
      %s82 = sadd.s32 %s81, 1
      %p85 = scmp.eq.s32.totalorder %s26, 1
      %p86 = scmp.ne.s32.totalorder %s81, %s83
      %p87 = scmp.eq.s32.totalorder %s26, 0
      %p88 = por %p86, %p87
      %p89 = scmp.ne.s32.totalorder %s81, %s83
      %p90 = scmp.eq.s32.totalorder %s31, 1
      %p91 = por %p89, %p90
      %p92 = scmp.ne.s32.totalorder %s83, %s84
      %p93 = scmp.eq.s32.totalorder %s31, 0
      %p94 = por %p92, %p93
      %p95 = scmp.ne.s32.totalorder %s83, %s84
      %p96 = scmp.eq.s32.totalorder %s32, 1
      %p97 = por %p95, %p96
      %p99 = scmp.ne.s32.totalorder %s84, %s98
      %p100 = scmp.eq.s32.totalorder %s32, 0
      %p101 = por %p99, %p100
      %s103 = sadd.s32 %s102, 1
      %p106 = scmp.eq.s32.totalorder %s26, 1
      %p107 = scmp.ne.s32.totalorder %s102, %s104
      %p108 = scmp.eq.s32.totalorder %s26, 0
      %p109 = por %p107, %p108
      %p110 = scmp.ne.s32.totalorder %s102, %s104
      %p111 = scmp.eq.s32.totalorder %s31, 1
      %p112 = por %p110, %p111
      %p113 = scmp.ne.s32.totalorder %s104, %s105
      %p114 = scmp.eq.s32.totalorder %s31, 0
      %p115 = por %p113, %p114
      %p116 = scmp.ne.s32.totalorder %s104, %s105
      %p117 = scmp.eq.s32.totalorder %s32, 1
      %p118 = por %p116, %p117
      %p120 = scmp.ne.s32.totalorder %s105, %s119
      %p121 = scmp.eq.s32.totalorder %s32, 0
      %p122 = por %p120, %p121
      %s124 = sadd.s32 %s123, 1
      %p127 = scmp.eq.s32.totalorder %s26, 1
      %p128 = scmp.ne.s32.totalorder %s123, %s125
      %p129 = scmp.eq.s32.totalorder %s26, 0
      %p130 = por %p128, %p129
      %p131 = scmp.ne.s32.totalorder %s123, %s125
      %p132 = scmp.eq.s32.totalorder %s31, 1
      %p133 = por %p131, %p132
      %p134 = scmp.ne.s32.totalorder %s125, %s126
      %p135 = scmp.eq.s32.totalorder %s31, 0
      %p136 = por %p134, %p135
      %p137 = scmp.ne.s32.totalorder %s125, %s126
      %p138 = scmp.eq.s32.totalorder %s32, 1
      %p139 = por %p137, %p138
      %p141 = scmp.ne.s32.totalorder %s126, %s140
      %p142 = scmp.eq.s32.totalorder %s32, 0
      %p143 = por %p141, %p142
      %s145 = sadd.s32 %s144, 1
      %p148 = scmp.eq.s32.totalorder %s26, 1
      %p149 = scmp.ne.s32.totalorder %s144, %s146
      %p150 = scmp.eq.s32.totalorder %s26, 0
      %p151 = por %p149, %p150
      %p152 = scmp.ne.s32.totalorder %s144, %s146
      %p153 = scmp.eq.s32.totalorder %s31, 1
      %p154 = por %p152, %p153
      %p155 = scmp.ne.s32.totalorder %s146, %s147
      %p156 = scmp.eq.s32.totalorder %s31, 0
      %p157 = por %p155, %p156
      %p158 = scmp.ne.s32.totalorder %s146, %s147
      %p159 = scmp.eq.s32.totalorder %s32, 1
      %p160 = por %p158, %p159
      %p162 = scmp.ne.s32.totalorder %s147, %s161
      %p163 = scmp.eq.s32.totalorder %s32, 0
      %p164 = por %p162, %p163
      %s166 = sadd.s32 %s165, 1
      %p169 = scmp.eq.s32.totalorder %s26, 1
      %p170 = scmp.ne.s32.totalorder %s165, %s167
      %p171 = scmp.eq.s32.totalorder %s26, 0
      %p172 = por %p170, %p171
      %p173 = scmp.ne.s32.totalorder %s165, %s167
      %p174 = scmp.eq.s32.totalorder %s31, 1
      %p175 = por %p173, %p174
      %p176 = scmp.ne.s32.totalorder %s167, %s168
      %p177 = scmp.eq.s32.totalorder %s31, 0
      %p178 = por %p176, %p177
      %p179 = scmp.ne.s32.totalorder %s167, %s168
      %p180 = scmp.eq.s32.totalorder %s32, 1
      %p181 = por %p179, %p180
      %p183 = scmp.ne.s32.totalorder %s168, %s182
      %p184 = scmp.eq.s32.totalorder %s32, 0
      %p185 = por %p183, %p184
      %s187 = sadd.s32 %s186, 1
      %p190 = scmp.eq.s32.totalorder %s26, 1
      %p191 = scmp.ne.s32.totalorder %s186, %s188
      %p192 = scmp.eq.s32.totalorder %s26, 0
      %p193 = por %p191, %p192
      %p194 = scmp.ne.s32.totalorder %s186, %s188
      %p195 = scmp.eq.s32.totalorder %s31, 1
      %p196 = por %p194, %p195
      %p197 = scmp.ne.s32.totalorder %s188, %s189
      %p198 = scmp.eq.s32.totalorder %s31, 0
      %p199 = por %p197, %p198
      %p200 = scmp.ne.s32.totalorder %s188, %s189
      %p201 = scmp.eq.s32.totalorder %s32, 1
      %p202 = por %p200, %p201
      %p204 = scmp.ne.s32.totalorder %s189, %s203
      %p205 = scmp.eq.s32.totalorder %s32, 0
      %p206 = por %p204, %p205
      %s208 = sadd.s32 %s207, 1
      %p211 = scmp.eq.s32.totalorder %s26, 1
      %p212 = scmp.ne.s32.totalorder %s207, %s209
      %p213 = scmp.eq.s32.totalorder %s26, 0
      %p214 = por %p212, %p213
      %p215 = scmp.ne.s32.totalorder %s207, %s209
      %p216 = scmp.eq.s32.totalorder %s31, 1
      %p217 = por %p215, %p216
      %p218 = scmp.ne.s32.totalorder %s209, %s210
      %p219 = scmp.eq.s32.totalorder %s31, 0
      %p220 = por %p218, %p219
      %p221 = scmp.ne.s32.totalorder %s209, %s210
      %p222 = scmp.eq.s32.totalorder %s32, 1
      %p223 = por %p221, %p222
      %p225 = scmp.ne.s32.totalorder %s210, %s224
      %p226 = scmp.eq.s32.totalorder %s32, 0
      %p227 = por %p225, %p226
      %s228 = ssub.s32 %s26, %s33
      %p229 = scmp.eq.s32.totalorder %s228, 0
      %s231 = sadd.s32 %s230, 1
      %s232 = scalar_select %p229, %s230, %s231
      %p235 = pneg %p229
      %p236 = scmp.eq.s32.totalorder %s26, 1
      %p237 = por %p235, %p236
      %p238 = scmp.ne.s32.totalorder %s230, %s233
      %p239 = scmp.eq.s32.totalorder %s26, 0
      %p240 = por %p238, %p239
      %p241 = scmp.ne.s32.totalorder %s230, %s233
      %p242 = scmp.eq.s32.totalorder %s31, 1
      %p243 = por %p241, %p242
      %p244 = scmp.ne.s32.totalorder %s233, %s234
      %p245 = scmp.eq.s32.totalorder %s31, 0
      %p246 = por %p244, %p245
      %p247 = scmp.ne.s32.totalorder %s233, %s234
      %p248 = scmp.eq.s32.totalorder %s32, 1
      %p249 = por %p247, %p248
      %p251 = scmp.ne.s32.totalorder %s234, %s250
      %p252 = scmp.eq.s32.totalorder %s32, 0
      %p253 = por %p251, %p252
      %p254 = scmp.le.s32.totalorder 1, %s26
      %p255 = scmp.lt.s32.totalorder %s26, 3
      %p256 = pnand %p254, %p255
      %p257 = pneg %p256
      // Predicated region
      $region9: #{tpu_custom_call.1} parent=5 // pred_check
        _
      $region10: #{tpu_custom_call.1} parent=5 // pred_check_branch
        %259 = sbr.rel (%p256) target = $region12
      $region11: #{tpu_custom_call.1} parent=5 // pred_region
        %s260 = ssub.s32 %s26, 1
        // Predicated region
        $region13: #{tpu_custom_call.1} parent=11 // pred_check
          %p261 = pneg %p73
        $region14: #{tpu_custom_call.1} parent=11 // pred_check_branch
          %263 = sbr.rel (%p261) target = $region16
        $region15: #{tpu_custom_call.1} parent=11 // pred_region
          %s265 = ssub.s32 512, 512
          %266 = vsyncadd [#allocation7], %s265
          %s267 = sshll.u32 [#allocation6], 4
          %s268 = int_to_ptr.vmem [resolvable:$true] %s267
          %273 = dma.hbm_to_vmem [thread:$0]  %s1, 512, %s268, [#allocation7], 128, 128, 8
        $region16: #{tpu_custom_call.1} parent=11 // pred_fallthru
          _
        // Predicated region
        $region17: #{tpu_custom_call.1} parent=11 // pred_check
          %p274 = pneg %p94
        $region18: #{tpu_custom_call.1} parent=11 // pred_check_branch
          %276 = sbr.rel (%p274) target = $region20
        $region19: #{tpu_custom_call.1} parent=11 // pred_region
          %s278 = ssub.s32 32, 32
          %279 = vsyncadd [#allocation7], %s278
          %s281 = sshll.u32 [#allocation8], 4
          %s282 = int_to_ptr.vmem [resolvable:$true] %s281
          %284 = dma.hbm_to_vmem [thread:$0]  %s2, 32, %s282, [#allocation7]
        $region20: #{tpu_custom_call.1} parent=11 // pred_fallthru
          _
        // Predicated region
        $region21: #{tpu_custom_call.1} parent=11 // pred_check
          %p285 = pneg %p115
        $region22: #{tpu_custom_call.1} parent=11 // pred_check_branch
          %287 = sbr.rel (%p285) target = $region24
        $region23: #{tpu_custom_call.1} parent=11 // pred_region
          %s289 = ssub.s32 8192, 8192
          %290 = vsyncadd [#allocation10], %s289
          %s291 = sshll.u32 [#allocation9], 4
          %s292 = int_to_ptr.vmem [resolvable:$true] %s291
          %297 = dma.hbm_to_vmem [thread:$0]  %s3, 8192, %s292, [#allocation10], 128, 128, 8
        $region24: #{tpu_custom_call.1} parent=11 // pred_fallthru
          _
        // Predicated region
        $region25: #{tpu_custom_call.1} parent=11 // pred_check
          %p298 = pneg %p136
        $region26: #{tpu_custom_call.1} parent=11 // pred_check_branch
          %300 = sbr.rel (%p298) target = $region28
        $region27: #{tpu_custom_call.1} parent=11 // pred_region
          %s302 = ssub.s32 64, 64
          %303 = vsyncadd [#allocation10], %s302
          %s304 = sshll.u32 [#allocation11], 4
          %s305 = int_to_ptr.vmem [resolvable:$true] %s304
          %310 = dma.hbm_to_vmem [thread:$0]  %s4, 64, %s305, [#allocation10], 32, 32, 2
        $region28: #{tpu_custom_call.1} parent=11 // pred_fallthru
          _
        // Predicated region
        $region29: #{tpu_custom_call.1} parent=11 // pred_check
          %p311 = pneg %p157
        $region30: #{tpu_custom_call.1} parent=11 // pred_check_branch
          %313 = sbr.rel (%p311) target = $region32
        $region31: #{tpu_custom_call.1} parent=11 // pred_region
          %s315 = ssub.s32 64, 64
          %316 = vsyncadd [#allocation13], %s315
          %s317 = sshll.u32 [#allocation12], 4
          %s318 = int_to_ptr.vmem [resolvable:$true] %s317
          %323 = dma.hbm_to_vmem [thread:$0]  %s5, 64, %s318, [#allocation13], 32, 32, 2
        $region32: #{tpu_custom_call.1} parent=11 // pred_fallthru
          _
        // Predicated region
        $region33: #{tpu_custom_call.1} parent=11 // pred_check
          %p324 = pneg %p178
        $region34: #{tpu_custom_call.1} parent=11 // pred_check_branch
          %326 = sbr.rel (%p324) target = $region36
        $region35: #{tpu_custom_call.1} parent=11 // pred_region
          %s328 = ssub.s32 64, 64
          %329 = vsyncadd [#allocation13], %s328
          %s330 = sshll.u32 [#allocation14], 4
          %s331 = int_to_ptr.vmem [resolvable:$true] %s330
          %336 = dma.hbm_to_vmem [thread:$0]  %s6, 64, %s331, [#allocation13], 32, 32, 2
        $region36: #{tpu_custom_call.1} parent=11 // pred_fallthru
          _
        // Predicated region
        $region37: #{tpu_custom_call.1} parent=11 // pred_check
          %p337 = pneg %p199
        $region38: #{tpu_custom_call.1} parent=11 // pred_check_branch
          %339 = sbr.rel (%p337) target = $region40
        $region39: #{tpu_custom_call.1} parent=11 // pred_region
          %s341 = ssub.s32 128, 128
          %342 = vsyncadd [#allocation16], %s341
          %s344 = sshll.u32 [#allocation15], 4
          %s345 = int_to_ptr.vmem [resolvable:$true] %s344
          %347 = dma.hbm_to_vmem [thread:$0]  %s7, 128, %s345, [#allocation16]
        $region40: #{tpu_custom_call.1} parent=11 // pred_fallthru
          _
        // Predicated region
        $region41: #{tpu_custom_call.1} parent=11 // pred_check
          %p348 = pneg %p220
        $region42: #{tpu_custom_call.1} parent=11 // pred_check_branch
          %350 = sbr.rel (%p348) target = $region44
        $region43: #{tpu_custom_call.1} parent=11 // pred_region
          _
        $region44: #{tpu_custom_call.1} parent=11 // pred_fallthru
          _
      $region12: #{tpu_custom_call.1} parent=5 // pred_fallthru
        _
      %p351 = scmp.lt.s32.totalorder %s26, 2
      // Predicated region
      $region45: #{tpu_custom_call.1} parent=5 // pred_check
        %p352 = pneg %p351
      $region46: #{tpu_custom_call.1} parent=5 // pred_check_branch
        %354 = sbr.rel (%p352) target = $region48
      $region47: #{tpu_custom_call.1} parent=5 // pred_region
        // Predicated region
        $region49: #{tpu_custom_call.1} parent=47 // pred_check
          %p355 = pneg %p46
        $region50: #{tpu_custom_call.1} parent=47 // pred_check_branch
          %357 = sbr.rel (%p355) target = $region52
        $region51: #{tpu_custom_call.1} parent=47 // pred_region
          %s358 = sand.u32 %s36, 1
          %s359 = scalar_lea.sflag [#allocation4], %s358
          %s360 = sand.u32 %s36, 1
          %s361 = smul.addr %s360, 64
          %s362 = scalar_lea.vmem [#allocation3], %s361
          %s363 = smul.u32 16, %s26
          %s365 = ssub.s32 1024, 1024
          %366 = vsyncadd %s359, %s365
          %s367 = smul.addr %s363, 64
          %s368 = scalar_lea.hbm %s0, %s367
          %s369 = sshll.u32 %s362, 4
          %s370 = int_to_ptr.vmem [resolvable:$true] %s369
          %375 = dma.hbm_to_vmem [thread:$0]  %s368, 1024, %s370, %s359, 64, 64, 4
        $region52: #{tpu_custom_call.1} parent=47 // pred_fallthru
          _
      $region48: #{tpu_custom_call.1} parent=5 // pred_fallthru
        _
      %p376 = scmp.le.s32.totalorder 1, %s26
      %p377 = scmp.lt.s32.totalorder %s26, 3
      %p378 = pnand %p376, %p377
      %p379 = pneg %p378
      // Predicated region
      $region53: #{tpu_custom_call.1} parent=5 // pred_check
        _
      $region54: #{tpu_custom_call.1} parent=5 // pred_check_branch
        %381 = sbr.rel (%p378) target = $region56
      $region55: #{tpu_custom_call.1} parent=5 // pred_region
        %s382 = ssub.s32 %s26, 1
        %s383 = sand.u32 %s39, 1
        %s384 = scalar_lea.sflag [#allocation4], %s383
        %s385 = sand.u32 %s39, 1
        %s386 = smul.addr %s385, 64
        %s387 = scalar_lea.vmem [#allocation3], %s386
        // Predicated region
        $region57: #{tpu_custom_call.1} parent=55 // pred_check
          %p388 = pneg %p52
        $region58: #{tpu_custom_call.1} parent=55 // pred_check_branch
          %390 = sbr.rel (%p388) target = $region60
        $region59: #{tpu_custom_call.1} parent=55 // pred_region
          %391 = dma.done %s384, 1024
        $region60: #{tpu_custom_call.1} parent=55 // pred_fallthru
          _
        // Predicated region
        $region61: #{tpu_custom_call.1} parent=55 // pred_check
          %p392 = pneg %p73
        $region62: #{tpu_custom_call.1} parent=55 // pred_check_branch
          %394 = sbr.rel (%p392) target = $region64
        $region63: #{tpu_custom_call.1} parent=55 // pred_region
          %395 = dma.done [#allocation7], 512
        $region64: #{tpu_custom_call.1} parent=55 // pred_fallthru
          _
        // Predicated region
        $region65: #{tpu_custom_call.1} parent=55 // pred_check
          %p396 = pneg %p94
        $region66: #{tpu_custom_call.1} parent=55 // pred_check_branch
          %398 = sbr.rel (%p396) target = $region68
        $region67: #{tpu_custom_call.1} parent=55 // pred_region
          %399 = dma.done [#allocation7], 32
        $region68: #{tpu_custom_call.1} parent=55 // pred_fallthru
          _
        // Predicated region
        $region69: #{tpu_custom_call.1} parent=55 // pred_check
          %p400 = pneg %p115
        $region70: #{tpu_custom_call.1} parent=55 // pred_check_branch
          %402 = sbr.rel (%p400) target = $region72
        $region71: #{tpu_custom_call.1} parent=55 // pred_region
          %403 = dma.done [#allocation10], 8192
        $region72: #{tpu_custom_call.1} parent=55 // pred_fallthru
          _
        // Predicated region
        $region73: #{tpu_custom_call.1} parent=55 // pred_check
          %p404 = pneg %p136
        $region74: #{tpu_custom_call.1} parent=55 // pred_check_branch
          %406 = sbr.rel (%p404) target = $region76
        $region75: #{tpu_custom_call.1} parent=55 // pred_region
          %407 = dma.done [#allocation10], 64
        $region76: #{tpu_custom_call.1} parent=55 // pred_fallthru
          _
        // Predicated region
        $region77: #{tpu_custom_call.1} parent=55 // pred_check
          %p408 = pneg %p157
        $region78: #{tpu_custom_call.1} parent=55 // pred_check_branch
          %410 = sbr.rel (%p408) target = $region80
        $region79: #{tpu_custom_call.1} parent=55 // pred_region
          %411 = dma.done [#allocation13], 64
        $region80: #{tpu_custom_call.1} parent=55 // pred_fallthru
          _
        // Predicated region
        $region81: #{tpu_custom_call.1} parent=55 // pred_check
          %p412 = pneg %p178
        $region82: #{tpu_custom_call.1} parent=55 // pred_check_branch
          %414 = sbr.rel (%p412) target = $region84
        $region83: #{tpu_custom_call.1} parent=55 // pred_region
          %415 = dma.done [#allocation13], 64
        $region84: #{tpu_custom_call.1} parent=55 // pred_fallthru
          _
        // Predicated region
        $region85: #{tpu_custom_call.1} parent=55 // pred_check
          %p416 = pneg %p199
        $region86: #{tpu_custom_call.1} parent=55 // pred_check_branch
          %418 = sbr.rel (%p416) target = $region88
        $region87: #{tpu_custom_call.1} parent=55 // pred_region
          %419 = dma.done [#allocation16], 128
        $region88: #{tpu_custom_call.1} parent=55 // pred_fallthru
          _
        %s420 = sand.u32 %s39, 1
        %s421 = scalar_lea.sflag [#allocation4], %s420
        %s422 = sand.u32 %s39, 1
        %s423 = smul.addr %s422, 64
        %s424 = scalar_lea.vmem [#allocation3], %s423
        %p425 = pneg %p52
        %p426 = pneg %p49
        %p427 = pneg %p73
        %p428 = pneg %p70
        %p429 = pneg %p94
        %p430 = pneg %p91
        %p431 = pneg %p115
        %p432 = pneg %p112
        %p433 = pneg %p136
        %p434 = pneg %p133
        %p435 = pneg %p157
        %p436 = pneg %p154
        %p437 = pneg %p178
        %p438 = pneg %p175
        %p439 = pneg %p199
        %p440 = pneg %p196
        %p441 = pneg %p220
        %p442 = pneg %p217
        %p443 = pneg %p246
        %p444 = pneg %p243
        %s445 = sand.u32 %s233, 1
        %s446 = scalar_lea.sflag [#allocation5], %s445
        %s447 = sand.u32 %s233, 1
        %s448 = scalar_lea.vmem [#allocation17], %s447
        %s449 = smul.u32 16, %s31
        %v451 = vld [vmem:[%s387] sm:$0xf]
        %v452 = vld [vmem:[%s387 + $0x4] sm:$0xf]
        %v453 = vld [vmem:[%s387 + $0x8] sm:$0xf]
        %v454 = vld [vmem:[%s387 + $0xc] sm:$0xf]
        %v455 = vld [vmem:[%s387 + $0x10] sm:$0xf]
        %v456 = vld [vmem:[%s387 + $0x14] sm:$0xf]
        %v457 = vld [vmem:[%s387 + $0x18] sm:$0xf]
        %v458 = vld [vmem:[%s387 + $0x1c] sm:$0xf]
        %v459 = vld [vmem:[%s387 + $0x20] sm:$0xf]
        %v460 = vld [vmem:[%s387 + $0x24] sm:$0xf]
        %v461 = vld [vmem:[%s387 + $0x28] sm:$0xf]
        %v462 = vld [vmem:[%s387 + $0x2c] sm:$0xf]
        %v463 = vld [vmem:[%s387 + $0x30] sm:$0xf]
        %v464 = vld [vmem:[%s387 + $0x34] sm:$0xf]
        %v465 = vld [vmem:[%s387 + $0x38] sm:$0xf]
        %v466 = vld [vmem:[%s387 + $0x3c] sm:$0xf]
        %v467 = vld [vmem:[#allocation6] sm:$0xff]
        %v468 = vld [vmem:[#allocation6 + $0x8] sm:$0xff]
        %v469 = vld [vmem:[#allocation6 + $0x10] sm:$0xff]
        %v470 = vld [vmem:[#allocation6 + $0x18] sm:$0xff]
        %v471 = vld [vmem:[#allocation8] sm:$0x3]
        %v473 = vlaneseq
        %v474 = vshrl.u32 %v473, 7
        %v475 = vsub.s32 0, %v474
        %v476 = vrot.slane %v471, %v475
        %v477 = vlaneseq
        %v478 = vshrl.u32 %v477, 7
        %v479 = vsub.s32 1, %v478
        %v480 = vrot.slane %v471, %v479
        %v499 = vunpack.c.l.b16 %v451
        %v500 = vunpack.c.l.b16 %v452
        %v501 = vunpack.c.l.b16 %v453
        %v502 = vunpack.c.l.b16 %v454
        %v503 = vunpack.c.l.b16 %v455
        %v504 = vunpack.c.l.b16 %v456
        %v505 = vunpack.c.l.b16 %v457
        %v506 = vunpack.c.l.b16 %v458
        %v507 = vunpack.c.l.b16 %v459
        %v508 = vunpack.c.l.b16 %v460
        %v509 = vunpack.c.l.b16 %v461
        %v510 = vunpack.c.l.b16 %v462
        %v511 = vunpack.c.l.b16 %v463
        %v512 = vunpack.c.l.b16 %v464
        %v513 = vunpack.c.l.b16 %v465
        %v514 = vunpack.c.l.b16 %v466
        %v515 = vpack.c.b16 %v500, %v499
        %v516 = vpack.c.b16 %v502, %v501
        %v517 = vpack.c.b16 %v504, %v503
        %v518 = vpack.c.b16 %v506, %v505
        %v519 = vpack.c.b16 %v508, %v507
        %v520 = vpack.c.b16 %v510, %v509
        %v521 = vpack.c.b16 %v512, %v511
        %v522 = vpack.c.b16 %v514, %v513
        %v527 = vunpack.c.l.b16 %v467
        %v528 = vunpack.c.h.b16 %v467
        %v529 = vunpack.c.l.b16 %v468
        %v530 = vunpack.c.h.b16 %v468
        %v531 = vunpack.c.l.b16 %v469
        %v532 = vunpack.c.h.b16 %v469
        %v533 = vunpack.c.l.b16 %v470
        %v534 = vunpack.c.h.b16 %v470
        %v535 = vpack.c.b16 %v529, %v527
        %v536 = vpack.c.b16 %v530, %v528
        %v537 = vpack.c.b16 %v533, %v531
        %v538 = vpack.c.b16 %v534, %v532
        %vm543 = vcmask 261120
        %v545 = vsel %vm543, %v515, 0
        %v548 = vsel %vm543, %v516, 0
        %v551 = vsel %vm543, %v517, 0
        %v554 = vsel %vm543, %v518, 0
        %v557 = vsel %vm543, %v519, 0
        %v560 = vsel %vm543, %v520, 0
        %v563 = vsel %vm543, %v521, 0
        %v566 = vsel %vm543, %v522, 0
        %568 = vmatprep.subr.bf16.mxu0 %v536
        %569 = vmatpush1.bf16.msra.mxu0 %v535
        %570 = vmatprep.subr.bf16.mxu0 %v538
        %571 = vmatpush1.bf16.msra.mxu0 %v537
        %572 = vmatprep.subr.bf16.mxu0 0
        %573 = vmatpush1.bf16.msra.mxu0 0
        %574 = vmatprep.subr.bf16.mxu0 0
        %575 = vmatpush1.bf16.msra.mxu0 0
        %576 = vmatprep.subr.bf16.mxu0 0
        %577 = vmatpush1.bf16.msra.mxu0 0
        %578 = vmatprep.subr.bf16.mxu0 0
        %579 = vmatpush1.bf16.msra.mxu0 0
        %580 = vmatprep.subr.bf16.mxu0 0
        %581 = vmatpush1.bf16.msra.mxu0 0
        %582 = vmatprep.subr.bf16.mxu0 0
        %583 = vmatpush1.bf16.msra.mxu0 0
        %584 = vmatprep.subr.bf16.mxu0 0
        %585 = vmatpush1.bf16.msra.mxu0 0
        %586 = vmatprep.subr.bf16.mxu0 0
        %587 = vmatpush1.bf16.msra.mxu0 0
        %588 = vmatprep.subr.bf16.mxu0 0
        %589 = vmatpush1.bf16.msra.mxu0 0
        %590 = vmatprep.subr.bf16.mxu0 0
        %591 = vmatpush1.bf16.msra.mxu0 0
        %592 = vmatprep.subr.bf16.mxu0 0
        %593 = vmatpush1.bf16.msra.mxu0 0
        %594 = vmatprep.subr.bf16.mxu0 0
        %595 = vmatpush1.bf16.msra.mxu0 0
        %596 = vmatprep.subr.bf16.mxu0 0
        %597 = vmatpush1.bf16.msra.mxu0 0
        %598 = vmatprep.subr.bf16.mxu0 0
        %599 = vmatpush1.bf16.msra.mxu0 0
        %600 = vmatprep.mubr.bf16.mxu0 0
        %601 = vmatmul.mubr.bf16.gmra.mrb[0].mxu0 %v545
        %v602 = vpop.f32.mrb[0].mxu0
        %v603 = vadd.f32 %v476, %v602
        %v604 = vpop.f32.mrb[0].mxu0
        %v605 = vadd.f32 %v480, %v604
        %v606 = vpop.f32.mrb[0].mxu0
        %v607 = vadd.f32 %v476, %v606
        %v608 = vpop.f32.mrb[0].mxu0
        %v609 = vadd.f32 %v480, %v608
        %610 = vmatprep.mubr.bf16.mxu0 0
        %611 = vmatmul.mubr.bf16.gmra.mrb[0].mxu0 %v548
        %v612 = vpop.f32.mrb[0].mxu0
        %v613 = vadd.f32 %v476, %v612
        %v614 = vpop.f32.mrb[0].mxu0
        %v615 = vadd.f32 %v480, %v614
        %v616 = vpop.f32.mrb[0].mxu0
        %v617 = vadd.f32 %v476, %v616
        %v618 = vpop.f32.mrb[0].mxu0
        %v619 = vadd.f32 %v480, %v618
        %620 = vmatprep.mubr.bf16.mxu0 0
        %621 = vmatmul.mubr.bf16.gmra.mrb[0].mxu0 %v551
        %v622 = vpop.f32.mrb[0].mxu0
        %v623 = vadd.f32 %v476, %v622
        %v624 = vpop.f32.mrb[0].mxu0
        %v625 = vadd.f32 %v480, %v624
        %v626 = vpop.f32.mrb[0].mxu0
        %v627 = vadd.f32 %v476, %v626
        %v628 = vpop.f32.mrb[0].mxu0
        %v629 = vadd.f32 %v480, %v628
        %630 = vmatprep.mubr.bf16.mxu0 0
        %631 = vmatmul.mubr.bf16.gmra.mrb[0].mxu0 %v554
        %v632 = vpop.f32.mrb[0].mxu0
        %v633 = vadd.f32 %v476, %v632
        %v634 = vpop.f32.mrb[0].mxu0
        %v635 = vadd.f32 %v480, %v634
        %v636 = vpop.f32.mrb[0].mxu0
        %v637 = vadd.f32 %v476, %v636
        %v638 = vpop.f32.mrb[0].mxu0
        %v639 = vadd.f32 %v480, %v638
        %640 = vmatprep.mubr.bf16.mxu0 0
        %641 = vmatmul.mubr.bf16.gmra.mrb[0].mxu0 %v557
        %v642 = vpop.f32.mrb[0].mxu0
        %v643 = vadd.f32 %v476, %v642
        %v644 = vpop.f32.mrb[0].mxu0
        %v645 = vadd.f32 %v480, %v644
        %v646 = vpop.f32.mrb[0].mxu0
        %v647 = vadd.f32 %v476, %v646
        %v648 = vpop.f32.mrb[0].mxu0
        %v649 = vadd.f32 %v480, %v648
        %650 = vmatprep.mubr.bf16.mxu0 0
        %651 = vmatmul.mubr.bf16.gmra.mrb[0].mxu0 %v560
        %v652 = vpop.f32.mrb[0].mxu0
        %v653 = vadd.f32 %v476, %v652
        %v654 = vpop.f32.mrb[0].mxu0
        %v655 = vadd.f32 %v480, %v654
        %v656 = vpop.f32.mrb[0].mxu0
        %v657 = vadd.f32 %v476, %v656
        %v658 = vpop.f32.mrb[0].mxu0
        %v659 = vadd.f32 %v480, %v658
        %660 = vmatprep.mubr.bf16.mxu0 0
        %661 = vmatmul.mubr.bf16.gmra.mrb[0].mxu0 %v563
        %v662 = vpop.f32.mrb[0].mxu0
        %v663 = vadd.f32 %v476, %v662
        %v664 = vpop.f32.mrb[0].mxu0
        %v665 = vadd.f32 %v480, %v664
        %v666 = vpop.f32.mrb[0].mxu0
        %v667 = vadd.f32 %v476, %v666
        %v668 = vpop.f32.mrb[0].mxu0
        %v669 = vadd.f32 %v480, %v668
        %670 = vmatprep.mubr.bf16.mxu0 0
        %671 = vmatmul.mubr.bf16.gmra.mrb[0].mxu0 %v566
        %v672 = vpop.f32.mrb[0].mxu0
        %v673 = vadd.f32 %v476, %v672
        %v674 = vpop.f32.mrb[0].mxu0
        %v675 = vadd.f32 %v480, %v674
        %v676 = vpop.f32.mrb[0].mxu0
        %v677 = vadd.f32 %v476, %v676
        %v678 = vpop.f32.mrb[0].mxu0
        %v679 = vadd.f32 %v480, %v678
        %680 = vdwg.mxu0
        %v681 = vmax.f32 %v603, 0.0
        %v682 = vmax.f32 %v605, 0.0
        %v683 = vmax.f32 %v607, 0.0
        %v684 = vmax.f32 %v609, 0.0
        %v685 = vmax.f32 %v613, 0.0
        %v686 = vmax.f32 %v615, 0.0
        %v687 = vmax.f32 %v617, 0.0
        %v688 = vmax.f32 %v619, 0.0
        %v689 = vmax.f32 %v623, 0.0
        %v690 = vmax.f32 %v625, 0.0
        %v691 = vmax.f32 %v627, 0.0
        %v692 = vmax.f32 %v629, 0.0
        %v693 = vmax.f32 %v633, 0.0
        %v694 = vmax.f32 %v635, 0.0
        %v695 = vmax.f32 %v637, 0.0
        %v696 = vmax.f32 %v639, 0.0
        %v697 = vmax.f32 %v643, 0.0
        %v698 = vmax.f32 %v645, 0.0
        %v699 = vmax.f32 %v647, 0.0
        %v700 = vmax.f32 %v649, 0.0
        %v701 = vmax.f32 %v653, 0.0
        %v702 = vmax.f32 %v655, 0.0
        %v703 = vmax.f32 %v657, 0.0
        %v704 = vmax.f32 %v659, 0.0
        %v705 = vmax.f32 %v663, 0.0
        %v706 = vmax.f32 %v665, 0.0
        %v707 = vmax.f32 %v667, 0.0
        %v708 = vmax.f32 %v669, 0.0
        %v709 = vmax.f32 %v673, 0.0
        %v710 = vmax.f32 %v675, 0.0
        %v711 = vmax.f32 %v677, 0.0
        %v712 = vmax.f32 %v679, 0.0
        %v713 = vpack.c.bf16 %v683, %v681
        %v714 = vpack.c.bf16 %v684, %v682
        %v715 = vpack.c.bf16 %v687, %v685
        %v716 = vpack.c.bf16 %v688, %v686
        %v717 = vpack.c.bf16 %v691, %v689
        %v718 = vpack.c.bf16 %v692, %v690
        %v719 = vpack.c.bf16 %v695, %v693
        %v720 = vpack.c.bf16 %v696, %v694
        %v721 = vpack.c.bf16 %v699, %v697
        %v722 = vpack.c.bf16 %v700, %v698
        %v723 = vpack.c.bf16 %v703, %v701
        %v724 = vpack.c.bf16 %v704, %v702
        %v725 = vpack.c.bf16 %v707, %v705
        %v726 = vpack.c.bf16 %v708, %v706
        %v727 = vpack.c.bf16 %v711, %v709
        %v728 = vpack.c.bf16 %v712, %v710
        %v729 = vld [vmem:[#allocation9] sm:$0xff]
        %v730 = vld [vmem:[#allocation9 + $0x8] sm:$0xff]
        %v731 = vld [vmem:[#allocation9 + $0x10] sm:$0xff]
        %v732 = vld [vmem:[#allocation9 + $0x18] sm:$0xff]
        %v733 = vld [vmem:[#allocation9 + $0x20] sm:$0xff]
        %v734 = vld [vmem:[#allocation9 + $0x28] sm:$0xff]
        %v735 = vld [vmem:[#allocation9 + $0x30] sm:$0xff]
        %v736 = vld [vmem:[#allocation9 + $0x38] sm:$0xff]
        %v737 = vld [vmem:[#allocation9 + $0x40] sm:$0xff]
        %v738 = vld [vmem:[#allocation9 + $0x48] sm:$0xff]
        %v739 = vld [vmem:[#allocation9 + $0x50] sm:$0xff]
        %v740 = vld [vmem:[#allocation9 + $0x58] sm:$0xff]
        %v741 = vld [vmem:[#allocation9 + $0x60] sm:$0xff]
        %v742 = vld [vmem:[#allocation9 + $0x68] sm:$0xff]
        %v743 = vld [vmem:[#allocation9 + $0x70] sm:$0xff]
        %v744 = vld [vmem:[#allocation9 + $0x78] sm:$0xff]
        %v745 = vld [vmem:[#allocation9 + $0x80] sm:$0xff]
        %v746 = vld [vmem:[#allocation9 + $0x88] sm:$0xff]
        %v747 = vld [vmem:[#allocation9 + $0x90] sm:$0xff]
        %v748 = vld [vmem:[#allocation9 + $0x98] sm:$0xff]
        %v749 = vld [vmem:[#allocation9 + $0xa0] sm:$0xff]
        %v750 = vld [vmem:[#allocation9 + $0xa8] sm:$0xff]
        %v751 = vld [vmem:[#allocation9 + $0xb0] sm:$0xff]
        %v752 = vld [vmem:[#allocation9 + $0xb8] sm:$0xff]
        %v753 = vld [vmem:[#allocation9 + $0xc0] sm:$0xff]
        %v754 = vld [vmem:[#allocation9 + $0xc8] sm:$0xff]
        %v755 = vld [vmem:[#allocation9 + $0xd0] sm:$0xff]
        %v756 = vld [vmem:[#allocation9 + $0xd8] sm:$0xff]
        %v757 = vld [vmem:[#allocation9 + $0xe0] sm:$0xff]
        %v758 = vld [vmem:[#allocation9 + $0xe8] sm:$0xff]
        %v759 = vld [vmem:[#allocation9 + $0xf0] sm:$0xff]
        %v760 = vld [vmem:[#allocation9 + $0xf8] sm:$0xff]
        %v761 = vld [vmem:[#allocation11] sm:$0x3]
        %v763 = vlaneseq
        %v764 = vshrl.u32 %v763, 7
        %v765 = vsub.s32 0, %v764
        %v766 = vrot.slane %v761, %v765
        %v767 = vlaneseq
        %v768 = vshrl.u32 %v767, 7
        %v769 = vsub.s32 1, %v768
        %v770 = vrot.slane %v761, %v769
        %v805 = vunpack.c.l.b16 %v729
        %v806 = vunpack.c.h.b16 %v729
        %v807 = vunpack.c.l.b16 %v730
        %v808 = vunpack.c.h.b16 %v730
        %v809 = vunpack.c.l.b16 %v731
        %v810 = vunpack.c.h.b16 %v731
        %v811 = vunpack.c.l.b16 %v732
        %v812 = vunpack.c.h.b16 %v732
        %v813 = vunpack.c.l.b16 %v733
        %v814 = vunpack.c.h.b16 %v733
        %v815 = vunpack.c.l.b16 %v734
        %v816 = vunpack.c.h.b16 %v734
        %v817 = vunpack.c.l.b16 %v735
        %v818 = vunpack.c.h.b16 %v735
        %v819 = vunpack.c.l.b16 %v736
        %v820 = vunpack.c.h.b16 %v736
        %v821 = vunpack.c.l.b16 %v737
        %v822 = vunpack.c.h.b16 %v737
        %v823 = vunpack.c.l.b16 %v738
        %v824 = vunpack.c.h.b16 %v738
        %v825 = vunpack.c.l.b16 %v739
        %v826 = vunpack.c.h.b16 %v739
        %v827 = vunpack.c.l.b16 %v740
        %v828 = vunpack.c.h.b16 %v740
        %v829 = vunpack.c.l.b16 %v741
        %v830 = vunpack.c.h.b16 %v741
        %v831 = vunpack.c.l.b16 %v742
        %v832 = vunpack.c.h.b16 %v742
        %v833 = vunpack.c.l.b16 %v743
        %v834 = vunpack.c.h.b16 %v743
        %v835 = vunpack.c.l.b16 %v744
        %v836 = vunpack.c.h.b16 %v744
        %v837 = vunpack.c.l.b16 %v745
        %v838 = vunpack.c.h.b16 %v745
        %v839 = vunpack.c.l.b16 %v746
        %v840 = vunpack.c.h.b16 %v746
        %v841 = vunpack.c.l.b16 %v747
        %v842 = vunpack.c.h.b16 %v747
        %v843 = vunpack.c.l.b16 %v748
        %v844 = vunpack.c.h.b16 %v748
        %v845 = vunpack.c.l.b16 %v749
        %v846 = vunpack.c.h.b16 %v749
        %v847 = vunpack.c.l.b16 %v750
        %v848 = vunpack.c.h.b16 %v750
        %v849 = vunpack.c.l.b16 %v751
        %v850 = vunpack.c.h.b16 %v751
        %v851 = vunpack.c.l.b16 %v752
        %v852 = vunpack.c.h.b16 %v752
        %v853 = vunpack.c.l.b16 %v753
        %v854 = vunpack.c.h.b16 %v753
        %v855 = vunpack.c.l.b16 %v754
        %v856 = vunpack.c.h.b16 %v754
        %v857 = vunpack.c.l.b16 %v755
        %v858 = vunpack.c.h.b16 %v755
        %v859 = vunpack.c.l.b16 %v756
        %v860 = vunpack.c.h.b16 %v756
        %v861 = vunpack.c.l.b16 %v757
        %v862 = vunpack.c.h.b16 %v757
        %v863 = vunpack.c.l.b16 %v758
        %v864 = vunpack.c.h.b16 %v758
        %v865 = vunpack.c.l.b16 %v759
        %v866 = vunpack.c.h.b16 %v759
        %v867 = vunpack.c.l.b16 %v760
        %v868 = vunpack.c.h.b16 %v760
        %v869 = vpack.c.b16 %v807, %v805
        %v870 = vpack.c.b16 %v808, %v806
        %v871 = vpack.c.b16 %v811, %v809
        %v872 = vpack.c.b16 %v812, %v810
        %v873 = vpack.c.b16 %v815, %v813
        %v874 = vpack.c.b16 %v816, %v814
        %v875 = vpack.c.b16 %v819, %v817
        %v876 = vpack.c.b16 %v820, %v818
        %v877 = vpack.c.b16 %v823, %v821
        %v878 = vpack.c.b16 %v824, %v822
        %v879 = vpack.c.b16 %v827, %v825
        %v880 = vpack.c.b16 %v828, %v826
        %v881 = vpack.c.b16 %v831, %v829
        %v882 = vpack.c.b16 %v832, %v830
        %v883 = vpack.c.b16 %v835, %v833
        %v884 = vpack.c.b16 %v836, %v834
        %v885 = vpack.c.b16 %v839, %v837
        %v886 = vpack.c.b16 %v840, %v838
        %v887 = vpack.c.b16 %v843, %v841
        %v888 = vpack.c.b16 %v844, %v842
        %v889 = vpack.c.b16 %v847, %v845
        %v890 = vpack.c.b16 %v848, %v846
        %v891 = vpack.c.b16 %v851, %v849
        %v892 = vpack.c.b16 %v852, %v850
        %v893 = vpack.c.b16 %v855, %v853
        %v894 = vpack.c.b16 %v856, %v854
        %v895 = vpack.c.b16 %v859, %v857
        %v896 = vpack.c.b16 %v860, %v858
        %v897 = vpack.c.b16 %v863, %v861
        %v898 = vpack.c.b16 %v864, %v862
        %v899 = vpack.c.b16 %v867, %v865
        %v900 = vpack.c.b16 %v868, %v866
        %933 = vmatprep.subr.bf16.mxu0 %v870
        %934 = vmatpush1.bf16.msra.mxu0 %v869
        %935 = vmatprep.subr.bf16.mxu0 %v872
        %936 = vmatpush1.bf16.msra.mxu0 %v871
        %937 = vmatprep.subr.bf16.mxu0 %v874
        %938 = vmatpush1.bf16.msra.mxu0 %v873
        %939 = vmatprep.subr.bf16.mxu0 %v876
        %940 = vmatpush1.bf16.msra.mxu0 %v875
        %941 = vmatprep.subr.bf16.mxu0 %v878
        %942 = vmatpush1.bf16.msra.mxu0 %v877
        %943 = vmatprep.subr.bf16.mxu0 %v880
        %944 = vmatpush1.bf16.msra.mxu0 %v879
        %945 = vmatprep.subr.bf16.mxu0 %v882
        %946 = vmatpush1.bf16.msra.mxu0 %v881
        %947 = vmatprep.subr.bf16.mxu0 %v884
        %948 = vmatpush1.bf16.msra.mxu0 %v883
        %949 = vmatprep.subr.bf16.mxu0 %v886
        %950 = vmatpush1.bf16.msra.mxu0 %v885
        %951 = vmatprep.subr.bf16.mxu0 %v888
        %952 = vmatpush1.bf16.msra.mxu0 %v887
        %953 = vmatprep.subr.bf16.mxu0 %v890
        %954 = vmatpush1.bf16.msra.mxu0 %v889
        %955 = vmatprep.subr.bf16.mxu0 %v892
        %956 = vmatpush1.bf16.msra.mxu0 %v891
        %957 = vmatprep.subr.bf16.mxu0 %v894
        %958 = vmatpush1.bf16.msra.mxu0 %v893
        %959 = vmatprep.subr.bf16.mxu0 %v896
        %960 = vmatpush1.bf16.msra.mxu0 %v895
        %961 = vmatprep.subr.bf16.mxu0 %v898
        %962 = vmatpush1.bf16.msra.mxu0 %v897
        %963 = vmatprep.subr.bf16.mxu0 %v900
        %964 = vmatpush1.bf16.msra.mxu0 %v899
        %965 = vmatprep.mubr.bf16.mxu0 %v714
        %966 = vmatmul.mubr.bf16.gmra.mrb[0].mxu0 %v713
        %v967 = vpop.f32.mrb[0].mxu0
        %v968 = vadd.f32 %v766, %v967
        %v969 = vpop.f32.mrb[0].mxu0
        %v970 = vadd.f32 %v770, %v969
        %v971 = vpop.f32.mrb[0].mxu0
        %v972 = vadd.f32 %v766, %v971
        %v973 = vpop.f32.mrb[0].mxu0
        %v974 = vadd.f32 %v770, %v973
        %975 = vmatprep.mubr.bf16.mxu0 %v716
        %976 = vmatmul.mubr.bf16.gmra.mrb[0].mxu0 %v715
        %v977 = vpop.f32.mrb[0].mxu0
        %v978 = vadd.f32 %v766, %v977
        %v979 = vpop.f32.mrb[0].mxu0
        %v980 = vadd.f32 %v770, %v979
        %v981 = vpop.f32.mrb[0].mxu0
        %v982 = vadd.f32 %v766, %v981
        %v983 = vpop.f32.mrb[0].mxu0
        %v984 = vadd.f32 %v770, %v983
        %985 = vmatprep.mubr.bf16.mxu0 %v718
        %986 = vmatmul.mubr.bf16.gmra.mrb[0].mxu0 %v717
        %v987 = vpop.f32.mrb[0].mxu0
        %v988 = vadd.f32 %v766, %v987
        %v989 = vpop.f32.mrb[0].mxu0
        %v990 = vadd.f32 %v770, %v989
        %v991 = vpop.f32.mrb[0].mxu0
        %v992 = vadd.f32 %v766, %v991
        %v993 = vpop.f32.mrb[0].mxu0
        %v994 = vadd.f32 %v770, %v993
        %995 = vmatprep.mubr.bf16.mxu0 %v720
        %996 = vmatmul.mubr.bf16.gmra.mrb[0].mxu0 %v719
        %v997 = vpop.f32.mrb[0].mxu0
        %v998 = vadd.f32 %v766, %v997
        %v999 = vpop.f32.mrb[0].mxu0
        %v1000 = vadd.f32 %v770, %v999
        %v1001 = vpop.f32.mrb[0].mxu0
        %v1002 = vadd.f32 %v766, %v1001
        %v1003 = vpop.f32.mrb[0].mxu0
        %v1004 = vadd.f32 %v770, %v1003
        %1005 = vmatprep.mubr.bf16.mxu0 %v722
        %1006 = vmatmul.mubr.bf16.gmra.mrb[0].mxu0 %v721
        %v1007 = vpop.f32.mrb[0].mxu0
        %v1008 = vadd.f32 %v766, %v1007
        %v1009 = vpop.f32.mrb[0].mxu0
        %v1010 = vadd.f32 %v770, %v1009
        %v1011 = vpop.f32.mrb[0].mxu0
        %v1012 = vadd.f32 %v766, %v1011
        %v1013 = vpop.f32.mrb[0].mxu0
        %v1014 = vadd.f32 %v770, %v1013
        %1015 = vmatprep.mubr.bf16.mxu0 %v724
        %1016 = vmatmul.mubr.bf16.gmra.mrb[0].mxu0 %v723
        %v1017 = vpop.f32.mrb[0].mxu0
        %v1018 = vadd.f32 %v766, %v1017
        %v1019 = vpop.f32.mrb[0].mxu0
        %v1020 = vadd.f32 %v770, %v1019
        %v1021 = vpop.f32.mrb[0].mxu0
        %v1022 = vadd.f32 %v766, %v1021
        %v1023 = vpop.f32.mrb[0].mxu0
        %v1024 = vadd.f32 %v770, %v1023
        %1025 = vmatprep.mubr.bf16.mxu0 %v726
        %1026 = vmatmul.mubr.bf16.gmra.mrb[0].mxu0 %v725
        %v1027 = vpop.f32.mrb[0].mxu0
        %v1028 = vadd.f32 %v766, %v1027
        %v1029 = vpop.f32.mrb[0].mxu0
        %v1030 = vadd.f32 %v770, %v1029
        %v1031 = vpop.f32.mrb[0].mxu0
        %v1032 = vadd.f32 %v766, %v1031
        %v1033 = vpop.f32.mrb[0].mxu0
        %v1034 = vadd.f32 %v770, %v1033
        %1035 = vmatprep.mubr.bf16.mxu0 %v728
        %1036 = vmatmul.mubr.bf16.gmra.mrb[0].mxu0 %v727
        %v1037 = vpop.f32.mrb[0].mxu0
        %v1038 = vadd.f32 %v766, %v1037
        %v1039 = vpop.f32.mrb[0].mxu0
        %v1040 = vadd.f32 %v770, %v1039
        %v1041 = vpop.f32.mrb[0].mxu0
        %v1042 = vadd.f32 %v766, %v1041
        %v1043 = vpop.f32.mrb[0].mxu0
        %v1044 = vadd.f32 %v770, %v1043
        %1045 = vdwg.mxu0
        %v1046 = vadd.f32 %v968, %v970
        %1047 = vadd.xlane.f32.xlu0 %v1046
        %v1048 = vpop.xlane.xlu0 %1047
        %v1049 = vadd.f32 %v972, %v974
        %1050 = vadd.xlane.f32.xlu0 %v1049
        %v1051 = vpop.xlane.xlu0 %1050
        %v1052 = vadd.f32 %v978, %v980
        %1053 = vadd.xlane.f32.xlu0 %v1052
        %v1054 = vpop.xlane.xlu0 %1053
        %v1055 = vadd.f32 %v982, %v984
        %1056 = vadd.xlane.f32.xlu0 %v1055
        %v1057 = vpop.xlane.xlu0 %1056
        %v1058 = vadd.f32 %v988, %v990
        %1059 = vadd.xlane.f32.xlu0 %v1058
        %v1060 = vpop.xlane.xlu0 %1059
        %v1061 = vadd.f32 %v992, %v994
        %1062 = vadd.xlane.f32.xlu0 %v1061
        %v1063 = vpop.xlane.xlu0 %1062
        %v1064 = vadd.f32 %v998, %v1000
        %1065 = vadd.xlane.f32.xlu0 %v1064
        %v1066 = vpop.xlane.xlu0 %1065
        %v1067 = vadd.f32 %v1002, %v1004
        %1068 = vadd.xlane.f32.xlu0 %v1067
        %v1069 = vpop.xlane.xlu0 %1068
        %v1070 = vadd.f32 %v1008, %v1010
        %1071 = vadd.xlane.f32.xlu0 %v1070
        %v1072 = vpop.xlane.xlu0 %1071
        %v1073 = vadd.f32 %v1012, %v1014
        %1074 = vadd.xlane.f32.xlu0 %v1073
        %v1075 = vpop.xlane.xlu0 %1074
        %v1076 = vadd.f32 %v1018, %v1020
        %1077 = vadd.xlane.f32.xlu0 %v1076
        %v1078 = vpop.xlane.xlu0 %1077
        %v1079 = vadd.f32 %v1022, %v1024
        %1080 = vadd.xlane.f32.xlu0 %v1079
        %v1081 = vpop.xlane.xlu0 %1080
        %v1082 = vadd.f32 %v1028, %v1030
        %1083 = vadd.xlane.f32.xlu0 %v1082
        %v1084 = vpop.xlane.xlu0 %1083
        %v1085 = vadd.f32 %v1032, %v1034
        %1086 = vadd.xlane.f32.xlu0 %v1085
        %v1087 = vpop.xlane.xlu0 %1086
        %v1088 = vadd.f32 %v1038, %v1040
        %1089 = vadd.xlane.f32.xlu0 %v1088
        %v1090 = vpop.xlane.xlu0 %1089
        %v1091 = vadd.f32 %v1042, %v1044
        %1092 = vadd.xlane.f32.xlu0 %v1091
        %v1093 = vpop.xlane.xlu0 %1092
        %v1094 = vmul.f32 %v1048, 0.00390625
        %v1095 = vmul.f32 %v1051, 0.00390625
        %v1096 = vmul.f32 %v1054, 0.00390625
        %v1097 = vmul.f32 %v1057, 0.00390625
        %v1098 = vmul.f32 %v1060, 0.00390625
        %v1099 = vmul.f32 %v1063, 0.00390625
        %v1100 = vmul.f32 %v1066, 0.00390625
        %v1101 = vmul.f32 %v1069, 0.00390625
        %v1102 = vmul.f32 %v1072, 0.00390625
        %v1103 = vmul.f32 %v1075, 0.00390625
        %v1104 = vmul.f32 %v1078, 0.00390625
        %v1105 = vmul.f32 %v1081, 0.00390625
        %v1106 = vmul.f32 %v1084, 0.00390625
        %v1107 = vmul.f32 %v1087, 0.00390625
        %v1108 = vmul.f32 %v1090, 0.00390625
        %v1109 = vmul.f32 %v1093, 0.00390625
        %v1110 = vsub.f32 %v968, %v1094
        %v1111 = vsub.f32 %v970, %v1094
        %v1112 = vsub.f32 %v972, %v1095
        %v1113 = vsub.f32 %v974, %v1095
        %v1114 = vsub.f32 %v978, %v1096
        %v1115 = vsub.f32 %v980, %v1096
        %v1116 = vsub.f32 %v982, %v1097
        %v1117 = vsub.f32 %v984, %v1097
        %v1118 = vsub.f32 %v988, %v1098
        %v1119 = vsub.f32 %v990, %v1098
        %v1120 = vsub.f32 %v992, %v1099
        %v1121 = vsub.f32 %v994, %v1099
        %v1122 = vsub.f32 %v998, %v1100
        %v1123 = vsub.f32 %v1000, %v1100
        %v1124 = vsub.f32 %v1002, %v1101
        %v1125 = vsub.f32 %v1004, %v1101
        %v1126 = vsub.f32 %v1008, %v1102
        %v1127 = vsub.f32 %v1010, %v1102
        %v1128 = vsub.f32 %v1012, %v1103
        %v1129 = vsub.f32 %v1014, %v1103
        %v1130 = vsub.f32 %v1018, %v1104
        %v1131 = vsub.f32 %v1020, %v1104
        %v1132 = vsub.f32 %v1022, %v1105
        %v1133 = vsub.f32 %v1024, %v1105
        %v1134 = vsub.f32 %v1028, %v1106
        %v1135 = vsub.f32 %v1030, %v1106
        %v1136 = vsub.f32 %v1032, %v1107
        %v1137 = vsub.f32 %v1034, %v1107
        %v1138 = vsub.f32 %v1038, %v1108
        %v1139 = vsub.f32 %v1040, %v1108
        %v1140 = vsub.f32 %v1042, %v1109
        %v1141 = vsub.f32 %v1044, %v1109
        %v1142 = vmul.f32 %v1110, %v1110
        %v1143 = vmul.f32 %v1111, %v1111
        %v1144 = vmul.f32 %v1112, %v1112
        %v1145 = vmul.f32 %v1113, %v1113
        %v1146 = vmul.f32 %v1114, %v1114
        %v1147 = vmul.f32 %v1115, %v1115
        %v1148 = vmul.f32 %v1116, %v1116
        %v1149 = vmul.f32 %v1117, %v1117
        %v1150 = vmul.f32 %v1118, %v1118
        %v1151 = vmul.f32 %v1119, %v1119
        %v1152 = vmul.f32 %v1120, %v1120
        %v1153 = vmul.f32 %v1121, %v1121
        %v1154 = vmul.f32 %v1122, %v1122
        %v1155 = vmul.f32 %v1123, %v1123
        %v1156 = vmul.f32 %v1124, %v1124
        %v1157 = vmul.f32 %v1125, %v1125
        %v1158 = vmul.f32 %v1126, %v1126
        %v1159 = vmul.f32 %v1127, %v1127
        %v1160 = vmul.f32 %v1128, %v1128
        %v1161 = vmul.f32 %v1129, %v1129
        %v1162 = vmul.f32 %v1130, %v1130
        %v1163 = vmul.f32 %v1131, %v1131
        %v1164 = vmul.f32 %v1132, %v1132
        %v1165 = vmul.f32 %v1133, %v1133
        %v1166 = vmul.f32 %v1134, %v1134
        %v1167 = vmul.f32 %v1135, %v1135
        %v1168 = vmul.f32 %v1136, %v1136
        %v1169 = vmul.f32 %v1137, %v1137
        %v1170 = vmul.f32 %v1138, %v1138
        %v1171 = vmul.f32 %v1139, %v1139
        %v1172 = vmul.f32 %v1140, %v1140
        %v1173 = vmul.f32 %v1141, %v1141
        %v1174 = vadd.f32 %v1142, %v1143
        %1175 = vadd.xlane.f32.xlu0 %v1174
        %v1176 = vpop.xlane.xlu0 %1175
        %v1177 = vadd.f32 %v1144, %v1145
        %1178 = vadd.xlane.f32.xlu0 %v1177
        %v1179 = vpop.xlane.xlu0 %1178
        %v1180 = vadd.f32 %v1146, %v1147
        %1181 = vadd.xlane.f32.xlu0 %v1180
        %v1182 = vpop.xlane.xlu0 %1181
        %v1183 = vadd.f32 %v1148, %v1149
        %1184 = vadd.xlane.f32.xlu0 %v1183
        %v1185 = vpop.xlane.xlu0 %1184
        %v1186 = vadd.f32 %v1150, %v1151
        %1187 = vadd.xlane.f32.xlu0 %v1186
        %v1188 = vpop.xlane.xlu0 %1187
        %v1189 = vadd.f32 %v1152, %v1153
        %1190 = vadd.xlane.f32.xlu0 %v1189
        %v1191 = vpop.xlane.xlu0 %1190
        %v1192 = vadd.f32 %v1154, %v1155
        %1193 = vadd.xlane.f32.xlu0 %v1192
        %v1194 = vpop.xlane.xlu0 %1193
        %v1195 = vadd.f32 %v1156, %v1157
        %1196 = vadd.xlane.f32.xlu0 %v1195
        %v1197 = vpop.xlane.xlu0 %1196
        %v1198 = vadd.f32 %v1158, %v1159
        %1199 = vadd.xlane.f32.xlu0 %v1198
        %v1200 = vpop.xlane.xlu0 %1199
        %v1201 = vadd.f32 %v1160, %v1161
        %1202 = vadd.xlane.f32.xlu0 %v1201
        %v1203 = vpop.xlane.xlu0 %1202
        %v1204 = vadd.f32 %v1162, %v1163
        %1205 = vadd.xlane.f32.xlu0 %v1204
        %v1206 = vpop.xlane.xlu0 %1205
        %v1207 = vadd.f32 %v1164, %v1165
        %1208 = vadd.xlane.f32.xlu0 %v1207
        %v1209 = vpop.xlane.xlu0 %1208
        %v1210 = vadd.f32 %v1166, %v1167
        %1211 = vadd.xlane.f32.xlu0 %v1210
        %v1212 = vpop.xlane.xlu0 %1211
        %v1213 = vadd.f32 %v1168, %v1169
        %1214 = vadd.xlane.f32.xlu0 %v1213
        %v1215 = vpop.xlane.xlu0 %1214
        %v1216 = vadd.f32 %v1170, %v1171
        %1217 = vadd.xlane.f32.xlu0 %v1216
        %v1218 = vpop.xlane.xlu0 %1217
        %v1219 = vadd.f32 %v1172, %v1173
        %1220 = vadd.xlane.f32.xlu0 %v1219
        %v1221 = vpop.xlane.xlu0 %1220
        %v1222 = vmul.f32 %v1176, 0.00390625
        %v1223 = vmul.f32 %v1179, 0.00390625
        %v1224 = vmul.f32 %v1182, 0.00390625
        %v1225 = vmul.f32 %v1185, 0.00390625
        %v1226 = vmul.f32 %v1188, 0.00390625
        %v1227 = vmul.f32 %v1191, 0.00390625
        %v1228 = vmul.f32 %v1194, 0.00390625
        %v1229 = vmul.f32 %v1197, 0.00390625
        %v1230 = vmul.f32 %v1200, 0.00390625
        %v1231 = vmul.f32 %v1203, 0.00390625
        %v1232 = vmul.f32 %v1206, 0.00390625
        %v1233 = vmul.f32 %v1209, 0.00390625
        %v1234 = vmul.f32 %v1212, 0.00390625
        %v1235 = vmul.f32 %v1215, 0.00390625
        %v1236 = vmul.f32 %v1218, 0.00390625
        %v1237 = vmul.f32 %v1221, 0.00390625
        %v1238 = vadd.f32 %v1222, 1e-05
        %v1239 = vadd.f32 %v1223, 1e-05
        %v1240 = vadd.f32 %v1224, 1e-05
        %v1241 = vadd.f32 %v1225, 1e-05
        %v1242 = vadd.f32 %v1226, 1e-05
        %v1243 = vadd.f32 %v1227, 1e-05
        %v1244 = vadd.f32 %v1228, 1e-05
        %v1245 = vadd.f32 %v1229, 1e-05
        %v1246 = vadd.f32 %v1230, 1e-05
        %v1247 = vadd.f32 %v1231, 1e-05
        %v1248 = vadd.f32 %v1232, 1e-05
        %v1249 = vadd.f32 %v1233, 1e-05
        %v1250 = vadd.f32 %v1234, 1e-05
        %v1251 = vadd.f32 %v1235, 1e-05
        %v1252 = vadd.f32 %v1236, 1e-05
        %v1253 = vadd.f32 %v1237, 1e-05
        %v1254 = vrsqrt.pop %v1238
        %v1255 = vrsqrt.pop %v1239
        %v1256 = vrsqrt.pop %v1240
        %v1257 = vrsqrt.pop %v1241
        %v1258 = vrsqrt.pop %v1242
        %v1259 = vrsqrt.pop %v1243
        %v1260 = vrsqrt.pop %v1244
        %v1261 = vrsqrt.pop %v1245
        %v1262 = vrsqrt.pop %v1246
        %v1263 = vrsqrt.pop %v1247
        %v1264 = vrsqrt.pop %v1248
        %v1265 = vrsqrt.pop %v1249
        %v1266 = vrsqrt.pop %v1250
        %v1267 = vrsqrt.pop %v1251
        %v1268 = vrsqrt.pop %v1252
        %v1269 = vrsqrt.pop %v1253
        %v1270 = vmul.f32 %v1110, %v1254
        %v1271 = vmul.f32 %v1111, %v1254
        %v1272 = vmul.f32 %v1112, %v1255
        %v1273 = vmul.f32 %v1113, %v1255
        %v1274 = vmul.f32 %v1114, %v1256
        %v1275 = vmul.f32 %v1115, %v1256
        %v1276 = vmul.f32 %v1116, %v1257
        %v1277 = vmul.f32 %v1117, %v1257
        %v1278 = vmul.f32 %v1118, %v1258
        %v1279 = vmul.f32 %v1119, %v1258
        %v1280 = vmul.f32 %v1120, %v1259
        %v1281 = vmul.f32 %v1121, %v1259
        %v1282 = vmul.f32 %v1122, %v1260
        %v1283 = vmul.f32 %v1123, %v1260
        %v1284 = vmul.f32 %v1124, %v1261
        %v1285 = vmul.f32 %v1125, %v1261
        %v1286 = vmul.f32 %v1126, %v1262
        %v1287 = vmul.f32 %v1127, %v1262
        %v1288 = vmul.f32 %v1128, %v1263
        %v1289 = vmul.f32 %v1129, %v1263
        %v1290 = vmul.f32 %v1130, %v1264
        %v1291 = vmul.f32 %v1131, %v1264
        %v1292 = vmul.f32 %v1132, %v1265
        %v1293 = vmul.f32 %v1133, %v1265
        %v1294 = vmul.f32 %v1134, %v1266
        %v1295 = vmul.f32 %v1135, %v1266
        %v1296 = vmul.f32 %v1136, %v1267
        %v1297 = vmul.f32 %v1137, %v1267
        %v1298 = vmul.f32 %v1138, %v1268
        %v1299 = vmul.f32 %v1139, %v1268
        %v1300 = vmul.f32 %v1140, %v1269
        %v1301 = vmul.f32 %v1141, %v1269
        %v1302 = vld [vmem:[#allocation12] sm:$0x3]
        %v1304 = vlaneseq
        %v1305 = vshrl.u32 %v1304, 7
        %v1306 = vsub.s32 0, %v1305
        %v1307 = vrot.slane %v1302, %v1306
        %v1308 = vlaneseq
        %v1309 = vshrl.u32 %v1308, 7
        %v1310 = vsub.s32 1, %v1309
        %v1311 = vrot.slane %v1302, %v1310
        %v1314 = vmul.f32 %v1270, %v1307
        %v1315 = vmul.f32 %v1271, %v1311
        %v1316 = vmul.f32 %v1272, %v1307
        %v1317 = vmul.f32 %v1273, %v1311
        %v1318 = vmul.f32 %v1274, %v1307
        %v1319 = vmul.f32 %v1275, %v1311
        %v1320 = vmul.f32 %v1276, %v1307
        %v1321 = vmul.f32 %v1277, %v1311
        %v1322 = vmul.f32 %v1278, %v1307
        %v1323 = vmul.f32 %v1279, %v1311
        %v1324 = vmul.f32 %v1280, %v1307
        %v1325 = vmul.f32 %v1281, %v1311
        %v1326 = vmul.f32 %v1282, %v1307
        %v1327 = vmul.f32 %v1283, %v1311
        %v1328 = vmul.f32 %v1284, %v1307
        %v1329 = vmul.f32 %v1285, %v1311
        %v1330 = vmul.f32 %v1286, %v1307
        %v1331 = vmul.f32 %v1287, %v1311
        %v1332 = vmul.f32 %v1288, %v1307
        %v1333 = vmul.f32 %v1289, %v1311
        %v1334 = vmul.f32 %v1290, %v1307
        %v1335 = vmul.f32 %v1291, %v1311
        %v1336 = vmul.f32 %v1292, %v1307
        %v1337 = vmul.f32 %v1293, %v1311
        %v1338 = vmul.f32 %v1294, %v1307
        %v1339 = vmul.f32 %v1295, %v1311
        %v1340 = vmul.f32 %v1296, %v1307
        %v1341 = vmul.f32 %v1297, %v1311
        %v1342 = vmul.f32 %v1298, %v1307
        %v1343 = vmul.f32 %v1299, %v1311
        %v1344 = vmul.f32 %v1300, %v1307
        %v1345 = vmul.f32 %v1301, %v1311
        %v1346 = vld [vmem:[#allocation14] sm:$0x3]
        %v1348 = vlaneseq
        %v1349 = vshrl.u32 %v1348, 7
        %v1350 = vsub.s32 0, %v1349
        %v1351 = vrot.slane %v1346, %v1350
        %v1352 = vlaneseq
        %v1353 = vshrl.u32 %v1352, 7
        %v1354 = vsub.s32 1, %v1353
        %v1355 = vrot.slane %v1346, %v1354
        %v1358 = vadd.f32 %v1314, %v1351
        %v1359 = vadd.f32 %v1315, %v1355
        %v1360 = vadd.f32 %v1316, %v1351
        %v1361 = vadd.f32 %v1317, %v1355
        %v1362 = vadd.f32 %v1318, %v1351
        %v1363 = vadd.f32 %v1319, %v1355
        %v1364 = vadd.f32 %v1320, %v1351
        %v1365 = vadd.f32 %v1321, %v1355
        %v1366 = vadd.f32 %v1322, %v1351
        %v1367 = vadd.f32 %v1323, %v1355
        %v1368 = vadd.f32 %v1324, %v1351
        %v1369 = vadd.f32 %v1325, %v1355
        %v1370 = vadd.f32 %v1326, %v1351
        %v1371 = vadd.f32 %v1327, %v1355
        %v1372 = vadd.f32 %v1328, %v1351
        %v1373 = vadd.f32 %v1329, %v1355
        %v1374 = vadd.f32 %v1330, %v1351
        %v1375 = vadd.f32 %v1331, %v1355
        %v1376 = vadd.f32 %v1332, %v1351
        %v1377 = vadd.f32 %v1333, %v1355
        %v1378 = vadd.f32 %v1334, %v1351
        %v1379 = vadd.f32 %v1335, %v1355
        %v1380 = vadd.f32 %v1336, %v1351
        %v1381 = vadd.f32 %v1337, %v1355
        %v1382 = vadd.f32 %v1338, %v1351
        %v1383 = vadd.f32 %v1339, %v1355
        %v1384 = vadd.f32 %v1340, %v1351
        %v1385 = vadd.f32 %v1341, %v1355
        %v1386 = vadd.f32 %v1342, %v1351
        %v1387 = vadd.f32 %v1343, %v1355
        %v1388 = vadd.f32 %v1344, %v1351
        %v1389 = vadd.f32 %v1345, %v1355
        %v1390 = vmax.f32 %v1358, 0.0
        %v1391 = vmax.f32 %v1359, 0.0
        %v1392 = vmax.f32 %v1360, 0.0
        %v1393 = vmax.f32 %v1361, 0.0
        %v1394 = vmax.f32 %v1362, 0.0
        %v1395 = vmax.f32 %v1363, 0.0
        %v1396 = vmax.f32 %v1364, 0.0
        %v1397 = vmax.f32 %v1365, 0.0
        %v1398 = vmax.f32 %v1366, 0.0
        %v1399 = vmax.f32 %v1367, 0.0
        %v1400 = vmax.f32 %v1368, 0.0
        %v1401 = vmax.f32 %v1369, 0.0
        %v1402 = vmax.f32 %v1370, 0.0
        %v1403 = vmax.f32 %v1371, 0.0
        %v1404 = vmax.f32 %v1372, 0.0
        %v1405 = vmax.f32 %v1373, 0.0
        %v1406 = vmax.f32 %v1374, 0.0
        %v1407 = vmax.f32 %v1375, 0.0
        %v1408 = vmax.f32 %v1376, 0.0
        %v1409 = vmax.f32 %v1377, 0.0
        %v1410 = vmax.f32 %v1378, 0.0
        %v1411 = vmax.f32 %v1379, 0.0
        %v1412 = vmax.f32 %v1380, 0.0
        %v1413 = vmax.f32 %v1381, 0.0
        %v1414 = vmax.f32 %v1382, 0.0
        %v1415 = vmax.f32 %v1383, 0.0
        %v1416 = vmax.f32 %v1384, 0.0
        %v1417 = vmax.f32 %v1385, 0.0
        %v1418 = vmax.f32 %v1386, 0.0
        %v1419 = vmax.f32 %v1387, 0.0
        %v1420 = vmax.f32 %v1388, 0.0
        %v1421 = vmax.f32 %v1389, 0.0
        %v1422 = vadd.f32 %v1390, %v681
        %v1423 = vadd.f32 %v1391, %v682
        %v1424 = vadd.f32 %v1392, %v683
        %v1425 = vadd.f32 %v1393, %v684
        %v1426 = vadd.f32 %v1394, %v685
        %v1427 = vadd.f32 %v1395, %v686
        %v1428 = vadd.f32 %v1396, %v687
        %v1429 = vadd.f32 %v1397, %v688
        %v1430 = vadd.f32 %v1398, %v689
        %v1431 = vadd.f32 %v1399, %v690
        %v1432 = vadd.f32 %v1400, %v691
        %v1433 = vadd.f32 %v1401, %v692
        %v1434 = vadd.f32 %v1402, %v693
        %v1435 = vadd.f32 %v1403, %v694
        %v1436 = vadd.f32 %v1404, %v695
        %v1437 = vadd.f32 %v1405, %v696
        %v1438 = vadd.f32 %v1406, %v697
        %v1439 = vadd.f32 %v1407, %v698
        %v1440 = vadd.f32 %v1408, %v699
        %v1441 = vadd.f32 %v1409, %v700
        %v1442 = vadd.f32 %v1410, %v701
        %v1443 = vadd.f32 %v1411, %v702
        %v1444 = vadd.f32 %v1412, %v703
        %v1445 = vadd.f32 %v1413, %v704
        %v1446 = vadd.f32 %v1414, %v705
        %v1447 = vadd.f32 %v1415, %v706
        %v1448 = vadd.f32 %v1416, %v707
        %v1449 = vadd.f32 %v1417, %v708
        %v1450 = vadd.f32 %v1418, %v709
        %v1451 = vadd.f32 %v1419, %v710
        %v1452 = vadd.f32 %v1420, %v711
        %v1453 = vadd.f32 %v1421, %v712
        %v1454 = vpack.c.bf16 %v1424, %v1422
        %v1455 = vpack.c.bf16 %v1425, %v1423
        %v1456 = vpack.c.bf16 %v1428, %v1426
        %v1457 = vpack.c.bf16 %v1429, %v1427
        %v1458 = vpack.c.bf16 %v1432, %v1430
        %v1459 = vpack.c.bf16 %v1433, %v1431
        %v1460 = vpack.c.bf16 %v1436, %v1434
        %v1461 = vpack.c.bf16 %v1437, %v1435
        %v1462 = vpack.c.bf16 %v1440, %v1438
        %v1463 = vpack.c.bf16 %v1441, %v1439
        %v1464 = vpack.c.bf16 %v1444, %v1442
        %v1465 = vpack.c.bf16 %v1445, %v1443
        %v1466 = vpack.c.bf16 %v1448, %v1446
        %v1467 = vpack.c.bf16 %v1449, %v1447
        %v1468 = vpack.c.bf16 %v1452, %v1450
        %v1469 = vpack.c.bf16 %v1453, %v1451
        %s1470 = scalar_lea.vmem [#allocation9], 256
        %v1471 = vld [vmem:[%s1470] sm:$0xff]
        %v1472 = vld [vmem:[%s1470 + $0x8] sm:$0xff]
        %v1473 = vld [vmem:[%s1470 + $0x10] sm:$0xff]
        %v1474 = vld [vmem:[%s1470 + $0x18] sm:$0xff]
        %v1475 = vld [vmem:[%s1470 + $0x20] sm:$0xff]
        %v1476 = vld [vmem:[%s1470 + $0x28] sm:$0xff]
        %v1477 = vld [vmem:[%s1470 + $0x30] sm:$0xff]
        %v1478 = vld [vmem:[%s1470 + $0x38] sm:$0xff]
        %v1479 = vld [vmem:[%s1470 + $0x40] sm:$0xff]
        %v1480 = vld [vmem:[%s1470 + $0x48] sm:$0xff]
        %v1481 = vld [vmem:[%s1470 + $0x50] sm:$0xff]
        %v1482 = vld [vmem:[%s1470 + $0x58] sm:$0xff]
        %v1483 = vld [vmem:[%s1470 + $0x60] sm:$0xff]
        %v1484 = vld [vmem:[%s1470 + $0x68] sm:$0xff]
        %v1485 = vld [vmem:[%s1470 + $0x70] sm:$0xff]
        %v1486 = vld [vmem:[%s1470 + $0x78] sm:$0xff]
        %v1487 = vld [vmem:[%s1470 + $0x80] sm:$0xff]
        %v1488 = vld [vmem:[%s1470 + $0x88] sm:$0xff]
        %v1489 = vld [vmem:[%s1470 + $0x90] sm:$0xff]
        %v1490 = vld [vmem:[%s1470 + $0x98] sm:$0xff]
        %v1491 = vld [vmem:[%s1470 + $0xa0] sm:$0xff]
        %v1492 = vld [vmem:[%s1470 + $0xa8] sm:$0xff]
        %v1493 = vld [vmem:[%s1470 + $0xb0] sm:$0xff]
        %v1494 = vld [vmem:[%s1470 + $0xb8] sm:$0xff]
        %v1495 = vld [vmem:[%s1470 + $0xc0] sm:$0xff]
        %v1496 = vld [vmem:[%s1470 + $0xc8] sm:$0xff]
        %v1497 = vld [vmem:[%s1470 + $0xd0] sm:$0xff]
        %v1498 = vld [vmem:[%s1470 + $0xd8] sm:$0xff]
        %v1499 = vld [vmem:[%s1470 + $0xe0] sm:$0xff]
        %v1500 = vld [vmem:[%s1470 + $0xe8] sm:$0xff]
        %v1501 = vld [vmem:[%s1470 + $0xf0] sm:$0xff]
        %v1502 = vld [vmem:[%s1470 + $0xf8] sm:$0xff]
        %s1503 = scalar_lea.vmem [#allocation11], 2
        %v1504 = vld [vmem:[%s1503] sm:$0x3]
        %v1506 = vlaneseq
        %v1507 = vshrl.u32 %v1506, 7
        %v1508 = vsub.s32 0, %v1507
        %v1509 = vrot.slane %v1504, %v1508
        %v1510 = vlaneseq
        %v1511 = vshrl.u32 %v1510, 7
        %v1512 = vsub.s32 1, %v1511
        %v1513 = vrot.slane %v1504, %v1512
        %v1548 = vunpack.c.l.b16 %v1471
        %v1549 = vunpack.c.h.b16 %v1471
        %v1550 = vunpack.c.l.b16 %v1472
        %v1551 = vunpack.c.h.b16 %v1472
        %v1552 = vunpack.c.l.b16 %v1473
        %v1553 = vunpack.c.h.b16 %v1473
        %v1554 = vunpack.c.l.b16 %v1474
        %v1555 = vunpack.c.h.b16 %v1474
        %v1556 = vunpack.c.l.b16 %v1475
        %v1557 = vunpack.c.h.b16 %v1475
        %v1558 = vunpack.c.l.b16 %v1476
        %v1559 = vunpack.c.h.b16 %v1476
        %v1560 = vunpack.c.l.b16 %v1477
        %v1561 = vunpack.c.h.b16 %v1477
        %v1562 = vunpack.c.l.b16 %v1478
        %v1563 = vunpack.c.h.b16 %v1478
        %v1564 = vunpack.c.l.b16 %v1479
        %v1565 = vunpack.c.h.b16 %v1479
        %v1566 = vunpack.c.l.b16 %v1480
        %v1567 = vunpack.c.h.b16 %v1480
        %v1568 = vunpack.c.l.b16 %v1481
        %v1569 = vunpack.c.h.b16 %v1481
        %v1570 = vunpack.c.l.b16 %v1482
        %v1571 = vunpack.c.h.b16 %v1482
        %v1572 = vunpack.c.l.b16 %v1483
        %v1573 = vunpack.c.h.b16 %v1483
        %v1574 = vunpack.c.l.b16 %v1484
        %v1575 = vunpack.c.h.b16 %v1484
        %v1576 = vunpack.c.l.b16 %v1485
        %v1577 = vunpack.c.h.b16 %v1485
        %v1578 = vunpack.c.l.b16 %v1486
        %v1579 = vunpack.c.h.b16 %v1486
        %v1580 = vunpack.c.l.b16 %v1487
        %v1581 = vunpack.c.h.b16 %v1487
        %v1582 = vunpack.c.l.b16 %v1488
        %v1583 = vunpack.c.h.b16 %v1488
        %v1584 = vunpack.c.l.b16 %v1489
        %v1585 = vunpack.c.h.b16 %v1489
        %v1586 = vunpack.c.l.b16 %v1490
        %v1587 = vunpack.c.h.b16 %v1490
        %v1588 = vunpack.c.l.b16 %v1491
        %v1589 = vunpack.c.h.b16 %v1491
        %v1590 = vunpack.c.l.b16 %v1492
        %v1591 = vunpack.c.h.b16 %v1492
        %v1592 = vunpack.c.l.b16 %v1493
        %v1593 = vunpack.c.h.b16 %v1493
        %v1594 = vunpack.c.l.b16 %v1494
        %v1595 = vunpack.c.h.b16 %v1494
        %v1596 = vunpack.c.l.b16 %v1495
        %v1597 = vunpack.c.h.b16 %v1495
        %v1598 = vunpack.c.l.b16 %v1496
        %v1599 = vunpack.c.h.b16 %v1496
        %v1600 = vunpack.c.l.b16 %v1497
        %v1601 = vunpack.c.h.b16 %v1497
        %v1602 = vunpack.c.l.b16 %v1498
        %v1603 = vunpack.c.h.b16 %v1498
        %v1604 = vunpack.c.l.b16 %v1499
        %v1605 = vunpack.c.h.b16 %v1499
        %v1606 = vunpack.c.l.b16 %v1500
        %v1607 = vunpack.c.h.b16 %v1500
        %v1608 = vunpack.c.l.b16 %v1501
        %v1609 = vunpack.c.h.b16 %v1501
        %v1610 = vunpack.c.l.b16 %v1502
        %v1611 = vunpack.c.h.b16 %v1502
        %v1612 = vpack.c.b16 %v1550, %v1548
        %v1613 = vpack.c.b16 %v1551, %v1549
        %v1614 = vpack.c.b16 %v1554, %v1552
        %v1615 = vpack.c.b16 %v1555, %v1553
        %v1616 = vpack.c.b16 %v1558, %v1556
        %v1617 = vpack.c.b16 %v1559, %v1557
        %v1618 = vpack.c.b16 %v1562, %v1560
        %v1619 = vpack.c.b16 %v1563, %v1561
        %v1620 = vpack.c.b16 %v1566, %v1564
        %v1621 = vpack.c.b16 %v1567, %v1565
        %v1622 = vpack.c.b16 %v1570, %v1568
        %v1623 = vpack.c.b16 %v1571, %v1569
        %v1624 = vpack.c.b16 %v1574, %v1572
        %v1625 = vpack.c.b16 %v1575, %v1573
        %v1626 = vpack.c.b16 %v1578, %v1576
        %v1627 = vpack.c.b16 %v1579, %v1577
        %v1628 = vpack.c.b16 %v1582, %v1580
        %v1629 = vpack.c.b16 %v1583, %v1581
        %v1630 = vpack.c.b16 %v1586, %v1584
        %v1631 = vpack.c.b16 %v1587, %v1585
        %v1632 = vpack.c.b16 %v1590, %v1588
        %v1633 = vpack.c.b16 %v1591, %v1589
        %v1634 = vpack.c.b16 %v1594, %v1592
        %v1635 = vpack.c.b16 %v1595, %v1593
        %v1636 = vpack.c.b16 %v1598, %v1596
        %v1637 = vpack.c.b16 %v1599, %v1597
        %v1638 = vpack.c.b16 %v1602, %v1600
        %v1639 = vpack.c.b16 %v1603, %v1601
        %v1640 = vpack.c.b16 %v1606, %v1604
        %v1641 = vpack.c.b16 %v1607, %v1605
        %v1642 = vpack.c.b16 %v1610, %v1608
        %v1643 = vpack.c.b16 %v1611, %v1609
        %1676 = vmatprep.subr.bf16.mxu0 %v1613
        %1677 = vmatpush1.bf16.msra.mxu0 %v1612
        %1678 = vmatprep.subr.bf16.mxu0 %v1615
        %1679 = vmatpush1.bf16.msra.mxu0 %v1614
        %1680 = vmatprep.subr.bf16.mxu0 %v1617
        %1681 = vmatpush1.bf16.msra.mxu0 %v1616
        %1682 = vmatprep.subr.bf16.mxu0 %v1619
        %1683 = vmatpush1.bf16.msra.mxu0 %v1618
        %1684 = vmatprep.subr.bf16.mxu0 %v1621
        %1685 = vmatpush1.bf16.msra.mxu0 %v1620
        %1686 = vmatprep.subr.bf16.mxu0 %v1623
        %1687 = vmatpush1.bf16.msra.mxu0 %v1622
        %1688 = vmatprep.subr.bf16.mxu0 %v1625
        %1689 = vmatpush1.bf16.msra.mxu0 %v1624
        %1690 = vmatprep.subr.bf16.mxu0 %v1627
        %1691 = vmatpush1.bf16.msra.mxu0 %v1626
        %1692 = vmatprep.subr.bf16.mxu0 %v1629
        %1693 = vmatpush1.bf16.msra.mxu0 %v1628
        %1694 = vmatprep.subr.bf16.mxu0 %v1631
        %1695 = vmatpush1.bf16.msra.mxu0 %v1630
        %1696 = vmatprep.subr.bf16.mxu0 %v1633
        %1697 = vmatpush1.bf16.msra.mxu0 %v1632
        %1698 = vmatprep.subr.bf16.mxu0 %v1635
        %1699 = vmatpush1.bf16.msra.mxu0 %v1634
        %1700 = vmatprep.subr.bf16.mxu0 %v1637
        %1701 = vmatpush1.bf16.msra.mxu0 %v1636
        %1702 = vmatprep.subr.bf16.mxu0 %v1639
        %1703 = vmatpush1.bf16.msra.mxu0 %v1638
        %1704 = vmatprep.subr.bf16.mxu0 %v1641
        %1705 = vmatpush1.bf16.msra.mxu0 %v1640
        %1706 = vmatprep.subr.bf16.mxu0 %v1643
        %1707 = vmatpush1.bf16.msra.mxu0 %v1642
        %1708 = vmatprep.mubr.bf16.mxu0 %v1455
        %1709 = vmatmul.mubr.bf16.gmra.mrb[0].mxu0 %v1454
        %v1710 = vpop.f32.mrb[0].mxu0
        %v1711 = vadd.f32 %v1509, %v1710
        %v1712 = vpop.f32.mrb[0].mxu0
        %v1713 = vadd.f32 %v1513, %v1712
        %v1714 = vpop.f32.mrb[0].mxu0
        %v1715 = vadd.f32 %v1509, %v1714
        %v1716 = vpop.f32.mrb[0].mxu0
        %v1717 = vadd.f32 %v1513, %v1716
        %1718 = vmatprep.mubr.bf16.mxu0 %v1457
        %1719 = vmatmul.mubr.bf16.gmra.mrb[0].mxu0 %v1456
        %v1720 = vpop.f32.mrb[0].mxu0
        %v1721 = vadd.f32 %v1509, %v1720
        %v1722 = vpop.f32.mrb[0].mxu0
        %v1723 = vadd.f32 %v1513, %v1722
        %v1724 = vpop.f32.mrb[0].mxu0
        %v1725 = vadd.f32 %v1509, %v1724
        %v1726 = vpop.f32.mrb[0].mxu0
        %v1727 = vadd.f32 %v1513, %v1726
        %1728 = vmatprep.mubr.bf16.mxu0 %v1459
        %1729 = vmatmul.mubr.bf16.gmra.mrb[0].mxu0 %v1458
        %v1730 = vpop.f32.mrb[0].mxu0
        %v1731 = vadd.f32 %v1509, %v1730
        %v1732 = vpop.f32.mrb[0].mxu0
        %v1733 = vadd.f32 %v1513, %v1732
        %v1734 = vpop.f32.mrb[0].mxu0
        %v1735 = vadd.f32 %v1509, %v1734
        %v1736 = vpop.f32.mrb[0].mxu0
        %v1737 = vadd.f32 %v1513, %v1736
        %1738 = vmatprep.mubr.bf16.mxu0 %v1461
        %1739 = vmatmul.mubr.bf16.gmra.mrb[0].mxu0 %v1460
        %v1740 = vpop.f32.mrb[0].mxu0
        %v1741 = vadd.f32 %v1509, %v1740
        %v1742 = vpop.f32.mrb[0].mxu0
        %v1743 = vadd.f32 %v1513, %v1742
        %v1744 = vpop.f32.mrb[0].mxu0
        %v1745 = vadd.f32 %v1509, %v1744
        %v1746 = vpop.f32.mrb[0].mxu0
        %v1747 = vadd.f32 %v1513, %v1746
        %1748 = vmatprep.mubr.bf16.mxu0 %v1463
        %1749 = vmatmul.mubr.bf16.gmra.mrb[0].mxu0 %v1462
        %v1750 = vpop.f32.mrb[0].mxu0
        %v1751 = vadd.f32 %v1509, %v1750
        %v1752 = vpop.f32.mrb[0].mxu0
        %v1753 = vadd.f32 %v1513, %v1752
        %v1754 = vpop.f32.mrb[0].mxu0
        %v1755 = vadd.f32 %v1509, %v1754
        %v1756 = vpop.f32.mrb[0].mxu0
        %v1757 = vadd.f32 %v1513, %v1756
        %1758 = vmatprep.mubr.bf16.mxu0 %v1465
        %1759 = vmatmul.mubr.bf16.gmra.mrb[0].mxu0 %v1464
        %v1760 = vpop.f32.mrb[0].mxu0
        %v1761 = vadd.f32 %v1509, %v1760
        %v1762 = vpop.f32.mrb[0].mxu0
        %v1763 = vadd.f32 %v1513, %v1762
        %v1764 = vpop.f32.mrb[0].mxu0
        %v1765 = vadd.f32 %v1509, %v1764
        %v1766 = vpop.f32.mrb[0].mxu0
        %v1767 = vadd.f32 %v1513, %v1766
        %1768 = vmatprep.mubr.bf16.mxu0 %v1467
        %1769 = vmatmul.mubr.bf16.gmra.mrb[0].mxu0 %v1466
        %v1770 = vpop.f32.mrb[0].mxu0
        %v1771 = vadd.f32 %v1509, %v1770
        %v1772 = vpop.f32.mrb[0].mxu0
        %v1773 = vadd.f32 %v1513, %v1772
        %v1774 = vpop.f32.mrb[0].mxu0
        %v1775 = vadd.f32 %v1509, %v1774
        %v1776 = vpop.f32.mrb[0].mxu0
        %v1777 = vadd.f32 %v1513, %v1776
        %1778 = vmatprep.mubr.bf16.mxu0 %v1469
        %1779 = vmatmul.mubr.bf16.gmra.mrb[0].mxu0 %v1468
        %v1780 = vpop.f32.mrb[0].mxu0
        %v1781 = vadd.f32 %v1509, %v1780
        %v1782 = vpop.f32.mrb[0].mxu0
        %v1783 = vadd.f32 %v1513, %v1782
        %v1784 = vpop.f32.mrb[0].mxu0
        %v1785 = vadd.f32 %v1509, %v1784
        %v1786 = vpop.f32.mrb[0].mxu0
        %v1787 = vadd.f32 %v1513, %v1786
        %1788 = vdwg.mxu0
        %v1789 = vadd.f32 %v1711, %v1713
        %1790 = vadd.xlane.f32.xlu0 %v1789
        %v1791 = vpop.xlane.xlu0 %1790
        %v1792 = vadd.f32 %v1715, %v1717
        %1793 = vadd.xlane.f32.xlu0 %v1792
        %v1794 = vpop.xlane.xlu0 %1793
        %v1795 = vadd.f32 %v1721, %v1723
        %1796 = vadd.xlane.f32.xlu0 %v1795
        %v1797 = vpop.xlane.xlu0 %1796
        %v1798 = vadd.f32 %v1725, %v1727
        %1799 = vadd.xlane.f32.xlu0 %v1798
        %v1800 = vpop.xlane.xlu0 %1799
        %v1801 = vadd.f32 %v1731, %v1733
        %1802 = vadd.xlane.f32.xlu0 %v1801
        %v1803 = vpop.xlane.xlu0 %1802
        %v1804 = vadd.f32 %v1735, %v1737
        %1805 = vadd.xlane.f32.xlu0 %v1804
        %v1806 = vpop.xlane.xlu0 %1805
        %v1807 = vadd.f32 %v1741, %v1743
        %1808 = vadd.xlane.f32.xlu0 %v1807
        %v1809 = vpop.xlane.xlu0 %1808
        %v1810 = vadd.f32 %v1745, %v1747
        %1811 = vadd.xlane.f32.xlu0 %v1810
        %v1812 = vpop.xlane.xlu0 %1811
        %v1813 = vadd.f32 %v1751, %v1753
        %1814 = vadd.xlane.f32.xlu0 %v1813
        %v1815 = vpop.xlane.xlu0 %1814
        %v1816 = vadd.f32 %v1755, %v1757
        %1817 = vadd.xlane.f32.xlu0 %v1816
        %v1818 = vpop.xlane.xlu0 %1817
        %v1819 = vadd.f32 %v1761, %v1763
        %1820 = vadd.xlane.f32.xlu0 %v1819
        %v1821 = vpop.xlane.xlu0 %1820
        %v1822 = vadd.f32 %v1765, %v1767
        %1823 = vadd.xlane.f32.xlu0 %v1822
        %v1824 = vpop.xlane.xlu0 %1823
        %v1825 = vadd.f32 %v1771, %v1773
        %1826 = vadd.xlane.f32.xlu0 %v1825
        %v1827 = vpop.xlane.xlu0 %1826
        %v1828 = vadd.f32 %v1775, %v1777
        %1829 = vadd.xlane.f32.xlu0 %v1828
        %v1830 = vpop.xlane.xlu0 %1829
        %v1831 = vadd.f32 %v1781, %v1783
        %1832 = vadd.xlane.f32.xlu0 %v1831
        %v1833 = vpop.xlane.xlu0 %1832
        %v1834 = vadd.f32 %v1785, %v1787
        %1835 = vadd.xlane.f32.xlu0 %v1834
        %v1836 = vpop.xlane.xlu0 %1835
        %v1837 = vmul.f32 %v1791, 0.00390625
        %v1838 = vmul.f32 %v1794, 0.00390625
        %v1839 = vmul.f32 %v1797, 0.00390625
        %v1840 = vmul.f32 %v1800, 0.00390625
        %v1841 = vmul.f32 %v1803, 0.00390625
        %v1842 = vmul.f32 %v1806, 0.00390625
        %v1843 = vmul.f32 %v1809, 0.00390625
        %v1844 = vmul.f32 %v1812, 0.00390625
        %v1845 = vmul.f32 %v1815, 0.00390625
        %v1846 = vmul.f32 %v1818, 0.00390625
        %v1847 = vmul.f32 %v1821, 0.00390625
        %v1848 = vmul.f32 %v1824, 0.00390625
        %v1849 = vmul.f32 %v1827, 0.00390625
        %v1850 = vmul.f32 %v1830, 0.00390625
        %v1851 = vmul.f32 %v1833, 0.00390625
        %v1852 = vmul.f32 %v1836, 0.00390625
        %v1853 = vsub.f32 %v1711, %v1837
        %v1854 = vsub.f32 %v1713, %v1837
        %v1855 = vsub.f32 %v1715, %v1838
        %v1856 = vsub.f32 %v1717, %v1838
        %v1857 = vsub.f32 %v1721, %v1839
        %v1858 = vsub.f32 %v1723, %v1839
        %v1859 = vsub.f32 %v1725, %v1840
        %v1860 = vsub.f32 %v1727, %v1840
        %v1861 = vsub.f32 %v1731, %v1841
        %v1862 = vsub.f32 %v1733, %v1841
        %v1863 = vsub.f32 %v1735, %v1842
        %v1864 = vsub.f32 %v1737, %v1842
        %v1865 = vsub.f32 %v1741, %v1843
        %v1866 = vsub.f32 %v1743, %v1843
        %v1867 = vsub.f32 %v1745, %v1844
        %v1868 = vsub.f32 %v1747, %v1844
        %v1869 = vsub.f32 %v1751, %v1845
        %v1870 = vsub.f32 %v1753, %v1845
        %v1871 = vsub.f32 %v1755, %v1846
        %v1872 = vsub.f32 %v1757, %v1846
        %v1873 = vsub.f32 %v1761, %v1847
        %v1874 = vsub.f32 %v1763, %v1847
        %v1875 = vsub.f32 %v1765, %v1848
        %v1876 = vsub.f32 %v1767, %v1848
        %v1877 = vsub.f32 %v1771, %v1849
        %v1878 = vsub.f32 %v1773, %v1849
        %v1879 = vsub.f32 %v1775, %v1850
        %v1880 = vsub.f32 %v1777, %v1850
        %v1881 = vsub.f32 %v1781, %v1851
        %v1882 = vsub.f32 %v1783, %v1851
        %v1883 = vsub.f32 %v1785, %v1852
        %v1884 = vsub.f32 %v1787, %v1852
        %v1885 = vmul.f32 %v1853, %v1853
        %v1886 = vmul.f32 %v1854, %v1854
        %v1887 = vmul.f32 %v1855, %v1855
        %v1888 = vmul.f32 %v1856, %v1856
        %v1889 = vmul.f32 %v1857, %v1857
        %v1890 = vmul.f32 %v1858, %v1858
        %v1891 = vmul.f32 %v1859, %v1859
        %v1892 = vmul.f32 %v1860, %v1860
        %v1893 = vmul.f32 %v1861, %v1861
        %v1894 = vmul.f32 %v1862, %v1862
        %v1895 = vmul.f32 %v1863, %v1863
        %v1896 = vmul.f32 %v1864, %v1864
        %v1897 = vmul.f32 %v1865, %v1865
        %v1898 = vmul.f32 %v1866, %v1866
        %v1899 = vmul.f32 %v1867, %v1867
        %v1900 = vmul.f32 %v1868, %v1868
        %v1901 = vmul.f32 %v1869, %v1869
        %v1902 = vmul.f32 %v1870, %v1870
        %v1903 = vmul.f32 %v1871, %v1871
        %v1904 = vmul.f32 %v1872, %v1872
        %v1905 = vmul.f32 %v1873, %v1873
        %v1906 = vmul.f32 %v1874, %v1874
        %v1907 = vmul.f32 %v1875, %v1875
        %v1908 = vmul.f32 %v1876, %v1876
        %v1909 = vmul.f32 %v1877, %v1877
        %v1910 = vmul.f32 %v1878, %v1878
        %v1911 = vmul.f32 %v1879, %v1879
        %v1912 = vmul.f32 %v1880, %v1880
        %v1913 = vmul.f32 %v1881, %v1881
        %v1914 = vmul.f32 %v1882, %v1882
        %v1915 = vmul.f32 %v1883, %v1883
        %v1916 = vmul.f32 %v1884, %v1884
        %v1917 = vadd.f32 %v1885, %v1886
        %1918 = vadd.xlane.f32.xlu0 %v1917
        %v1919 = vpop.xlane.xlu0 %1918
        %v1920 = vadd.f32 %v1887, %v1888
        %1921 = vadd.xlane.f32.xlu0 %v1920
        %v1922 = vpop.xlane.xlu0 %1921
        %v1923 = vadd.f32 %v1889, %v1890
        %1924 = vadd.xlane.f32.xlu0 %v1923
        %v1925 = vpop.xlane.xlu0 %1924
        %v1926 = vadd.f32 %v1891, %v1892
        %1927 = vadd.xlane.f32.xlu0 %v1926
        %v1928 = vpop.xlane.xlu0 %1927
        %v1929 = vadd.f32 %v1893, %v1894
        %1930 = vadd.xlane.f32.xlu0 %v1929
        %v1931 = vpop.xlane.xlu0 %1930
        %v1932 = vadd.f32 %v1895, %v1896
        %1933 = vadd.xlane.f32.xlu0 %v1932
        %v1934 = vpop.xlane.xlu0 %1933
        %v1935 = vadd.f32 %v1897, %v1898
        %1936 = vadd.xlane.f32.xlu0 %v1935
        %v1937 = vpop.xlane.xlu0 %1936
        %v1938 = vadd.f32 %v1899, %v1900
        %1939 = vadd.xlane.f32.xlu0 %v1938
        %v1940 = vpop.xlane.xlu0 %1939
        %v1941 = vadd.f32 %v1901, %v1902
        %1942 = vadd.xlane.f32.xlu0 %v1941
        %v1943 = vpop.xlane.xlu0 %1942
        %v1944 = vadd.f32 %v1903, %v1904
        %1945 = vadd.xlane.f32.xlu0 %v1944
        %v1946 = vpop.xlane.xlu0 %1945
        %v1947 = vadd.f32 %v1905, %v1906
        %1948 = vadd.xlane.f32.xlu0 %v1947
        %v1949 = vpop.xlane.xlu0 %1948
        %v1950 = vadd.f32 %v1907, %v1908
        %1951 = vadd.xlane.f32.xlu0 %v1950
        %v1952 = vpop.xlane.xlu0 %1951
        %v1953 = vadd.f32 %v1909, %v1910
        %1954 = vadd.xlane.f32.xlu0 %v1953
        %v1955 = vpop.xlane.xlu0 %1954
        %v1956 = vadd.f32 %v1911, %v1912
        %1957 = vadd.xlane.f32.xlu0 %v1956
        %v1958 = vpop.xlane.xlu0 %1957
        %v1959 = vadd.f32 %v1913, %v1914
        %1960 = vadd.xlane.f32.xlu0 %v1959
        %v1961 = vpop.xlane.xlu0 %1960
        %v1962 = vadd.f32 %v1915, %v1916
        %1963 = vadd.xlane.f32.xlu0 %v1962
        %v1964 = vpop.xlane.xlu0 %1963
        %v1965 = vmul.f32 %v1919, 0.00390625
        %v1966 = vmul.f32 %v1922, 0.00390625
        %v1967 = vmul.f32 %v1925, 0.00390625
        %v1968 = vmul.f32 %v1928, 0.00390625
        %v1969 = vmul.f32 %v1931, 0.00390625
        %v1970 = vmul.f32 %v1934, 0.00390625
        %v1971 = vmul.f32 %v1937, 0.00390625
        %v1972 = vmul.f32 %v1940, 0.00390625
        %v1973 = vmul.f32 %v1943, 0.00390625
        %v1974 = vmul.f32 %v1946, 0.00390625
        %v1975 = vmul.f32 %v1949, 0.00390625
        %v1976 = vmul.f32 %v1952, 0.00390625
        %v1977 = vmul.f32 %v1955, 0.00390625
        %v1978 = vmul.f32 %v1958, 0.00390625
        %v1979 = vmul.f32 %v1961, 0.00390625
        %v1980 = vmul.f32 %v1964, 0.00390625
        %v1981 = vadd.f32 %v1965, 1e-05
        %v1982 = vadd.f32 %v1966, 1e-05
        %v1983 = vadd.f32 %v1967, 1e-05
        %v1984 = vadd.f32 %v1968, 1e-05
        %v1985 = vadd.f32 %v1969, 1e-05
        %v1986 = vadd.f32 %v1970, 1e-05
        %v1987 = vadd.f32 %v1971, 1e-05
        %v1988 = vadd.f32 %v1972, 1e-05
        %v1989 = vadd.f32 %v1973, 1e-05
        %v1990 = vadd.f32 %v1974, 1e-05
        %v1991 = vadd.f32 %v1975, 1e-05
        %v1992 = vadd.f32 %v1976, 1e-05
        %v1993 = vadd.f32 %v1977, 1e-05
        %v1994 = vadd.f32 %v1978, 1e-05
        %v1995 = vadd.f32 %v1979, 1e-05
        %v1996 = vadd.f32 %v1980, 1e-05
        %v1997 = vrsqrt.pop %v1981
        %v1998 = vrsqrt.pop %v1982
        %v1999 = vrsqrt.pop %v1983
        %v2000 = vrsqrt.pop %v1984
        %v2001 = vrsqrt.pop %v1985
        %v2002 = vrsqrt.pop %v1986
        %v2003 = vrsqrt.pop %v1987
        %v2004 = vrsqrt.pop %v1988
        %v2005 = vrsqrt.pop %v1989
        %v2006 = vrsqrt.pop %v1990
        %v2007 = vrsqrt.pop %v1991
        %v2008 = vrsqrt.pop %v1992
        %v2009 = vrsqrt.pop %v1993
        %v2010 = vrsqrt.pop %v1994
        %v2011 = vrsqrt.pop %v1995
        %v2012 = vrsqrt.pop %v1996
        %v2013 = vmul.f32 %v1853, %v1997
        %v2014 = vmul.f32 %v1854, %v1997
        %v2015 = vmul.f32 %v1855, %v1998
        %v2016 = vmul.f32 %v1856, %v1998
        %v2017 = vmul.f32 %v1857, %v1999
        %v2018 = vmul.f32 %v1858, %v1999
        %v2019 = vmul.f32 %v1859, %v2000
        %v2020 = vmul.f32 %v1860, %v2000
        %v2021 = vmul.f32 %v1861, %v2001
        %v2022 = vmul.f32 %v1862, %v2001
        %v2023 = vmul.f32 %v1863, %v2002
        %v2024 = vmul.f32 %v1864, %v2002
        %v2025 = vmul.f32 %v1865, %v2003
        %v2026 = vmul.f32 %v1866, %v2003
        %v2027 = vmul.f32 %v1867, %v2004
        %v2028 = vmul.f32 %v1868, %v2004
        %v2029 = vmul.f32 %v1869, %v2005
        %v2030 = vmul.f32 %v1870, %v2005
        %v2031 = vmul.f32 %v1871, %v2006
        %v2032 = vmul.f32 %v1872, %v2006
        %v2033 = vmul.f32 %v1873, %v2007
        %v2034 = vmul.f32 %v1874, %v2007
        %v2035 = vmul.f32 %v1875, %v2008
        %v2036 = vmul.f32 %v1876, %v2008
        %v2037 = vmul.f32 %v1877, %v2009
        %v2038 = vmul.f32 %v1878, %v2009
        %v2039 = vmul.f32 %v1879, %v2010
        %v2040 = vmul.f32 %v1880, %v2010
        %v2041 = vmul.f32 %v1881, %v2011
        %v2042 = vmul.f32 %v1882, %v2011
        %v2043 = vmul.f32 %v1883, %v2012
        %v2044 = vmul.f32 %v1884, %v2012
        %s2045 = scalar_lea.vmem [#allocation12], 2
        %v2046 = vld [vmem:[%s2045] sm:$0x3]
        %v2048 = vlaneseq
        %v2049 = vshrl.u32 %v2048, 7
        %v2050 = vsub.s32 0, %v2049
        %v2051 = vrot.slane %v2046, %v2050
        %v2052 = vlaneseq
        %v2053 = vshrl.u32 %v2052, 7
        %v2054 = vsub.s32 1, %v2053
        %v2055 = vrot.slane %v2046, %v2054
        %v2058 = vmul.f32 %v2013, %v2051
        %v2059 = vmul.f32 %v2014, %v2055
        %v2060 = vmul.f32 %v2015, %v2051
        %v2061 = vmul.f32 %v2016, %v2055
        %v2062 = vmul.f32 %v2017, %v2051
        %v2063 = vmul.f32 %v2018, %v2055
        %v2064 = vmul.f32 %v2019, %v2051
        %v2065 = vmul.f32 %v2020, %v2055
        %v2066 = vmul.f32 %v2021, %v2051
        %v2067 = vmul.f32 %v2022, %v2055
        %v2068 = vmul.f32 %v2023, %v2051
        %v2069 = vmul.f32 %v2024, %v2055
        %v2070 = vmul.f32 %v2025, %v2051
        %v2071 = vmul.f32 %v2026, %v2055
        %v2072 = vmul.f32 %v2027, %v2051
        %v2073 = vmul.f32 %v2028, %v2055
        %v2074 = vmul.f32 %v2029, %v2051
        %v2075 = vmul.f32 %v2030, %v2055
        %v2076 = vmul.f32 %v2031, %v2051
        %v2077 = vmul.f32 %v2032, %v2055
        %v2078 = vmul.f32 %v2033, %v2051
        %v2079 = vmul.f32 %v2034, %v2055
        %v2080 = vmul.f32 %v2035, %v2051
        %v2081 = vmul.f32 %v2036, %v2055
        %v2082 = vmul.f32 %v2037, %v2051
        %v2083 = vmul.f32 %v2038, %v2055
        %v2084 = vmul.f32 %v2039, %v2051
        %v2085 = vmul.f32 %v2040, %v2055
        %v2086 = vmul.f32 %v2041, %v2051
        %v2087 = vmul.f32 %v2042, %v2055
        %v2088 = vmul.f32 %v2043, %v2051
        %v2089 = vmul.f32 %v2044, %v2055
        %s2090 = scalar_lea.vmem [#allocation14], 2
        %v2091 = vld [vmem:[%s2090] sm:$0x3]
        %v2093 = vlaneseq
        %v2094 = vshrl.u32 %v2093, 7
        %v2095 = vsub.s32 0, %v2094
        %v2096 = vrot.slane %v2091, %v2095
        %v2097 = vlaneseq
        %v2098 = vshrl.u32 %v2097, 7
        %v2099 = vsub.s32 1, %v2098
        %v2100 = vrot.slane %v2091, %v2099
        %v2103 = vadd.f32 %v2058, %v2096
        %v2104 = vadd.f32 %v2059, %v2100
        %v2105 = vadd.f32 %v2060, %v2096
        %v2106 = vadd.f32 %v2061, %v2100
        %v2107 = vadd.f32 %v2062, %v2096
        %v2108 = vadd.f32 %v2063, %v2100
        %v2109 = vadd.f32 %v2064, %v2096
        %v2110 = vadd.f32 %v2065, %v2100
        %v2111 = vadd.f32 %v2066, %v2096
        %v2112 = vadd.f32 %v2067, %v2100
        %v2113 = vadd.f32 %v2068, %v2096
        %v2114 = vadd.f32 %v2069, %v2100
        %v2115 = vadd.f32 %v2070, %v2096
        %v2116 = vadd.f32 %v2071, %v2100
        %v2117 = vadd.f32 %v2072, %v2096
        %v2118 = vadd.f32 %v2073, %v2100
        %v2119 = vadd.f32 %v2074, %v2096
        %v2120 = vadd.f32 %v2075, %v2100
        %v2121 = vadd.f32 %v2076, %v2096
        %v2122 = vadd.f32 %v2077, %v2100
        %v2123 = vadd.f32 %v2078, %v2096
        %v2124 = vadd.f32 %v2079, %v2100
        %v2125 = vadd.f32 %v2080, %v2096
        %v2126 = vadd.f32 %v2081, %v2100
        %v2127 = vadd.f32 %v2082, %v2096
        %v2128 = vadd.f32 %v2083, %v2100
        %v2129 = vadd.f32 %v2084, %v2096
        %v2130 = vadd.f32 %v2085, %v2100
        %v2131 = vadd.f32 %v2086, %v2096
        %v2132 = vadd.f32 %v2087, %v2100
        %v2133 = vadd.f32 %v2088, %v2096
        %v2134 = vadd.f32 %v2089, %v2100
        %v2135 = vmax.f32 %v2103, 0.0
        %v2136 = vmax.f32 %v2104, 0.0
        %v2137 = vmax.f32 %v2105, 0.0
        %v2138 = vmax.f32 %v2106, 0.0
        %v2139 = vmax.f32 %v2107, 0.0
        %v2140 = vmax.f32 %v2108, 0.0
        %v2141 = vmax.f32 %v2109, 0.0
        %v2142 = vmax.f32 %v2110, 0.0
        %v2143 = vmax.f32 %v2111, 0.0
        %v2144 = vmax.f32 %v2112, 0.0
        %v2145 = vmax.f32 %v2113, 0.0
        %v2146 = vmax.f32 %v2114, 0.0
        %v2147 = vmax.f32 %v2115, 0.0
        %v2148 = vmax.f32 %v2116, 0.0
        %v2149 = vmax.f32 %v2117, 0.0
        %v2150 = vmax.f32 %v2118, 0.0
        %v2151 = vmax.f32 %v2119, 0.0
        %v2152 = vmax.f32 %v2120, 0.0
        %v2153 = vmax.f32 %v2121, 0.0
        %v2154 = vmax.f32 %v2122, 0.0
        %v2155 = vmax.f32 %v2123, 0.0
        %v2156 = vmax.f32 %v2124, 0.0
        %v2157 = vmax.f32 %v2125, 0.0
        %v2158 = vmax.f32 %v2126, 0.0
        %v2159 = vmax.f32 %v2127, 0.0
        %v2160 = vmax.f32 %v2128, 0.0
        %v2161 = vmax.f32 %v2129, 0.0
        %v2162 = vmax.f32 %v2130, 0.0
        %v2163 = vmax.f32 %v2131, 0.0
        %v2164 = vmax.f32 %v2132, 0.0
        %v2165 = vmax.f32 %v2133, 0.0
        %v2166 = vmax.f32 %v2134, 0.0
        %v2167 = vadd.f32 %v2135, %v1422
        %v2168 = vadd.f32 %v2136, %v1423
        %v2169 = vadd.f32 %v2137, %v1424
        %v2170 = vadd.f32 %v2138, %v1425
        %v2171 = vadd.f32 %v2139, %v1426
        %v2172 = vadd.f32 %v2140, %v1427
        %v2173 = vadd.f32 %v2141, %v1428
        %v2174 = vadd.f32 %v2142, %v1429
        %v2175 = vadd.f32 %v2143, %v1430
        %v2176 = vadd.f32 %v2144, %v1431
        %v2177 = vadd.f32 %v2145, %v1432
        %v2178 = vadd.f32 %v2146, %v1433
        %v2179 = vadd.f32 %v2147, %v1434
        %v2180 = vadd.f32 %v2148, %v1435
        %v2181 = vadd.f32 %v2149, %v1436
        %v2182 = vadd.f32 %v2150, %v1437
        %v2183 = vadd.f32 %v2151, %v1438
        %v2184 = vadd.f32 %v2152, %v1439
        %v2185 = vadd.f32 %v2153, %v1440
        %v2186 = vadd.f32 %v2154, %v1441
        %v2187 = vadd.f32 %v2155, %v1442
        %v2188 = vadd.f32 %v2156, %v1443
        %v2189 = vadd.f32 %v2157, %v1444
        %v2190 = vadd.f32 %v2158, %v1445
        %v2191 = vadd.f32 %v2159, %v1446
        %v2192 = vadd.f32 %v2160, %v1447
        %v2193 = vadd.f32 %v2161, %v1448
        %v2194 = vadd.f32 %v2162, %v1449
        %v2195 = vadd.f32 %v2163, %v1450
        %v2196 = vadd.f32 %v2164, %v1451
        %v2197 = vadd.f32 %v2165, %v1452
        %v2198 = vadd.f32 %v2166, %v1453
        %v2199 = vld [vmem:[#allocation15] sm:$0xff]
        %v2200 = vpack.c.bf16 %v2169, %v2167
        %v2201 = vpack.c.bf16 %v2170, %v2168
        %v2202 = vpack.c.bf16 %v2173, %v2171
        %v2203 = vpack.c.bf16 %v2174, %v2172
        %v2204 = vpack.c.bf16 %v2177, %v2175
        %v2205 = vpack.c.bf16 %v2178, %v2176
        %v2206 = vpack.c.bf16 %v2181, %v2179
        %v2207 = vpack.c.bf16 %v2182, %v2180
        %v2208 = vpack.c.bf16 %v2185, %v2183
        %v2209 = vpack.c.bf16 %v2186, %v2184
        %v2210 = vpack.c.bf16 %v2189, %v2187
        %v2211 = vpack.c.bf16 %v2190, %v2188
        %v2212 = vpack.c.bf16 %v2193, %v2191
        %v2213 = vpack.c.bf16 %v2194, %v2192
        %v2214 = vpack.c.bf16 %v2197, %v2195
        %v2215 = vpack.c.bf16 %v2198, %v2196
        %v2217 = vunpack.c.l.b16 %v2199
        %v2218 = vunpack.c.h.b16 %v2199
        %v2219 = vpack.c.b16 %v2217, %v2217
        %v2220 = vpack.c.b16 %v2218, %v2218
        %2223 = vmatprep.subr.bf16.mxu0 %v2201
        %2224 = vmatpush1.bf16.xpose.msra.mxu0 %v2200
        %2225 = vmatprep.subr.bf16.mxu0 %v2203
        %2226 = vmatpush1.bf16.xpose.msra.mxu0 %v2202
        %2227 = vmatprep.subr.bf16.mxu0 %v2205
        %2228 = vmatpush1.bf16.xpose.msra.mxu0 %v2204
        %2229 = vmatprep.subr.bf16.mxu0 %v2207
        %2230 = vmatpush1.bf16.xpose.msra.mxu0 %v2206
        %2231 = vmatprep.subr.bf16.mxu0 %v2209
        %2232 = vmatpush1.bf16.xpose.msra.mxu0 %v2208
        %2233 = vmatprep.subr.bf16.mxu0 %v2211
        %2234 = vmatpush1.bf16.xpose.msra.mxu0 %v2210
        %2235 = vmatprep.subr.bf16.mxu0 %v2213
        %2236 = vmatpush1.bf16.xpose.msra.mxu0 %v2212
        %2237 = vmatprep.subr.bf16.mxu0 %v2215
        %2238 = vmatpush1.bf16.xpose.msra.mxu0 %v2214
        %2239 = vmatprep.subr.bf16.mxu0 0
        %2240 = vmatpush1.bf16.xpose.msra.mxu0 0
        %2241 = vmatprep.subr.bf16.mxu0 0
        %2242 = vmatpush1.bf16.xpose.msra.mxu0 0
        %2243 = vmatprep.subr.bf16.mxu0 0
        %2244 = vmatpush1.bf16.xpose.msra.mxu0 0
        %2245 = vmatprep.subr.bf16.mxu0 0
        %2246 = vmatpush1.bf16.xpose.msra.mxu0 0
        %2247 = vmatprep.subr.bf16.mxu0 0
        %2248 = vmatpush1.bf16.xpose.msra.mxu0 0
        %2249 = vmatprep.subr.bf16.mxu0 0
        %2250 = vmatpush1.bf16.xpose.msra.mxu0 0
        %2251 = vmatprep.subr.bf16.mxu0 0
        %2252 = vmatpush1.bf16.xpose.msra.mxu0 0
        %2253 = vmatprep.subr.bf16.mxu0 0
        %2254 = vmatpush1.bf16.xpose.msra.mxu0 0
        %2255 = vmatprep.mubr.bf16.mxu0 %v2220
        %2256 = vmatmul.mubr.bf16.gmra.mrb[0].mxu0 %v2219
        %v2257 = vpop.f32.mrb[0].mxu0
        %v2258 = vadd.f32 0.0, %v2257
        %v2259 = vpop.f32.mrb[0].mxu0
        %v2260 = vpop.f32.mrb[0].mxu0
        %v2261 = vpop.f32.mrb[0].mxu0
        %2262 = vdwg.mxu0
        %s2263 = sld [smem:[#allocation2]]
        %v2264 = vstv %s2263
        %v2265 = vadd.f32 %v2258, %v2264
        %2266 = vst [vmem:[%s448] sm:$0x1] %v2265
        %s2267 = sand.u32 %s233, 1
        %s2268 = scalar_lea.sflag [#allocation5], %s2267
        %s2269 = sand.u32 %s233, 1
        %s2270 = scalar_lea.vmem [#allocation17], %s2269
        // Predicated region
        $region89: #{tpu_custom_call.1} parent=55 // pred_check
          %p2271 = pneg %p243
        $region90: #{tpu_custom_call.1} parent=55 // pred_check_branch
          %2273 = sbr.rel (%p2271) target = $region92
        $region91: #{tpu_custom_call.1} parent=55 // pred_region
          %s2275 = ssub.s32 16, 16
          %2276 = vsyncadd %s2268, %s2275
          %s2277 = smul.addr %s31, 16
          %s2278 = scalar_lea.hbm %s9, %s2277
          %s2280 = sshll.u32 %s2270, 4
          %s2281 = int_to_ptr.vmem [resolvable:$true] %s2280
          %2283 = dma.vmem_to_hbm [thread:$0]  %s2281, 16, %s2278, %s2268
        $region92: #{tpu_custom_call.1} parent=55 // pred_fallthru
          _
      $region56: #{tpu_custom_call.1} parent=5 // pred_fallthru
        _
      %p2284 = scmp.le.s32.totalorder 2, %s26
      // Predicated region
      $region93: #{tpu_custom_call.1} parent=5 // pred_check
        %p2285 = pneg %p2284
      $region94: #{tpu_custom_call.1} parent=5 // pred_check_branch
        %2287 = sbr.rel (%p2285) target = $region96
      $region95: #{tpu_custom_call.1} parent=5 // pred_region
        %s2288 = ssub.s32 %s26, 2
        // Predicated region
        $region97: #{tpu_custom_call.1} parent=95 // pred_check
          %p2289 = pneg %p249
        $region98: #{tpu_custom_call.1} parent=95 // pred_check_branch
          %2291 = sbr.rel (%p2289) target = $region100
        $region99: #{tpu_custom_call.1} parent=95 // pred_region
          %s2292 = sand.u32 %s234, 1
          %s2293 = scalar_lea.sflag [#allocation5], %s2292
          %s2294 = sand.u32 %s234, 1
          %s2295 = scalar_lea.vmem [#allocation17], %s2294
          %2296 = dma.done %s2293, 16
        $region100: #{tpu_custom_call.1} parent=95 // pred_fallthru
          _
      $region96: #{tpu_custom_call.1} parent=5 // pred_fallthru
        _
    $region6: #{tpu_custom_call.1} parent=1 // loop_footer
      %s30 = sadd.s32 1, %s26
    $region7: #{tpu_custom_call.1} parent=1 // loop_footer_branch
      %25 = sbr.rel target = $region3
    $region8: #{tpu_custom_call.1} parent=1 // loop_exit
      _
    %2297 = vsyncpa [#allocation4], 1
    %s2298 = scalar_lea.sflag [#allocation4], 1
    %2299 = vsyncpa %s2298, 1
    %2300 = vsyncpa [#allocation7], 1
    %2301 = vsyncpa [#allocation10], 1
    %2302 = vsyncpa [#allocation13], 1
    %2303 = vsyncpa [#allocation16], 1
    %2304 = vsyncpa [#allocation5], 1
    %s2305 = scalar_lea.sflag [#allocation5], 1
    %2306 = vsyncpa %s2305, 1

</llo_original>
